<compile_context>
chip_gen: v5e
topology: v5e:2x2
jax: 0.10.0
libtpu: 0.0.40
codegen_flags: <defaults>
</compile_context>

<pallas_src>
import numpy as np
import jax
import jax.numpy as jnp
from jax.experimental import pallas as pl
from jax.experimental.pallas import tpu as pltpu

NEG_SLOPE = 0.01   # nn.LeakyReLU default negative_slope
BN_EPS = 1e-5      # nn.BatchNorm2d default eps
LANES = 128        # lane-dense channel padding


# ------------------------- fused Pallas kernel -------------------------

def _make_fused_kernel(Wo, rows, margin, buf_rows, n_pool):
    """Kernel for one batch element. Activations are kept in 'padded-flat'
    form: row r of a (rows, 128) slab is spatial position (r//WP, r%WP) of the
    zero-padded (Ho+2, Wo+2) activation; a 3x3/stride-1 conv tap is then just a
    constant row shift, i.e. a contiguous (rows,128) slice of the VMEM buffer."""
    WP = Wo + 2

    def kernel(p1_ref, mask_ref, w1_ref, s1_ref, w2_ref, s2_ref, w3_ref, s3_ref,
               wl_ref, bl_ref, o_ref, a1_ref, a2_ref):
        mask = mask_ref[...]                                    # (rows, 1) f32

        def lrelu(y):
            return jnp.where(y >= 0, y, NEG_SLOPE * y)

        def store_act(a_ref, z):
            # zero margins (taps read up to WP+1 rows outside), then interior.
            a_ref[...] = jnp.zeros((buf_rows, LANES), jnp.float32)
            a_ref[pl.ds(margin, rows), :] = z

        def conv3x3(a_ref, w_ref):
            acc = jnp.zeros((rows, LANES), jnp.float32)
            for di in range(3):
                for dj in range(3):
                    off = margin + (di - 1) * WP + (dj - 1)     # static shift
                    win = a_ref[pl.ds(off, rows), :].astype(jnp.bfloat16)
                    acc += jnp.dot(win, w_ref[di * 3 + dj],
                                   preferred_element_type=jnp.float32)
            return acc

        # ---- conv1 + BN1 + LeakyReLU  (single GEMM over prebuilt patches) ----
        z = lrelu(jnp.dot(p1_ref[0], w1_ref[...],
                          preferred_element_type=jnp.float32) + s1_ref[...]) * mask
        store_act(a1_ref, z)

        # ---- conv2 + BN2 + LeakyReLU  (9 shifted-GEMM taps, in VMEM) ----
        z = lrelu(conv3x3(a1_ref, w2_ref) + s2_ref[...]) * mask
        store_act(a2_ref, z)

        # ---- conv3 + BN3 + LeakyReLU ----
        z = lrelu(conv3x3(a2_ref, w3_ref) + s3_ref[...]) * mask  # (rows,128) f32

        # ---- AdaptiveAvgPool2d((1,1)) -> Linear -> Softmax (f32 epilogue) ----
        pooled = jnp.sum(z, axis=0, keepdims=True) * (1.0 / n_pool)   # (1,128)
        logits = jnp.dot(pooled, wl_ref[...],
                         preferred_element_type=jnp.float32) + bl_ref[...]
        m = jnp.max(logits, axis=1, keepdims=True)
        e = jnp.exp(logits - m)                                  # pad lanes -> 0
        o_ref[0] = (e / jnp.sum(e, axis=1, keepdims=True)).astype(o_ref.dtype)

    return kernel


# ------------------------- parameter preparation (outside jit) -------------------------

def _fold_bn(w_oihw, bn):
    scale = bn["gamma"] / jnp.sqrt(bn["var"] + BN_EPS)
    shift = bn["beta"] - bn["mean"] * scale
    return w_oihw * scale[:, None, None, None], shift


def _pad2(a, r, c):
    return jnp.pad(a, ((0, r - a.shape[0]), (0, c - a.shape[1])))


def prepare_params(params):
    """One-time transform: fold BN scale into conv weights, lay weights out as
    lane-dense (128-padded) GEMM operands, cast MXU operands to bf16."""
    w1, s1 = _fold_bn(params["w1"], params["bn1"])
    C1, Cin, KH, KW = w1.shape
    assert Cin * KH * KW <= LANES and C1 <= LANES
    w1p = _pad2(w1.reshape(C1, Cin * KH * KW).T, LANES, LANES).astype(jnp.bfloat16)

    def taps3x3(w):
        Co, Ci, _, _ = w.shape
        assert Ci <= LANES and Co <= LANES
        t = [_pad2(w[:, :, di, dj].T, LANES, LANES)
             for di in range(3) for dj in range(3)]
        return jnp.stack(t, axis=0).astype(jnp.bfloat16)          # (9,128,128)

    w2, s2 = _fold_bn(params["w2"], params["bn2"])
    w3, s3 = _fold_bn(params["w3"], params["bn3"])

    wl = params["w_lin"].astype(jnp.float32)                      # (2, C3)
    bl = params["b_lin"].astype(jnp.float32)
    assert wl.shape[1] <= LANES
    wlp = _pad2(wl.T, LANES, LANES)                               # (128,128) f32
    blp = jnp.full((LANES,), -1e30, jnp.float32).at[:bl.shape[0]].set(bl)[None, :]

    def pad_s(s):
        return _pad2(s.astype(jnp.float32)[None, :], 1, LANES)

    return dict(w1=w1p, s1=pad_s(s1), w2=taps3x3(w2), s2=pad_s(s2),
                w3=taps3x3(w3), s3=pad_s(s3), wl=wlp, bl=blp)


# ------------------------- forward -------------------------

@jax.jit
def forward(prep, x_nchw):
    B, Cin, H, W = x_nchw.shape
    KH = KW = 4
    Ho = (H + 2 * 2 - KH) // 2 + 1
    Wo = (W + 2 * 2 - KW) // 2 + 1
    WP, HP = Wo + 2, Ho + 2
    pflat = HP * WP
    rows = ((pflat + 7) // 8) * 8                 # compute rows (sublane round-up)
    margin = ((WP + 1 + 15) // 16) * 16           # taps shift by at most WP+1 rows
    buf_rows = margin + rows + margin
    K1 = Cin * KH * KW

    # -- conv1 im2col, emitted once in K-padded, lane-dense, padded-flat bf16 --
    x = jnp.transpose(x_nchw, (0, 2, 3, 1))                       # NCHW -> NHWC
    xp = jnp.pad(x, ((0, 0), (2, 2), (2, 2), (0, 0)))
    cols = [xp[:, i:i + 2 * (Ho - 1) + 1:2, j:j + 2 * (Wo - 1) + 1:2, :]
            for i in range(KH) for j in range(KW)]
    pat = jnp.stack(cols, axis=-1).reshape(B, Ho, Wo, K1)         # k = c*16+i*4+j
    pat = jnp.pad(pat, ((0, 0), (1, 1), (1, 1), (0, 0)))          # embed in (HP,WP)
    pat = pat.reshape(B, pflat, K1)
    pat = jnp.pad(pat, ((0, 0), (0, rows - pflat), (0, LANES - K1)))
    p1 = pat.astype(jnp.bfloat16)                                 # (B, rows, 128)

    # -- static spatial-validity mask over the padded-flat compute rows --
    mask_np = np.zeros((rows, 1), np.float32)
    for yy in range(Ho):
        for xx in range(Wo):
            mask_np[(1 + yy) * WP + (1 + xx), 0] = 1.0
    mask = jnp.asarray(mask_np)

    kernel = _make_fused_kernel(Wo, rows, margin, buf_rows, float(Ho * Wo))

    def const_spec(shape):
        nd = len(shape)
        return pl.BlockSpec(shape, lambda b: (0,) * nd)

    out = pl.pallas_call(
        kernel,
        out_shape=jax.ShapeDtypeStruct((B, 1, LANES), jnp.float32),
        grid=(B,),
        in_specs=[
            pl.BlockSpec((1, rows, LANES), lambda b: (b, 0, 0)),  # conv1 patches
            const_spec((rows, 1)),                                # spatial mask
            const_spec((LANES, LANES)),                           # w1 (BN folded)
            const_spec((1, LANES)),                               # shift1
            const_spec((9, LANES, LANES)),                        # w2 taps
            const_spec((1, LANES)),                               # shift2
            const_spec((9, LANES, LANES)),                        # w3 taps
            const_spec((1, LANES)),                               # shift3
            const_spec((LANES, LANES)),                           # linear W
            const_spec((1, LANES)),                               # linear bias (-1e30 pads)
        ],
        out_specs=pl.BlockSpec((1, 1, LANES), lambda b: (b, 0, 0)),
        scratch_shapes=[pltpu.VMEM((buf_rows, LANES), jnp.float32),
                        pltpu.VMEM((buf_rows, LANES), jnp.float32)],
        compiler_params=pltpu.CompilerParams(dimension_semantics=("parallel",)),
    )(p1, mask, prep["w1"], prep["s1"], prep["w2"], prep["s2"],
      prep["w3"], prep["s3"], prep["wl"], prep["bl"])

    return out[:, 0, :2]                                          # (B, 2)


# ------------------------- init + pure-JAX reference -------------------------

def init_params(key, levels, in_layer_1=1):
    c_in, c1, c2, c3 = in_layer_1 * levels, 5 * levels, 7 * levels, 9 * levels
    ks = jax.random.split(key, 8)

    def bn(k, c):
        a, b, c_, d = jax.random.split(k, 4)
        return dict(gamma=1.0 + 0.1 * jax.random.normal(a, (c,)),
                    beta=0.1 * jax.random.normal(b, (c,)),
                    mean=0.1 * jax.random.normal(c_, (c,)),
                    var=jax.random.uniform(d, (c,), minval=0.5, maxval=1.5))

    return dict(
        w1=0.1 * jax.random.normal(ks[0], (c1, c_in, 4, 4)), bn1=bn(ks[1], c1),
        w2=0.1 * jax.random.normal(ks[2], (c2, c1, 3, 3)),   bn2=bn(ks[3], c2),
        w3=0.1 * jax.random.normal(ks[4], (c3, c2, 3, 3)),   bn3=bn(ks[5], c3),
        w_lin=0.1 * jax.random.normal(ks[6], (2, c3)),
        b_lin=0.1 * jax.random.normal(ks[7], (2,)),
    )


def ref_forward(params, x):
    def conv(x, w, stride, pad):
        return jax.lax.conv_general_dilated(
            x, w, (stride, stride), [(pad, pad), (pad, pad)],
            dimension_numbers=("NCHW", "OIHW", "NCHW"))

    def bn_lrelu(x, p):
        g, b, m, v = (p[k][None, :, None, None] for k in ("gamma", "beta", "mean", "var"))
        y = (x - m) / jnp.sqrt(v + BN_EPS) * g + b
        return jnp.where(y >= 0, y, NEG_SLOPE * y)

    x = bn_lrelu(conv(x, params["w1"], 2, 2), params["bn1"])
    x = bn_lrelu(conv(x, params["w2"], 1, 1), params["bn2"])
    x = bn_lrelu(conv(x, params["w3"], 1, 1), params["bn3"])
    x = jnp.mean(x, axis=(2, 3))
    return jax.nn.softmax(x @ params["w_lin"].T + params["b_lin"], axis=1)


if __name__ == "__main__":
    levels, in_layer_1 = 2, 1
    B, H, W = 2, 16, 16
    key = jax.random.PRNGKey(0)
    kp, kx = jax.random.split(key)
    params = init_params(kp, levels, in_layer_1)
    x = jax.random.normal(kx, (B, in_layer_1 * levels, H, W), dtype=jnp.float32)

    prep = prepare_params(params)          # one-time weight transform, outside jit
    out = jax.block_until_ready(forward(prep, x))
    ref = ref_forward(params, x)

    assert out.shape == (B, 2), out.shape
    assert bool(jnp.all(jnp.isfinite(out)))
    # bf16 MXU operands with f32 accumulation vs. the pure-f32 reference.
    assert bool(jnp.allclose(out, ref, atol=5e-3, rtol=5e-3)), (out, ref)
    print("KERNEL_OK")
</pallas_src>

<mosaic_0001>
module attributes {stable_mosaic.version = 11 : i64} {
  func.func @kernel(%arg0: i32, %arg1: memref<1x128x128xbf16, #tpu.memory_space<vmem>>, %arg2: memref<128x1xf32, #tpu.memory_space<vmem>>, %arg3: memref<128x128xbf16, #tpu.memory_space<vmem>>, %arg4: memref<1x128xf32, #tpu.memory_space<vmem>>, %arg5: memref<9x128x128xbf16, #tpu.memory_space<vmem>>, %arg6: memref<1x128xf32, #tpu.memory_space<vmem>>, %arg7: memref<9x128x128xbf16, #tpu.memory_space<vmem>>, %arg8: memref<1x128xf32, #tpu.memory_space<vmem>>, %arg9: memref<128x128xf32, #tpu.memory_space<vmem>>, %arg10: memref<1x128xf32, #tpu.memory_space<vmem>>, %arg11: memref<1x1x128xf32, #tpu.memory_space<vmem>>, %arg12: memref<160x128xf32, #tpu.memory_space<vmem>>, %arg13: memref<160x128xf32, #tpu.memory_space<vmem>>) attributes {dimension_semantics = [#tpu.dimension_semantics<parallel>], iteration_bounds = array<i64: 2>, scalar_prefetch = 0 : i64, scratch_operands = 2 : i64, tpu.core_type = #tpu.core_type<tc>, window_params = [{transform_indices = @transform_0, window_bounds = array<i64: 1, 128, 128>}, {pipeline_mode = #tpu.pipeline_mode<synchronous>, transform_indices = @transform_1, window_bounds = array<i64: 128, 1>}, {pipeline_mode = #tpu.pipeline_mode<synchronous>, transform_indices = @transform_2, window_bounds = array<i64: 128, 128>}, {pipeline_mode = #tpu.pipeline_mode<synchronous>, transform_indices = @transform_3, window_bounds = array<i64: 1, 128>}, {pipeline_mode = #tpu.pipeline_mode<synchronous>, transform_indices = @transform_4, window_bounds = array<i64: 9, 128, 128>}, {pipeline_mode = #tpu.pipeline_mode<synchronous>, transform_indices = @transform_5, window_bounds = array<i64: 1, 128>}, {pipeline_mode = #tpu.pipeline_mode<synchronous>, transform_indices = @transform_6, window_bounds = array<i64: 9, 128, 128>}, {pipeline_mode = #tpu.pipeline_mode<synchronous>, transform_indices = @transform_7, window_bounds = array<i64: 1, 128>}, {pipeline_mode = #tpu.pipeline_mode<synchronous>, transform_indices = @transform_8, window_bounds = array<i64: 128, 128>}, {pipeline_mode = #tpu.pipeline_mode<synchronous>, transform_indices = @transform_9, window_bounds = array<i64: 1, 128>}, {transform_indices = @transform_10, window_bounds = array<i64: 1, 1, 128>}]} {
    %c0 = arith.constant 0 : index
    %c0_0 = arith.constant 0 : index
    %0 = vector.load %arg2[%c0, %c0_0] : memref<128x1xf32, #tpu.memory_space<vmem>>, vector<128x1xf32>
    %c0_1 = arith.constant 0 : index
    %c0_2 = arith.constant 0 : index
    %c0_3 = arith.constant 0 : index
    %1 = vector.load %arg1[%c0_1, %c0_2, %c0_3] : memref<1x128x128xbf16, #tpu.memory_space<vmem>>, vector<1x128x128xbf16>
    %2 = vector.shape_cast %1 : vector<1x128x128xbf16> to vector<128x128xbf16>
    %c0_4 = arith.constant 0 : index
    %c0_5 = arith.constant 0 : index
    %3 = vector.load %arg3[%c0_4, %c0_5] : memref<128x128xbf16, #tpu.memory_space<vmem>>, vector<128x128xbf16>
    %cst = arith.constant dense<0.000000e+00> : vector<128x128xf32>
    %4 = tpu.matmul %2, %3, %cst {dimension_numbers = #tpu.dot_dimension_numbers<[1], [0], [0], [1], [0, 0, 1, 1], [], []>} : vector<128x128xbf16>, vector<128x128xbf16>, vector<128x128xf32> -> vector<128x128xf32>
    %c0_6 = arith.constant 0 : index
    %c0_7 = arith.constant 0 : index
    %5 = vector.load %arg4[%c0_6, %c0_7] : memref<1x128xf32, #tpu.memory_space<vmem>>, vector<1x128xf32>
    %6 = vector.broadcast %5 : vector<1x128xf32> to vector<128x128xf32>
    %7 = arith.addf %4, %6 : vector<128x128xf32>
    %cst_8 = arith.constant 0.000000e+00 : f32
    %8 = vector.broadcast %cst_8 : f32 to vector<128x128xf32>
    %9 = arith.cmpf oge, %7, %8 : vector<128x128xf32>
    %cst_9 = arith.constant 0.00999999977 : f32
    %10 = vector.broadcast %cst_9 : f32 to vector<128x128xf32>
    %11 = arith.mulf %10, %7 : vector<128x128xf32>
    %12 = arith.select %9, %7, %11 : vector<128x128xi1>, vector<128x128xf32>
    %13 = vector.broadcast %0 : vector<128x1xf32> to vector<128x128xf32>
    %14 = arith.mulf %12, %13 : vector<128x128xf32>
    %cst_10 = arith.constant 0.000000e+00 : f32
    %15 = vector.broadcast %cst_10 : f32 to vector<160x128xf32>
    %c0_11 = arith.constant 0 : index
    %c0_12 = arith.constant 0 : index
    %16 = vector.load %arg12[%c0_11, %c0_12] : memref<160x128xf32, #tpu.memory_space<vmem>>, vector<160x128xf32>
    tpu.vector_store %arg12[%c0_11, %c0_12], %15 {strides = array<i32>} : memref<160x128xf32, #tpu.memory_space<vmem>>, vector<160x128xf32>,
    %c16 = arith.constant 16 : index
    %c0_13 = arith.constant 0 : index
    %17 = vector.load %arg12[%c16, %c0_13] : memref<160x128xf32, #tpu.memory_space<vmem>>, vector<128x128xf32>
    tpu.vector_store %arg12[%c16, %c0_13], %14 {strides = array<i32>} : memref<160x128xf32, #tpu.memory_space<vmem>>, vector<128x128xf32>,
    %cst_14 = arith.constant 0.000000e+00 : f32
    %18 = vector.broadcast %cst_14 : f32 to vector<128x128xf32>
    %c4 = arith.constant 4 : index
    %c0_15 = arith.constant 0 : index
    %19 = vector.load %arg12[%c4, %c0_15] : memref<160x128xf32, #tpu.memory_space<vmem>>, vector<128x128xf32>
    %20 = arith.truncf %19 : vector<128x128xf32> to vector<128x128xbf16>
    %c0_16 = arith.constant 0 : index
    %c0_17 = arith.constant 0 : index
    %c0_18 = arith.constant 0 : index
    %21 = vector.load %arg5[%c0_16, %c0_17, %c0_18] : memref<9x128x128xbf16, #tpu.memory_space<vmem>>, vector<1x128x128xbf16>
    %22 = vector.shape_cast %21 : vector<1x128x128xbf16> to vector<128x128xbf16>
    %cst_19 = arith.constant dense<0.000000e+00> : vector<128x128xf32>
    %23 = tpu.matmul %20, %22, %cst_19 {dimension_numbers = #tpu.dot_dimension_numbers<[1], [0], [0], [1], [0, 0, 1, 1], [], []>} : vector<128x128xbf16>, vector<128x128xbf16>, vector<128x128xf32> -> vector<128x128xf32>
    %24 = arith.addf %18, %23 : vector<128x128xf32>
    %c5 = arith.constant 5 : index
    %c0_20 = arith.constant 0 : index
    %25 = vector.load %arg12[%c5, %c0_20] : memref<160x128xf32, #tpu.memory_space<vmem>>, vector<128x128xf32>
    %26 = arith.truncf %25 : vector<128x128xf32> to vector<128x128xbf16>
    %c1 = arith.constant 1 : index
    %c0_21 = arith.constant 0 : index
    %c0_22 = arith.constant 0 : index
    %27 = vector.load %arg5[%c1, %c0_21, %c0_22] : memref<9x128x128xbf16, #tpu.memory_space<vmem>>, vector<1x128x128xbf16>
    %28 = vector.shape_cast %27 : vector<1x128x128xbf16> to vector<128x128xbf16>
    %cst_23 = arith.constant dense<0.000000e+00> : vector<128x128xf32>
    %29 = tpu.matmul %26, %28, %cst_23 {dimension_numbers = #tpu.dot_dimension_numbers<[1], [0], [0], [1], [0, 0, 1, 1], [], []>} : vector<128x128xbf16>, vector<128x128xbf16>, vector<128x128xf32> -> vector<128x128xf32>
    %30 = arith.addf %24, %29 : vector<128x128xf32>
    %c6 = arith.constant 6 : index
    %c0_24 = arith.constant 0 : index
    %31 = vector.load %arg12[%c6, %c0_24] : memref<160x128xf32, #tpu.memory_space<vmem>>, vector<128x128xf32>
    %32 = arith.truncf %31 : vector<128x128xf32> to vector<128x128xbf16>
    %c2 = arith.constant 2 : index
    %c0_25 = arith.constant 0 : index
    %c0_26 = arith.constant 0 : index
    %33 = vector.load %arg5[%c2, %c0_25, %c0_26] : memref<9x128x128xbf16, #tpu.memory_space<vmem>>, vector<1x128x128xbf16>
    %34 = vector.shape_cast %33 : vector<1x128x128xbf16> to vector<128x128xbf16>
    %cst_27 = arith.constant dense<0.000000e+00> : vector<128x128xf32>
    %35 = tpu.matmul %32, %34, %cst_27 {dimension_numbers = #tpu.dot_dimension_numbers<[1], [0], [0], [1], [0, 0, 1, 1], [], []>} : vector<128x128xbf16>, vector<128x128xbf16>, vector<128x128xf32> -> vector<128x128xf32>
    %36 = arith.addf %30, %35 : vector<128x128xf32>
    %c15 = arith.constant 15 : index
    %c0_28 = arith.constant 0 : index
    %37 = vector.load %arg12[%c15, %c0_28] : memref<160x128xf32, #tpu.memory_space<vmem>>, vector<128x128xf32>
    %38 = arith.truncf %37 : vector<128x128xf32> to vector<128x128xbf16>
    %c3 = arith.constant 3 : index
    %c0_29 = arith.constant 0 : index
    %c0_30 = arith.constant 0 : index
    %39 = vector.load %arg5[%c3, %c0_29, %c0_30] : memref<9x128x128xbf16, #tpu.memory_space<vmem>>, vector<1x128x128xbf16>
    %40 = vector.shape_cast %39 : vector<1x128x128xbf16> to vector<128x128xbf16>
    %cst_31 = arith.constant dense<0.000000e+00> : vector<128x128xf32>
    %41 = tpu.matmul %38, %40, %cst_31 {dimension_numbers = #tpu.dot_dimension_numbers<[1], [0], [0], [1], [0, 0, 1, 1], [], []>} : vector<128x128xbf16>, vector<128x128xbf16>, vector<128x128xf32> -> vector<128x128xf32>
    %42 = arith.addf %36, %41 : vector<128x128xf32>
    %c16_32 = arith.constant 16 : index
    %c0_33 = arith.constant 0 : index
    %43 = vector.load %arg12[%c16_32, %c0_33] : memref<160x128xf32, #tpu.memory_space<vmem>>, vector<128x128xf32>
    %44 = arith.truncf %43 : vector<128x128xf32> to vector<128x128xbf16>
    %c4_34 = arith.constant 4 : index
    %c0_35 = arith.constant 0 : index
    %c0_36 = arith.constant 0 : index
    %45 = vector.load %arg5[%c4_34, %c0_35, %c0_36] : memref<9x128x128xbf16, #tpu.memory_space<vmem>>, vector<1x128x128xbf16>
    %46 = vector.shape_cast %45 : vector<1x128x128xbf16> to vector<128x128xbf16>
    %cst_37 = arith.constant dense<0.000000e+00> : vector<128x128xf32>
    %47 = tpu.matmul %44, %46, %cst_37 {dimension_numbers = #tpu.dot_dimension_numbers<[1], [0], [0], [1], [0, 0, 1, 1], [], []>} : vector<128x128xbf16>, vector<128x128xbf16>, vector<128x128xf32> -> vector<128x128xf32>
    %48 = arith.addf %42, %47 : vector<128x128xf32>
    %c17 = arith.constant 17 : index
    %c0_38 = arith.constant 0 : index
    %49 = vector.load %arg12[%c17, %c0_38] : memref<160x128xf32, #tpu.memory_space<vmem>>, vector<128x128xf32>
    %50 = arith.truncf %49 : vector<128x128xf32> to vector<128x128xbf16>
    %c5_39 = arith.constant 5 : index
    %c0_40 = arith.constant 0 : index
    %c0_41 = arith.constant 0 : index
    %51 = vector.load %arg5[%c5_39, %c0_40, %c0_41] : memref<9x128x128xbf16, #tpu.memory_space<vmem>>, vector<1x128x128xbf16>
    %52 = vector.shape_cast %51 : vector<1x128x128xbf16> to vector<128x128xbf16>
    %cst_42 = arith.constant dense<0.000000e+00> : vector<128x128xf32>
    %53 = tpu.matmul %50, %52, %cst_42 {dimension_numbers = #tpu.dot_dimension_numbers<[1], [0], [0], [1], [0, 0, 1, 1], [], []>} : vector<128x128xbf16>, vector<128x128xbf16>, vector<128x128xf32> -> vector<128x128xf32>
    %54 = arith.addf %48, %53 : vector<128x128xf32>
    %c26 = arith.constant 26 : index
    %c0_43 = arith.constant 0 : index
    %55 = vector.load %arg12[%c26, %c0_43] : memref<160x128xf32, #tpu.memory_space<vmem>>, vector<128x128xf32>
    %56 = arith.truncf %55 : vector<128x128xf32> to vector<128x128xbf16>
    %c6_44 = arith.constant 6 : index
    %c0_45 = arith.constant 0 : index
    %c0_46 = arith.constant 0 : index
    %57 = vector.load %arg5[%c6_44, %c0_45, %c0_46] : memref<9x128x128xbf16, #tpu.memory_space<vmem>>, vector<1x128x128xbf16>
    %58 = vector.shape_cast %57 : vector<1x128x128xbf16> to vector<128x128xbf16>
    %cst_47 = arith.constant dense<0.000000e+00> : vector<128x128xf32>
    %59 = tpu.matmul %56, %58, %cst_47 {dimension_numbers = #tpu.dot_dimension_numbers<[1], [0], [0], [1], [0, 0, 1, 1], [], []>} : vector<128x128xbf16>, vector<128x128xbf16>, vector<128x128xf32> -> vector<128x128xf32>
    %60 = arith.addf %54, %59 : vector<128x128xf32>
    %c27 = arith.constant 27 : index
    %c0_48 = arith.constant 0 : index
    %61 = vector.load %arg12[%c27, %c0_48] : memref<160x128xf32, #tpu.memory_space<vmem>>, vector<128x128xf32>
    %62 = arith.truncf %61 : vector<128x128xf32> to vector<128x128xbf16>
    %c7 = arith.constant 7 : index
    %c0_49 = arith.constant 0 : index
    %c0_50 = arith.constant 0 : index
    %63 = vector.load %arg5[%c7, %c0_49, %c0_50] : memref<9x128x128xbf16, #tpu.memory_space<vmem>>, vector<1x128x128xbf16>
    %64 = vector.shape_cast %63 : vector<1x128x128xbf16> to vector<128x128xbf16>
    %cst_51 = arith.constant dense<0.000000e+00> : vector<128x128xf32>
    %65 = tpu.matmul %62, %64, %cst_51 {dimension_numbers = #tpu.dot_dimension_numbers<[1], [0], [0], [1], [0, 0, 1, 1], [], []>} : vector<128x128xbf16>, vector<128x128xbf16>, vector<128x128xf32> -> vector<128x128xf32>
    %66 = arith.addf %60, %65 : vector<128x128xf32>
    %c28 = arith.constant 28 : index
    %c0_52 = arith.constant 0 : index
    %67 = vector.load %arg12[%c28, %c0_52] : memref<160x128xf32, #tpu.memory_space<vmem>>, vector<128x128xf32>
    %68 = arith.truncf %67 : vector<128x128xf32> to vector<128x128xbf16>
    %c8 = arith.constant 8 : index
    %c0_53 = arith.constant 0 : index
    %c0_54 = arith.constant 0 : index
    %69 = vector.load %arg5[%c8, %c0_53, %c0_54] : memref<9x128x128xbf16, #tpu.memory_space<vmem>>, vector<1x128x128xbf16>
    %70 = vector.shape_cast %69 : vector<1x128x128xbf16> to vector<128x128xbf16>
    %cst_55 = arith.constant dense<0.000000e+00> : vector<128x128xf32>
    %71 = tpu.matmul %68, %70, %cst_55 {dimension_numbers = #tpu.dot_dimension_numbers<[1], [0], [0], [1], [0, 0, 1, 1], [], []>} : vector<128x128xbf16>, vector<128x128xbf16>, vector<128x128xf32> -> vector<128x128xf32>
    %72 = arith.addf %66, %71 : vector<128x128xf32>
    %c0_56 = arith.constant 0 : index
    %c0_57 = arith.constant 0 : index
    %73 = vector.load %arg6[%c0_56, %c0_57] : memref<1x128xf32, #tpu.memory_space<vmem>>, vector<1x128xf32>
    %74 = vector.broadcast %73 : vector<1x128xf32> to vector<128x128xf32>
    %75 = arith.addf %72, %74 : vector<128x128xf32>
    %cst_58 = arith.constant 0.000000e+00 : f32
    %76 = vector.broadcast %cst_58 : f32 to vector<128x128xf32>
    %77 = arith.cmpf oge, %75, %76 : vector<128x128xf32>
    %cst_59 = arith.constant 0.00999999977 : f32
    %78 = vector.broadcast %cst_59 : f32 to vector<128x128xf32>
    %79 = arith.mulf %78, %75 : vector<128x128xf32>
    %80 = arith.select %77, %75, %79 : vector<128x128xi1>, vector<128x128xf32>
    %81 = vector.broadcast %0 : vector<128x1xf32> to vector<128x128xf32>
    %82 = arith.mulf %80, %81 : vector<128x128xf32>
    %cst_60 = arith.constant 0.000000e+00 : f32
    %83 = vector.broadcast %cst_60 : f32 to vector<160x128xf32>
    %c0_61 = arith.constant 0 : index
    %c0_62 = arith.constant 0 : index
    %84 = vector.load %arg13[%c0_61, %c0_62] : memref<160x128xf32, #tpu.memory_space<vmem>>, vector<160x128xf32>
    tpu.vector_store %arg13[%c0_61, %c0_62], %83 {strides = array<i32>} : memref<160x128xf32, #tpu.memory_space<vmem>>, vector<160x128xf32>,
    %c16_63 = arith.constant 16 : index
    %c0_64 = arith.constant 0 : index
    %85 = vector.load %arg13[%c16_63, %c0_64] : memref<160x128xf32, #tpu.memory_space<vmem>>, vector<128x128xf32>
    tpu.vector_store %arg13[%c16_63, %c0_64], %82 {strides = array<i32>} : memref<160x128xf32, #tpu.memory_space<vmem>>, vector<128x128xf32>,
    %cst_65 = arith.constant 0.000000e+00 : f32
    %86 = vector.broadcast %cst_65 : f32 to vector<128x128xf32>
    %c4_66 = arith.constant 4 : index
    %c0_67 = arith.constant 0 : index
    %87 = vector.load %arg13[%c4_66, %c0_67] : memref<160x128xf32, #tpu.memory_space<vmem>>, vector<128x128xf32>
    %88 = arith.truncf %87 : vector<128x128xf32> to vector<128x128xbf16>
    %c0_68 = arith.constant 0 : index
    %c0_69 = arith.constant 0 : index
    %c0_70 = arith.constant 0 : index
    %89 = vector.load %arg7[%c0_68, %c0_69, %c0_70] : memref<9x128x128xbf16, #tpu.memory_space<vmem>>, vector<1x128x128xbf16>
    %90 = vector.shape_cast %89 : vector<1x128x128xbf16> to vector<128x128xbf16>
    %cst_71 = arith.constant dense<0.000000e+00> : vector<128x128xf32>
    %91 = tpu.matmul %88, %90, %cst_71 {dimension_numbers = #tpu.dot_dimension_numbers<[1], [0], [0], [1], [0, 0, 1, 1], [], []>} : vector<128x128xbf16>, vector<128x128xbf16>, vector<128x128xf32> -> vector<128x128xf32>
    %92 = arith.addf %86, %91 : vector<128x128xf32>
    %c5_72 = arith.constant 5 : index
    %c0_73 = arith.constant 0 : index
    %93 = vector.load %arg13[%c5_72, %c0_73] : memref<160x128xf32, #tpu.memory_space<vmem>>, vector<128x128xf32>
    %94 = arith.truncf %93 : vector<128x128xf32> to vector<128x128xbf16>
    %c1_74 = arith.constant 1 : index
    %c0_75 = arith.constant 0 : index
    %c0_76 = arith.constant 0 : index
    %95 = vector.load %arg7[%c1_74, %c0_75, %c0_76] : memref<9x128x128xbf16, #tpu.memory_space<vmem>>, vector<1x128x128xbf16>
    %96 = vector.shape_cast %95 : vector<1x128x128xbf16> to vector<128x128xbf16>
    %cst_77 = arith.constant dense<0.000000e+00> : vector<128x128xf32>
    %97 = tpu.matmul %94, %96, %cst_77 {dimension_numbers = #tpu.dot_dimension_numbers<[1], [0], [0], [1], [0, 0, 1, 1], [], []>} : vector<128x128xbf16>, vector<128x128xbf16>, vector<128x128xf32> -> vector<128x128xf32>
    %98 = arith.addf %92, %97 : vector<128x128xf32>
    %c6_78 = arith.constant 6 : index
    %c0_79 = arith.constant 0 : index
    %99 = vector.load %arg13[%c6_78, %c0_79] : memref<160x128xf32, #tpu.memory_space<vmem>>, vector<128x128xf32>
    %100 = arith.truncf %99 : vector<128x128xf32> to vector<128x128xbf16>
    %c2_80 = arith.constant 2 : index
    %c0_81 = arith.constant 0 : index
    %c0_82 = arith.constant 0 : index
    %101 = vector.load %arg7[%c2_80, %c0_81, %c0_82] : memref<9x128x128xbf16, #tpu.memory_space<vmem>>, vector<1x128x128xbf16>
    %102 = vector.shape_cast %101 : vector<1x128x128xbf16> to vector<128x128xbf16>
    %cst_83 = arith.constant dense<0.000000e+00> : vector<128x128xf32>
    %103 = tpu.matmul %100, %102, %cst_83 {dimension_numbers = #tpu.dot_dimension_numbers<[1], [0], [0], [1], [0, 0, 1, 1], [], []>} : vector<128x128xbf16>, vector<128x128xbf16>, vector<128x128xf32> -> vector<128x128xf32>
    %104 = arith.addf %98, %103 : vector<128x128xf32>
    %c15_84 = arith.constant 15 : index
    %c0_85 = arith.constant 0 : index
    %105 = vector.load %arg13[%c15_84, %c0_85] : memref<160x128xf32, #tpu.memory_space<vmem>>, vector<128x128xf32>
    %106 = arith.truncf %105 : vector<128x128xf32> to vector<128x128xbf16>
    %c3_86 = arith.constant 3 : index
    %c0_87 = arith.constant 0 : index
    %c0_88 = arith.constant 0 : index
    %107 = vector.load %arg7[%c3_86, %c0_87, %c0_88] : memref<9x128x128xbf16, #tpu.memory_space<vmem>>, vector<1x128x128xbf16>
    %108 = vector.shape_cast %107 : vector<1x128x128xbf16> to vector<128x128xbf16>
    %cst_89 = arith.constant dense<0.000000e+00> : vector<128x128xf32>
    %109 = tpu.matmul %106, %108, %cst_89 {dimension_numbers = #tpu.dot_dimension_numbers<[1], [0], [0], [1], [0, 0, 1, 1], [], []>} : vector<128x128xbf16>, vector<128x128xbf16>, vector<128x128xf32> -> vector<128x128xf32>
    %110 = arith.addf %104, %109 : vector<128x128xf32>
    %c16_90 = arith.constant 16 : index
    %c0_91 = arith.constant 0 : index
    %111 = vector.load %arg13[%c16_90, %c0_91] : memref<160x128xf32, #tpu.memory_space<vmem>>, vector<128x128xf32>
    %112 = arith.truncf %111 : vector<128x128xf32> to vector<128x128xbf16>
    %c4_92 = arith.constant 4 : index
    %c0_93 = arith.constant 0 : index
    %c0_94 = arith.constant 0 : index
    %113 = vector.load %arg7[%c4_92, %c0_93, %c0_94] : memref<9x128x128xbf16, #tpu.memory_space<vmem>>, vector<1x128x128xbf16>
    %114 = vector.shape_cast %113 : vector<1x128x128xbf16> to vector<128x128xbf16>
    %cst_95 = arith.constant dense<0.000000e+00> : vector<128x128xf32>
    %115 = tpu.matmul %112, %114, %cst_95 {dimension_numbers = #tpu.dot_dimension_numbers<[1], [0], [0], [1], [0, 0, 1, 1], [], []>} : vector<128x128xbf16>, vector<128x128xbf16>, vector<128x128xf32> -> vector<128x128xf32>
    %116 = arith.addf %110, %115 : vector<128x128xf32>
    %c17_96 = arith.constant 17 : index
    %c0_97 = arith.constant 0 : index
    %117 = vector.load %arg13[%c17_96, %c0_97] : memref<160x128xf32, #tpu.memory_space<vmem>>, vector<128x128xf32>
    %118 = arith.truncf %117 : vector<128x128xf32> to vector<128x128xbf16>
    %c5_98 = arith.constant 5 : index
    %c0_99 = arith.constant 0 : index
    %c0_100 = arith.constant 0 : index
    %119 = vector.load %arg7[%c5_98, %c0_99, %c0_100] : memref<9x128x128xbf16, #tpu.memory_space<vmem>>, vector<1x128x128xbf16>
    %120 = vector.shape_cast %119 : vector<1x128x128xbf16> to vector<128x128xbf16>
    %cst_101 = arith.constant dense<0.000000e+00> : vector<128x128xf32>
    %121 = tpu.matmul %118, %120, %cst_101 {dimension_numbers = #tpu.dot_dimension_numbers<[1], [0], [0], [1], [0, 0, 1, 1], [], []>} : vector<128x128xbf16>, vector<128x128xbf16>, vector<128x128xf32> -> vector<128x128xf32>
    %122 = arith.addf %116, %121 : vector<128x128xf32>
    %c26_102 = arith.constant 26 : index
    %c0_103 = arith.constant 0 : index
    %123 = vector.load %arg13[%c26_102, %c0_103] : memref<160x128xf32, #tpu.memory_space<vmem>>, vector<128x128xf32>
    %124 = arith.truncf %123 : vector<128x128xf32> to vector<128x128xbf16>
    %c6_104 = arith.constant 6 : index
    %c0_105 = arith.constant 0 : index
    %c0_106 = arith.constant 0 : index
    %125 = vector.load %arg7[%c6_104, %c0_105, %c0_106] : memref<9x128x128xbf16, #tpu.memory_space<vmem>>, vector<1x128x128xbf16>
    %126 = vector.shape_cast %125 : vector<1x128x128xbf16> to vector<128x128xbf16>
    %cst_107 = arith.constant dense<0.000000e+00> : vector<128x128xf32>
    %127 = tpu.matmul %124, %126, %cst_107 {dimension_numbers = #tpu.dot_dimension_numbers<[1], [0], [0], [1], [0, 0, 1, 1], [], []>} : vector<128x128xbf16>, vector<128x128xbf16>, vector<128x128xf32> -> vector<128x128xf32>
    %128 = arith.addf %122, %127 : vector<128x128xf32>
    %c27_108 = arith.constant 27 : index
    %c0_109 = arith.constant 0 : index
    %129 = vector.load %arg13[%c27_108, %c0_109] : memref<160x128xf32, #tpu.memory_space<vmem>>, vector<128x128xf32>
    %130 = arith.truncf %129 : vector<128x128xf32> to vector<128x128xbf16>
    %c7_110 = arith.constant 7 : index
    %c0_111 = arith.constant 0 : index
    %c0_112 = arith.constant 0 : index
    %131 = vector.load %arg7[%c7_110, %c0_111, %c0_112] : memref<9x128x128xbf16, #tpu.memory_space<vmem>>, vector<1x128x128xbf16>
    %132 = vector.shape_cast %131 : vector<1x128x128xbf16> to vector<128x128xbf16>
    %cst_113 = arith.constant dense<0.000000e+00> : vector<128x128xf32>
    %133 = tpu.matmul %130, %132, %cst_113 {dimension_numbers = #tpu.dot_dimension_numbers<[1], [0], [0], [1], [0, 0, 1, 1], [], []>} : vector<128x128xbf16>, vector<128x128xbf16>, vector<128x128xf32> -> vector<128x128xf32>
    %134 = arith.addf %128, %133 : vector<128x128xf32>
    %c28_114 = arith.constant 28 : index
    %c0_115 = arith.constant 0 : index
    %135 = vector.load %arg13[%c28_114, %c0_115] : memref<160x128xf32, #tpu.memory_space<vmem>>, vector<128x128xf32>
    %136 = arith.truncf %135 : vector<128x128xf32> to vector<128x128xbf16>
    %c8_116 = arith.constant 8 : index
    %c0_117 = arith.constant 0 : index
    %c0_118 = arith.constant 0 : index
    %137 = vector.load %arg7[%c8_116, %c0_117, %c0_118] : memref<9x128x128xbf16, #tpu.memory_space<vmem>>, vector<1x128x128xbf16>
    %138 = vector.shape_cast %137 : vector<1x128x128xbf16> to vector<128x128xbf16>
    %cst_119 = arith.constant dense<0.000000e+00> : vector<128x128xf32>
    %139 = tpu.matmul %136, %138, %cst_119 {dimension_numbers = #tpu.dot_dimension_numbers<[1], [0], [0], [1], [0, 0, 1, 1], [], []>} : vector<128x128xbf16>, vector<128x128xbf16>, vector<128x128xf32> -> vector<128x128xf32>
    %140 = arith.addf %134, %139 : vector<128x128xf32>
    %c0_120 = arith.constant 0 : index
    %c0_121 = arith.constant 0 : index
    %141 = vector.load %arg8[%c0_120, %c0_121] : memref<1x128xf32, #tpu.memory_space<vmem>>, vector<1x128xf32>
    %142 = vector.broadcast %141 : vector<1x128xf32> to vector<128x128xf32>
    %143 = arith.addf %140, %142 : vector<128x128xf32>
    %cst_122 = arith.constant 0.000000e+00 : f32
    %144 = vector.broadcast %cst_122 : f32 to vector<128x128xf32>
    %145 = arith.cmpf oge, %143, %144 : vector<128x128xf32>
    %cst_123 = arith.constant 0.00999999977 : f32
    %146 = vector.broadcast %cst_123 : f32 to vector<128x128xf32>
    %147 = arith.mulf %146, %143 : vector<128x128xf32>
    %148 = arith.select %145, %143, %147 : vector<128x128xi1>, vector<128x128xf32>
    %149 = vector.broadcast %0 : vector<128x1xf32> to vector<128x128xf32>
    %150 = arith.mulf %148, %149 : vector<128x128xf32>
    %cst_124 = arith.constant dense<0.000000e+00> : vector<128xf32>
    %151 = vector.multi_reduction <add>, %150, %cst_124 [0] : vector<128x128xf32> to vector<128xf32>
    %152 = vector.shape_cast %151 : vector<128xf32> to vector<1x128xf32>
    %cst_125 = arith.constant 0.0123456791 : f32
    %153 = vector.broadcast %cst_125 : f32 to vector<1x128xf32>
    %154 = arith.mulf %152, %153 : vector<1x128xf32>
    %c0_126 = arith.constant 0 : index
    %c0_127 = arith.constant 0 : index
    %155 = vector.load %arg9[%c0_126, %c0_127] : memref<128x128xf32, #tpu.memory_space<vmem>>, vector<128x128xf32>
    %cst_128 = arith.constant dense<0.000000e+00> : vector<1x128xf32>
    %156 = tpu.matmul %154, %155, %cst_128 {dimension_numbers = #tpu.dot_dimension_numbers<[1], [0], [0], [1], [0, 0, 1, 1], [], []>} : vector<1x128xf32>, vector<128x128xf32>, vector<1x128xf32> -> vector<1x128xf32>
    %c0_129 = arith.constant 0 : index
    %c0_130 = arith.constant 0 : index
    %157 = vector.load %arg10[%c0_129, %c0_130] : memref<1x128xf32, #tpu.memory_space<vmem>>, vector<1x128xf32>
    %158 = arith.addf %156, %157 : vector<1x128xf32>
    %cst_131 = arith.constant dense<0xFF800000> : vector<1xf32>
    %159 = vector.multi_reduction <maximumf>, %158, %cst_131 [1] : vector<1x128xf32> to vector<1xf32>
    %160 = vector.shape_cast %159 : vector<1xf32> to vector<1x1xf32>
    %161 = vector.broadcast %160 : vector<1x1xf32> to vector<1x128xf32>
    %162 = arith.subf %158, %161 : vector<1x128xf32>
    %163 = math.exp %162 : vector<1x128xf32>
    %cst_132 = arith.constant dense<0.000000e+00> : vector<1xf32>
    %164 = vector.multi_reduction <add>, %163, %cst_132 [1] : vector<1x128xf32> to vector<1xf32>
    %165 = vector.shape_cast %164 : vector<1xf32> to vector<1x1xf32>
    %166 = vector.broadcast %165 : vector<1x1xf32> to vector<1x128xf32>
    %167 = arith.divf %163, %166 : vector<1x128xf32>
    %c0_133 = arith.constant 0 : index
    %c0_134 = arith.constant 0 : index
    %c0_135 = arith.constant 0 : index
    %168 = vector.load %arg11[%c0_133, %c0_134, %c0_135] : memref<1x1x128xf32, #tpu.memory_space<vmem>>, vector<1x1x128xf32>
    %169 = vector.shape_cast %168 : vector<1x1x128xf32> to vector<1x128xf32>
    %170 = vector.shape_cast %167 : vector<1x128xf32> to vector<1x1x128xf32>
    tpu.vector_store %arg11[%c0_133, %c0_134, %c0_135], %170 {strides = array<i32>} : memref<1x1x128xf32, #tpu.memory_space<vmem>>, vector<1x1x128xf32>,
    return
  }
  func.func @transform_0(%arg0: i32) -> (i32, i32, i32) {
    %c0_i32 = arith.constant 0 : i32
    %c0_i32_0 = arith.constant 0 : i32
    %c0_i32_1 = arith.constant 0 : i32
    return %arg0, %c0_i32, %c0_i32_0 : i32, i32, i32
  }
  func.func @transform_1(%arg0: i32) -> (i32, i32) {
    %c0_i32 = arith.constant 0 : i32
    %c0_i32_0 = arith.constant 0 : i32
    %c0_i32_1 = arith.constant 0 : i32
    return %c0_i32, %c0_i32_0 : i32, i32
  }
  func.func @transform_2(%arg0: i32) -> (i32, i32) {
    %c0_i32 = arith.constant 0 : i32
    %c0_i32_0 = arith.constant 0 : i32
    %c0_i32_1 = arith.constant 0 : i32
    return %c0_i32, %c0_i32_0 : i32, i32
  }
  func.func @transform_3(%arg0: i32) -> (i32, i32) {
    %c0_i32 = arith.constant 0 : i32
    %c0_i32_0 = arith.constant 0 : i32
    %c0_i32_1 = arith.constant 0 : i32
    return %c0_i32, %c0_i32_0 : i32, i32
  }
  func.func @transform_4(%arg0: i32) -> (i32, i32, i32) {
    %c0_i32 = arith.constant 0 : i32
    %c0_i32_0 = arith.constant 0 : i32
    %c0_i32_1 = arith.constant 0 : i32
    %c0_i32_2 = arith.constant 0 : i32
    return %c0_i32, %c0_i32_0, %c0_i32_1 : i32, i32, i32
  }
  func.func @transform_5(%arg0: i32) -> (i32, i32) {
    %c0_i32 = arith.constant 0 : i32
    %c0_i32_0 = arith.constant 0 : i32
    %c0_i32_1 = arith.constant 0 : i32
    return %c0_i32, %c0_i32_0 : i32, i32
  }
  func.func @transform_6(%arg0: i32) -> (i32, i32, i32) {
    %c0_i32 = arith.constant 0 : i32
    %c0_i32_0 = arith.constant 0 : i32
    %c0_i32_1 = arith.constant 0 : i32
    %c0_i32_2 = arith.constant 0 : i32
    return %c0_i32, %c0_i32_0, %c0_i32_1 : i32, i32, i32
  }
  func.func @transform_7(%arg0: i32) -> (i32, i32) {
    %c0_i32 = arith.constant 0 : i32
    %c0_i32_0 = arith.constant 0 : i32
    %c0_i32_1 = arith.constant 0 : i32
    return %c0_i32, %c0_i32_0 : i32, i32
  }
  func.func @transform_8(%arg0: i32) -> (i32, i32) {
    %c0_i32 = arith.constant 0 : i32
    %c0_i32_0 = arith.constant 0 : i32
    %c0_i32_1 = arith.constant 0 : i32
    return %c0_i32, %c0_i32_0 : i32, i32
  }
  func.func @transform_9(%arg0: i32) -> (i32, i32) {
    %c0_i32 = arith.constant 0 : i32
    %c0_i32_0 = arith.constant 0 : i32
    %c0_i32_1 = arith.constant 0 : i32
    return %c0_i32, %c0_i32_0 : i32, i32
  }
  func.func @transform_10(%arg0: i32) -> (i32, i32, i32) {
    %c0_i32 = arith.constant 0 : i32
    %c0_i32_0 = arith.constant 0 : i32
    %c0_i32_1 = arith.constant 0 : i32
    return %arg0, %c0_i32, %c0_i32_0 : i32, i32, i32
  }
}

</mosaic_0001>

<llo_original>
// kernel: forward.1
$region0: #{forward.1}
  #allocation0 [shape = 'u32[]', space=smem, size = 0x4, offset = 0x4, fixed_abs, tag = 'smem constant byte address 0x4 - core index']
  #allocation1 [shape = 'u32[72,128]{1,0:T(1,128)}', space=vmem, size = 0x9000, scoped, tag = 'internal scratch']
  #allocation2 [shape = 'f32[160,128]{1,0:T(8,128)}', space=vmem, size = 0x14000, scoped, tag = 'scratch operand']
  #allocation3 [shape = 'f32[160,128]{1,0:T(8,128)}', space=vmem, size = 0x14000, scoped, tag = 'scratch operand']
  %s0 = inlined_call_operand.vmem [shape: bf16[2,128,128], index: 0, kind: input, shape index: {}]
  %s1 = inlined_call_operand.vmem [shape: f32[128,1], index: 1, kind: input, shape index: {}]
  %s2 = inlined_call_operand.vmem [shape: bf16[128,128], index: 2, kind: input, shape index: {}]
  %s3 = inlined_call_operand.vmem [shape: f32[1,128], index: 3, kind: input, shape index: {}]
  %s4 = inlined_call_operand.vmem [shape: bf16[9,128,128], index: 4, kind: input, shape index: {}]
  %s5 = inlined_call_operand.vmem [shape: f32[1,128], index: 5, kind: input, shape index: {}]
  %s6 = inlined_call_operand.vmem [shape: bf16[9,128,128], index: 6, kind: input, shape index: {}]
  %s7 = inlined_call_operand.vmem [shape: f32[1,128], index: 7, kind: input, shape index: {}]
  %s8 = inlined_call_operand.vmem [shape: f32[128,128], index: 8, kind: input, shape index: {}]
  %s9 = inlined_call_operand.vmem [shape: f32[1,128], index: 9, kind: input, shape index: {}]
  %s10 = inlined_call_operand.hbm [shape: f32[2,1,128], index: 10, kind: output, shape index: {}]
  %s11 = sld [smem:[#allocation0]]
  $region73: #{forward.1} parent=0
    _
  %s13 = ssub.s32 1, %s11
  %s14 = scalar_select 0, %s13, %s11
  $region1: #{forward.1} parent=0
    #allocation4 [shape = 'u8[1024]{0}', space=vmem, size = 0x400, scoped, tag = 'output window, operand 0']
    #allocation5 [shape = 's32[2]{0}', space=sflag, size = 0x8, scoped, tag = 'scoped memory for forward.1']
    %15 = vsyncpa [#allocation5], 0
    %s16 = scalar_lea.sflag [#allocation5], 1
    %17 = vsyncpa %s16, 0
    loop: start=0, step=1, limit=4
    $region2: #{forward.1} parent=1 // loop_pre_header
      _
    $region3: #{forward.1} parent=1 // loop_header
      %s19 = sphi 0, %s23
      %p20 = scmp.ge.s32.totalorder %s19, 4
      %s29 = sphi 0, %s31
      %s32 = sphi 0, %s29
      %s33 = sphi 0, %s32
      %s49 = sphi 0, %s33
      %s53 = sphi 0, %s53
      %s55 = sphi 0, %s53
      %s56 = sphi 0, %s55
      %s70 = sphi 0, %s56
      %s74 = sphi 0, %s74
      %s76 = sphi 0, %s74
      %s77 = sphi 0, %s76
      %s91 = sphi 0, %s77
      %s95 = sphi 0, %s95
      %s97 = sphi 0, %s95
      %s98 = sphi 0, %s97
      %s112 = sphi 0, %s98
      %s116 = sphi 0, %s116
      %s118 = sphi 0, %s116
      %s119 = sphi 0, %s118
      %s133 = sphi 0, %s119
      %s137 = sphi 0, %s137
      %s139 = sphi 0, %s137
      %s140 = sphi 0, %s139
      %s154 = sphi 0, %s140
      %s158 = sphi 0, %s158
      %s160 = sphi 0, %s158
      %s161 = sphi 0, %s160
      %s175 = sphi 0, %s161
      %s179 = sphi 0, %s179
      %s181 = sphi 0, %s179
      %s182 = sphi 0, %s181
      %s196 = sphi 0, %s182
      %s200 = sphi 0, %s200
      %s202 = sphi 0, %s200
      %s203 = sphi 0, %s202
      %s217 = sphi 0, %s203
      %s221 = sphi 0, %s221
      %s223 = sphi 0, %s221
      %s224 = sphi 0, %s223
      %s238 = sphi 0, %s224
      %s244 = sphi 0, %s246
      %s247 = sphi 0, %s244
      %s248 = sphi 0, %s247
      %s264 = sphi 0, %s248
    $region4: #{forward.1} parent=1 // loop_header_branch
      %22 = sbr.rel (%p20) target = $region8
    $region5: #{forward.1} parent=1 // loop_body
      %s24 = ssub.s32 %s19, 1
      %s25 = ssub.s32 %s19, 2
      %s26 = sadd.s32 %s19, 1
      %s27 = ssub.s32 %s19, %s26
      %p28 = scmp.eq.s32.totalorder %s27, 0
      %s30 = sadd.s32 %s29, 1
      %s31 = scalar_select %p28, %s29, %s30
      %p34 = pneg %p28
      %p35 = scmp.eq.s32.totalorder %s19, 1
      %p36 = por %p34, %p35
      %p37 = scmp.ne.s32.totalorder %s29, %s32
      %p38 = scmp.eq.s32.totalorder %s19, 0
      %p39 = por %p37, %p38
      %p40 = scmp.ne.s32.totalorder %s29, %s32
      %p41 = scmp.eq.s32.totalorder %s24, 1
      %p42 = por %p40, %p41
      %p43 = scmp.ne.s32.totalorder %s32, %s33
      %p44 = scmp.eq.s32.totalorder %s24, 0
      %p45 = por %p43, %p44
      %p46 = scmp.ne.s32.totalorder %s32, %s33
      %p47 = scmp.eq.s32.totalorder %s25, 1
      %p48 = por %p46, %p47
      %p50 = scmp.ne.s32.totalorder %s33, %s49
      %p51 = scmp.eq.s32.totalorder %s25, 0
      %p52 = por %p50, %p51
      %s54 = sadd.s32 %s53, 1
      %p57 = scmp.eq.s32.totalorder %s19, 1
      %p58 = scmp.ne.s32.totalorder %s53, %s55
      %p59 = scmp.eq.s32.totalorder %s19, 0
      %p60 = por %p58, %p59
      %p61 = scmp.ne.s32.totalorder %s53, %s55
      %p62 = scmp.eq.s32.totalorder %s24, 1
      %p63 = por %p61, %p62
      %p64 = scmp.ne.s32.totalorder %s55, %s56
      %p65 = scmp.eq.s32.totalorder %s24, 0
      %p66 = por %p64, %p65
      %p67 = scmp.ne.s32.totalorder %s55, %s56
      %p68 = scmp.eq.s32.totalorder %s25, 1
      %p69 = por %p67, %p68
      %p71 = scmp.ne.s32.totalorder %s56, %s70
      %p72 = scmp.eq.s32.totalorder %s25, 0
      %p73 = por %p71, %p72
      %s75 = sadd.s32 %s74, 1
      %p78 = scmp.eq.s32.totalorder %s19, 1
      %p79 = scmp.ne.s32.totalorder %s74, %s76
      %p80 = scmp.eq.s32.totalorder %s19, 0
      %p81 = por %p79, %p80
      %p82 = scmp.ne.s32.totalorder %s74, %s76
      %p83 = scmp.eq.s32.totalorder %s24, 1
      %p84 = por %p82, %p83
      %p85 = scmp.ne.s32.totalorder %s76, %s77
      %p86 = scmp.eq.s32.totalorder %s24, 0
      %p87 = por %p85, %p86
      %p88 = scmp.ne.s32.totalorder %s76, %s77
      %p89 = scmp.eq.s32.totalorder %s25, 1
      %p90 = por %p88, %p89
      %p92 = scmp.ne.s32.totalorder %s77, %s91
      %p93 = scmp.eq.s32.totalorder %s25, 0
      %p94 = por %p92, %p93
      %s96 = sadd.s32 %s95, 1
      %p99 = scmp.eq.s32.totalorder %s19, 1
      %p100 = scmp.ne.s32.totalorder %s95, %s97
      %p101 = scmp.eq.s32.totalorder %s19, 0
      %p102 = por %p100, %p101
      %p103 = scmp.ne.s32.totalorder %s95, %s97
      %p104 = scmp.eq.s32.totalorder %s24, 1
      %p105 = por %p103, %p104
      %p106 = scmp.ne.s32.totalorder %s97, %s98
      %p107 = scmp.eq.s32.totalorder %s24, 0
      %p108 = por %p106, %p107
      %p109 = scmp.ne.s32.totalorder %s97, %s98
      %p110 = scmp.eq.s32.totalorder %s25, 1
      %p111 = por %p109, %p110
      %p113 = scmp.ne.s32.totalorder %s98, %s112
      %p114 = scmp.eq.s32.totalorder %s25, 0
      %p115 = por %p113, %p114
      %s117 = sadd.s32 %s116, 1
      %p120 = scmp.eq.s32.totalorder %s19, 1
      %p121 = scmp.ne.s32.totalorder %s116, %s118
      %p122 = scmp.eq.s32.totalorder %s19, 0
      %p123 = por %p121, %p122
      %p124 = scmp.ne.s32.totalorder %s116, %s118
      %p125 = scmp.eq.s32.totalorder %s24, 1
      %p126 = por %p124, %p125
      %p127 = scmp.ne.s32.totalorder %s118, %s119
      %p128 = scmp.eq.s32.totalorder %s24, 0
      %p129 = por %p127, %p128
      %p130 = scmp.ne.s32.totalorder %s118, %s119
      %p131 = scmp.eq.s32.totalorder %s25, 1
      %p132 = por %p130, %p131
      %p134 = scmp.ne.s32.totalorder %s119, %s133
      %p135 = scmp.eq.s32.totalorder %s25, 0
      %p136 = por %p134, %p135
      %s138 = sadd.s32 %s137, 1
      %p141 = scmp.eq.s32.totalorder %s19, 1
      %p142 = scmp.ne.s32.totalorder %s137, %s139
      %p143 = scmp.eq.s32.totalorder %s19, 0
      %p144 = por %p142, %p143
      %p145 = scmp.ne.s32.totalorder %s137, %s139
      %p146 = scmp.eq.s32.totalorder %s24, 1
      %p147 = por %p145, %p146
      %p148 = scmp.ne.s32.totalorder %s139, %s140
      %p149 = scmp.eq.s32.totalorder %s24, 0
      %p150 = por %p148, %p149
      %p151 = scmp.ne.s32.totalorder %s139, %s140
      %p152 = scmp.eq.s32.totalorder %s25, 1
      %p153 = por %p151, %p152
      %p155 = scmp.ne.s32.totalorder %s140, %s154
      %p156 = scmp.eq.s32.totalorder %s25, 0
      %p157 = por %p155, %p156
      %s159 = sadd.s32 %s158, 1
      %p162 = scmp.eq.s32.totalorder %s19, 1
      %p163 = scmp.ne.s32.totalorder %s158, %s160
      %p164 = scmp.eq.s32.totalorder %s19, 0
      %p165 = por %p163, %p164
      %p166 = scmp.ne.s32.totalorder %s158, %s160
      %p167 = scmp.eq.s32.totalorder %s24, 1
      %p168 = por %p166, %p167
      %p169 = scmp.ne.s32.totalorder %s160, %s161
      %p170 = scmp.eq.s32.totalorder %s24, 0
      %p171 = por %p169, %p170
      %p172 = scmp.ne.s32.totalorder %s160, %s161
      %p173 = scmp.eq.s32.totalorder %s25, 1
      %p174 = por %p172, %p173
      %p176 = scmp.ne.s32.totalorder %s161, %s175
      %p177 = scmp.eq.s32.totalorder %s25, 0
      %p178 = por %p176, %p177
      %s180 = sadd.s32 %s179, 1
      %p183 = scmp.eq.s32.totalorder %s19, 1
      %p184 = scmp.ne.s32.totalorder %s179, %s181
      %p185 = scmp.eq.s32.totalorder %s19, 0
      %p186 = por %p184, %p185
      %p187 = scmp.ne.s32.totalorder %s179, %s181
      %p188 = scmp.eq.s32.totalorder %s24, 1
      %p189 = por %p187, %p188
      %p190 = scmp.ne.s32.totalorder %s181, %s182
      %p191 = scmp.eq.s32.totalorder %s24, 0
      %p192 = por %p190, %p191
      %p193 = scmp.ne.s32.totalorder %s181, %s182
      %p194 = scmp.eq.s32.totalorder %s25, 1
      %p195 = por %p193, %p194
      %p197 = scmp.ne.s32.totalorder %s182, %s196
      %p198 = scmp.eq.s32.totalorder %s25, 0
      %p199 = por %p197, %p198
      %s201 = sadd.s32 %s200, 1
      %p204 = scmp.eq.s32.totalorder %s19, 1
      %p205 = scmp.ne.s32.totalorder %s200, %s202
      %p206 = scmp.eq.s32.totalorder %s19, 0
      %p207 = por %p205, %p206
      %p208 = scmp.ne.s32.totalorder %s200, %s202
      %p209 = scmp.eq.s32.totalorder %s24, 1
      %p210 = por %p208, %p209
      %p211 = scmp.ne.s32.totalorder %s202, %s203
      %p212 = scmp.eq.s32.totalorder %s24, 0
      %p213 = por %p211, %p212
      %p214 = scmp.ne.s32.totalorder %s202, %s203
      %p215 = scmp.eq.s32.totalorder %s25, 1
      %p216 = por %p214, %p215
      %p218 = scmp.ne.s32.totalorder %s203, %s217
      %p219 = scmp.eq.s32.totalorder %s25, 0
      %p220 = por %p218, %p219
      %s222 = sadd.s32 %s221, 1
      %p225 = scmp.eq.s32.totalorder %s19, 1
      %p226 = scmp.ne.s32.totalorder %s221, %s223
      %p227 = scmp.eq.s32.totalorder %s19, 0
      %p228 = por %p226, %p227
      %p229 = scmp.ne.s32.totalorder %s221, %s223
      %p230 = scmp.eq.s32.totalorder %s24, 1
      %p231 = por %p229, %p230
      %p232 = scmp.ne.s32.totalorder %s223, %s224
      %p233 = scmp.eq.s32.totalorder %s24, 0
      %p234 = por %p232, %p233
      %p235 = scmp.ne.s32.totalorder %s223, %s224
      %p236 = scmp.eq.s32.totalorder %s25, 1
      %p237 = por %p235, %p236
      %p239 = scmp.ne.s32.totalorder %s224, %s238
      %p240 = scmp.eq.s32.totalorder %s25, 0
      %p241 = por %p239, %p240
      %s242 = ssub.s32 %s19, %s26
      %p243 = scmp.eq.s32.totalorder %s242, 0
      %s245 = sadd.s32 %s244, 1
      %s246 = scalar_select %p243, %s244, %s245
      %p249 = pneg %p243
      %p250 = scmp.eq.s32.totalorder %s19, 1
      %p251 = por %p249, %p250
      %p252 = scmp.ne.s32.totalorder %s244, %s247
      %p253 = scmp.eq.s32.totalorder %s19, 0
      %p254 = por %p252, %p253
      %p255 = scmp.ne.s32.totalorder %s244, %s247
      %p256 = scmp.eq.s32.totalorder %s24, 1
      %p257 = por %p255, %p256
      %p258 = scmp.ne.s32.totalorder %s247, %s248
      %p259 = scmp.eq.s32.totalorder %s24, 0
      %p260 = por %p258, %p259
      %p261 = scmp.ne.s32.totalorder %s247, %s248
      %p262 = scmp.eq.s32.totalorder %s25, 1
      %p263 = por %p261, %p262
      %p265 = scmp.ne.s32.totalorder %s248, %s264
      %p266 = scmp.eq.s32.totalorder %s25, 0
      %p267 = por %p265, %p266
      %p268 = scmp.le.s32.totalorder 1, %s19
      %p269 = scmp.lt.s32.totalorder %s19, 3
      %p270 = pnand %p268, %p269
      %p271 = pneg %p270
      // Predicated region
      $region9: #{forward.1} parent=5 // pred_check
        _
      $region10: #{forward.1} parent=5 // pred_check_branch
        %273 = sbr.rel (%p270) target = $region12
      $region11: #{forward.1} parent=5 // pred_region
        %s274 = ssub.s32 %s19, 1
        // Predicated region
        $region13: #{forward.1} parent=11 // pred_check
          %p275 = pneg %p66
        $region14: #{forward.1} parent=11 // pred_check_branch
          %277 = sbr.rel (%p275) target = $region16
        $region15: #{forward.1} parent=11 // pred_region
          _
        $region16: #{forward.1} parent=11 // pred_fallthru
          _
        // Predicated region
        $region17: #{forward.1} parent=11 // pred_check
          %p278 = pneg %p87
        $region18: #{forward.1} parent=11 // pred_check_branch
          %280 = sbr.rel (%p278) target = $region20
        $region19: #{forward.1} parent=11 // pred_region
          _
        $region20: #{forward.1} parent=11 // pred_fallthru
          _
        // Predicated region
        $region21: #{forward.1} parent=11 // pred_check
          %p281 = pneg %p108
        $region22: #{forward.1} parent=11 // pred_check_branch
          %283 = sbr.rel (%p281) target = $region24
        $region23: #{forward.1} parent=11 // pred_region
          _
        $region24: #{forward.1} parent=11 // pred_fallthru
          _
        // Predicated region
        $region25: #{forward.1} parent=11 // pred_check
          %p284 = pneg %p129
        $region26: #{forward.1} parent=11 // pred_check_branch
          %286 = sbr.rel (%p284) target = $region28
        $region27: #{forward.1} parent=11 // pred_region
          _
        $region28: #{forward.1} parent=11 // pred_fallthru
          _
        // Predicated region
        $region29: #{forward.1} parent=11 // pred_check
          %p287 = pneg %p150
        $region30: #{forward.1} parent=11 // pred_check_branch
          %289 = sbr.rel (%p287) target = $region32
        $region31: #{forward.1} parent=11 // pred_region
          _
        $region32: #{forward.1} parent=11 // pred_fallthru
          _
        // Predicated region
        $region33: #{forward.1} parent=11 // pred_check
          %p290 = pneg %p171
        $region34: #{forward.1} parent=11 // pred_check_branch
          %292 = sbr.rel (%p290) target = $region36
        $region35: #{forward.1} parent=11 // pred_region
          _
        $region36: #{forward.1} parent=11 // pred_fallthru
          _
        // Predicated region
        $region37: #{forward.1} parent=11 // pred_check
          %p293 = pneg %p192
        $region38: #{forward.1} parent=11 // pred_check_branch
          %295 = sbr.rel (%p293) target = $region40
        $region39: #{forward.1} parent=11 // pred_region
          _
        $region40: #{forward.1} parent=11 // pred_fallthru
          _
        // Predicated region
        $region41: #{forward.1} parent=11 // pred_check
          %p296 = pneg %p213
        $region42: #{forward.1} parent=11 // pred_check_branch
          %298 = sbr.rel (%p296) target = $region44
        $region43: #{forward.1} parent=11 // pred_region
          _
        $region44: #{forward.1} parent=11 // pred_fallthru
          _
        // Predicated region
        $region45: #{forward.1} parent=11 // pred_check
          %p299 = pneg %p234
        $region46: #{forward.1} parent=11 // pred_check_branch
          %301 = sbr.rel (%p299) target = $region48
        $region47: #{forward.1} parent=11 // pred_region
          _
        $region48: #{forward.1} parent=11 // pred_fallthru
          _
      $region12: #{forward.1} parent=5 // pred_fallthru
        _
      %p302 = scmp.lt.s32.totalorder %s19, 2
      // Predicated region
      $region49: #{forward.1} parent=5 // pred_check
        %p303 = pneg %p302
      $region50: #{forward.1} parent=5 // pred_check_branch
        %305 = sbr.rel (%p303) target = $region52
      $region51: #{forward.1} parent=5 // pred_region
        // Predicated region
        $region53: #{forward.1} parent=51 // pred_check
          %p306 = pneg %p39
        $region54: #{forward.1} parent=51 // pred_check_branch
          %308 = sbr.rel (%p306) target = $region56
        $region55: #{forward.1} parent=51 // pred_region
          %p309 = scmp.lt.s32.totalorder %s19, 1
          %s310 = scalar_select %p309, %s19, 1
          %s311 = smul.addr %s310, 16
          %s312 = smul.addr %s311, 4
          %s313 = scalar_lea.vmem %s0, %s312
        $region56: #{forward.1} parent=51 // pred_fallthru
          _
      $region52: #{forward.1} parent=5 // pred_fallthru
        _
      %p314 = scmp.le.s32.totalorder 1, %s19
      %p315 = scmp.lt.s32.totalorder %s19, 3
      %p316 = pnand %p314, %p315
      %p317 = pneg %p316
      // Predicated region
      $region57: #{forward.1} parent=5 // pred_check
        _
      $region58: #{forward.1} parent=5 // pred_check_branch
        %319 = sbr.rel (%p316) target = $region60
      $region59: #{forward.1} parent=5 // pred_region
        %s320 = ssub.s32 %s19, 1
        %p321 = scmp.lt.s32.totalorder %s24, 1
        %s322 = scalar_select %p321, %s24, 1
        %s323 = smul.addr %s322, 16
        %s324 = smul.addr %s323, 4
        %s325 = scalar_lea.vmem %s0, %s324
        %p326 = pneg %p45
        %p327 = pneg %p42
        %p328 = pneg %p66
        %p329 = pneg %p63
        %p330 = pneg %p87
        %p331 = pneg %p84
        %p332 = pneg %p108
        %p333 = pneg %p105
        %p334 = pneg %p129
        %p335 = pneg %p126
        %p336 = pneg %p150
        %p337 = pneg %p147
        %p338 = pneg %p171
        %p339 = pneg %p168
        %p340 = pneg %p192
        %p341 = pneg %p189
        %p342 = pneg %p213
        %p343 = pneg %p210
        %p344 = pneg %p234
        %p345 = pneg %p231
        %p346 = pneg %p260
        %p347 = pneg %p257
        %s348 = sand.u32 %s247, 1
        %s349 = scalar_lea.sflag [#allocation5], %s348
        %s350 = sand.u32 %s247, 1
        %s351 = scalar_lea.vmem [#allocation4], %s350
        %p352 = scmp.lt.s32.totalorder %s24, 1
        %s353 = scalar_select %p352, %s24, 1
        %s354 = smul.addr %s353, 16
        %s355 = smul.addr %s354, 4
        %s356 = scalar_lea.vmem %s0, %s355
        %v357 = vld [vmem:[%s1] sm:$0xff]
        %v358 = vld [vmem:[%s1 + $0x8] sm:$0xff]
        %v359 = vld [vmem:[%s1 + $0x10] sm:$0xff]
        %v360 = vld [vmem:[%s1 + $0x18] sm:$0xff]
        %v361 = vld [vmem:[%s1 + $0x20] sm:$0xff]
        %v362 = vld [vmem:[%s1 + $0x28] sm:$0xff]
        %v363 = vld [vmem:[%s1 + $0x30] sm:$0xff]
        %v364 = vld [vmem:[%s1 + $0x38] sm:$0xff]
        %v365 = vld [vmem:[%s1 + $0x40] sm:$0xff]
        %v366 = vld [vmem:[%s1 + $0x48] sm:$0xff]
        %v367 = vld [vmem:[%s1 + $0x50] sm:$0xff]
        %v368 = vld [vmem:[%s1 + $0x58] sm:$0xff]
        %v369 = vld [vmem:[%s1 + $0x60] sm:$0xff]
        %v370 = vld [vmem:[%s1 + $0x68] sm:$0xff]
        %v371 = vld [vmem:[%s1 + $0x70] sm:$0xff]
        %v372 = vld [vmem:[%s1 + $0x78] sm:$0xff]
        %v373 = vld [vmem:[%s356] sm:$0xf]
        %v374 = vld [vmem:[%s356 + $0x4] sm:$0xf]
        %v375 = vld [vmem:[%s356 + $0x8] sm:$0xf]
        %v376 = vld [vmem:[%s356 + $0xc] sm:$0xf]
        %v377 = vld [vmem:[%s356 + $0x10] sm:$0xf]
        %v378 = vld [vmem:[%s356 + $0x14] sm:$0xf]
        %v379 = vld [vmem:[%s356 + $0x18] sm:$0xf]
        %v380 = vld [vmem:[%s356 + $0x1c] sm:$0xf]
        %v381 = vld [vmem:[%s356 + $0x20] sm:$0xf]
        %v382 = vld [vmem:[%s356 + $0x24] sm:$0xf]
        %v383 = vld [vmem:[%s356 + $0x28] sm:$0xf]
        %v384 = vld [vmem:[%s356 + $0x2c] sm:$0xf]
        %v385 = vld [vmem:[%s356 + $0x30] sm:$0xf]
        %v386 = vld [vmem:[%s356 + $0x34] sm:$0xf]
        %v387 = vld [vmem:[%s356 + $0x38] sm:$0xf]
        %v388 = vld [vmem:[%s356 + $0x3c] sm:$0xf]
        %v389 = vld [vmem:[%s2] sm:$0xf]
        %v390 = vld [vmem:[%s2 + $0x4] sm:$0xf]
        %v391 = vld [vmem:[%s2 + $0x8] sm:$0xf]
        %v392 = vld [vmem:[%s2 + $0xc] sm:$0xf]
        %v393 = vld [vmem:[%s2 + $0x10] sm:$0xf]
        %v394 = vld [vmem:[%s2 + $0x14] sm:$0xf]
        %v395 = vld [vmem:[%s2 + $0x18] sm:$0xf]
        %v396 = vld [vmem:[%s2 + $0x1c] sm:$0xf]
        %v397 = vld [vmem:[%s2 + $0x20] sm:$0xf]
        %v398 = vld [vmem:[%s2 + $0x24] sm:$0xf]
        %v399 = vld [vmem:[%s2 + $0x28] sm:$0xf]
        %v400 = vld [vmem:[%s2 + $0x2c] sm:$0xf]
        %v401 = vld [vmem:[%s2 + $0x30] sm:$0xf]
        %v402 = vld [vmem:[%s2 + $0x34] sm:$0xf]
        %v403 = vld [vmem:[%s2 + $0x38] sm:$0xf]
        %v404 = vld [vmem:[%s2 + $0x3c] sm:$0xf]
        %v405 = vld [vmem:[%s3] sm:$0x1]
        %v407 = vperm.slane %v405, 0
        %v425 = vunpack.c.l.b16 %v373
        %v426 = vunpack.c.l.b16 %v374
        %v427 = vunpack.c.l.b16 %v375
        %v428 = vunpack.c.l.b16 %v376
        %v429 = vunpack.c.l.b16 %v377
        %v430 = vunpack.c.l.b16 %v378
        %v431 = vunpack.c.l.b16 %v379
        %v432 = vunpack.c.l.b16 %v380
        %v433 = vunpack.c.l.b16 %v381
        %v434 = vunpack.c.l.b16 %v382
        %v435 = vunpack.c.l.b16 %v383
        %v436 = vunpack.c.l.b16 %v384
        %v437 = vunpack.c.l.b16 %v385
        %v438 = vunpack.c.l.b16 %v386
        %v439 = vunpack.c.l.b16 %v387
        %v440 = vunpack.c.l.b16 %v388
        %v441 = vpack.c.b16 %v426, %v425
        %v442 = vpack.c.b16 %v428, %v427
        %v443 = vpack.c.b16 %v430, %v429
        %v444 = vpack.c.b16 %v432, %v431
        %v445 = vpack.c.b16 %v434, %v433
        %v446 = vpack.c.b16 %v436, %v435
        %v447 = vpack.c.b16 %v438, %v437
        %v448 = vpack.c.b16 %v440, %v439
        %v473 = vunpack.c.l.b16 %v389
        %v474 = vunpack.c.l.b16 %v390
        %v475 = vunpack.c.l.b16 %v391
        %v476 = vunpack.c.l.b16 %v392
        %v477 = vunpack.c.l.b16 %v393
        %v478 = vunpack.c.l.b16 %v394
        %v479 = vunpack.c.l.b16 %v395
        %v480 = vunpack.c.l.b16 %v396
        %v481 = vunpack.c.l.b16 %v397
        %v482 = vunpack.c.l.b16 %v398
        %v483 = vunpack.c.l.b16 %v399
        %v484 = vunpack.c.l.b16 %v400
        %v485 = vunpack.c.l.b16 %v401
        %v486 = vunpack.c.l.b16 %v402
        %v487 = vunpack.c.l.b16 %v403
        %v488 = vunpack.c.l.b16 %v404
        %v489 = vpack.c.b16 %v474, %v473
        %v490 = vpack.c.b16 %v476, %v475
        %v491 = vpack.c.b16 %v478, %v477
        %v492 = vpack.c.b16 %v480, %v479
        %v493 = vpack.c.b16 %v482, %v481
        %v494 = vpack.c.b16 %v484, %v483
        %v495 = vpack.c.b16 %v486, %v485
        %v496 = vpack.c.b16 %v488, %v487
        %505 = vmatpush.bf16.msra.mxu0 %v496
        %506 = vmatpush.bf16.msra.mxu0 %v495
        %507 = vmatpush.bf16.msra.mxu0 %v494
        %508 = vmatpush.bf16.msra.mxu0 %v493
        %509 = vmatpush.bf16.msra.mxu0 %v492
        %510 = vmatpush.bf16.msra.mxu0 %v491
        %511 = vmatpush.bf16.msra.mxu0 %v490
        %512 = vmatpush.bf16.msra.mxu0 %v489
        %513 = vmatmul.bf16.gmra.mxu0 %v441
        %v514 = vpop.f32.mrf.mxu0
        %v515 = vadd.f32 %v407, %v514
        %v516 = vpop.f32.mrf.mxu0
        %v517 = vadd.f32 %v407, %v516
        %518 = vmatmul.bf16.gmra.mxu0 %v442
        %v519 = vpop.f32.mrf.mxu0
        %v520 = vadd.f32 %v407, %v519
        %v521 = vpop.f32.mrf.mxu0
        %v522 = vadd.f32 %v407, %v521
        %523 = vmatmul.bf16.gmra.mxu0 %v443
        %v524 = vpop.f32.mrf.mxu0
        %v525 = vadd.f32 %v407, %v524
        %v526 = vpop.f32.mrf.mxu0
        %v527 = vadd.f32 %v407, %v526
        %528 = vmatmul.bf16.gmra.mxu0 %v444
        %v529 = vpop.f32.mrf.mxu0
        %v530 = vadd.f32 %v407, %v529
        %v531 = vpop.f32.mrf.mxu0
        %v532 = vadd.f32 %v407, %v531
        %533 = vmatmul.bf16.gmra.mxu0 %v445
        %v534 = vpop.f32.mrf.mxu0
        %v535 = vadd.f32 %v407, %v534
        %v536 = vpop.f32.mrf.mxu0
        %v537 = vadd.f32 %v407, %v536
        %538 = vmatmul.bf16.gmra.mxu0 %v446
        %v539 = vpop.f32.mrf.mxu0
        %v540 = vadd.f32 %v407, %v539
        %v541 = vpop.f32.mrf.mxu0
        %v542 = vadd.f32 %v407, %v541
        %543 = vmatmul.bf16.gmra.mxu0 %v447
        %v544 = vpop.f32.mrf.mxu0
        %v545 = vadd.f32 %v407, %v544
        %v546 = vpop.f32.mrf.mxu0
        %v547 = vadd.f32 %v407, %v546
        %548 = vmatmul.bf16.gmra.mxu0 %v448
        %v549 = vpop.f32.mrf.mxu0
        %v550 = vadd.f32 %v407, %v549
        %v551 = vpop.f32.mrf.mxu0
        %v552 = vadd.f32 %v407, %v551
        %553 = vdwg.mxu0
        %vm554 = vcmp.ge.f32.partialorder %v515, 0.0
        %vm555 = vcmp.ge.f32.partialorder %v517, 0.0
        %vm556 = vcmp.ge.f32.partialorder %v520, 0.0
        %vm557 = vcmp.ge.f32.partialorder %v522, 0.0
        %vm558 = vcmp.ge.f32.partialorder %v525, 0.0
        %vm559 = vcmp.ge.f32.partialorder %v527, 0.0
        %vm560 = vcmp.ge.f32.partialorder %v530, 0.0
        %vm561 = vcmp.ge.f32.partialorder %v532, 0.0
        %vm562 = vcmp.ge.f32.partialorder %v535, 0.0
        %vm563 = vcmp.ge.f32.partialorder %v537, 0.0
        %vm564 = vcmp.ge.f32.partialorder %v540, 0.0
        %vm565 = vcmp.ge.f32.partialorder %v542, 0.0
        %vm566 = vcmp.ge.f32.partialorder %v545, 0.0
        %vm567 = vcmp.ge.f32.partialorder %v547, 0.0
        %vm568 = vcmp.ge.f32.partialorder %v550, 0.0
        %vm569 = vcmp.ge.f32.partialorder %v552, 0.0
        %v570 = vmul.f32 %v515, 0.01
        %v571 = vmul.f32 %v517, 0.01
        %v572 = vmul.f32 %v520, 0.01
        %v573 = vmul.f32 %v522, 0.01
        %v574 = vmul.f32 %v525, 0.01
        %v575 = vmul.f32 %v527, 0.01
        %v576 = vmul.f32 %v530, 0.01
        %v577 = vmul.f32 %v532, 0.01
        %v578 = vmul.f32 %v535, 0.01
        %v579 = vmul.f32 %v537, 0.01
        %v580 = vmul.f32 %v540, 0.01
        %v581 = vmul.f32 %v542, 0.01
        %v582 = vmul.f32 %v545, 0.01
        %v583 = vmul.f32 %v547, 0.01
        %v584 = vmul.f32 %v550, 0.01
        %v585 = vmul.f32 %v552, 0.01
        %v586 = vsel %vm554, %v515, %v570
        %v587 = vsel %vm555, %v517, %v571
        %v588 = vsel %vm556, %v520, %v572
        %v589 = vsel %vm557, %v522, %v573
        %v590 = vsel %vm558, %v525, %v574
        %v591 = vsel %vm559, %v527, %v575
        %v592 = vsel %vm560, %v530, %v576
        %v593 = vsel %vm561, %v532, %v577
        %v594 = vsel %vm562, %v535, %v578
        %v595 = vsel %vm563, %v537, %v579
        %v596 = vsel %vm564, %v540, %v580
        %v597 = vsel %vm565, %v542, %v581
        %v598 = vsel %vm566, %v545, %v582
        %v599 = vsel %vm567, %v547, %v583
        %v600 = vsel %vm568, %v550, %v584
        %v601 = vsel %vm569, %v552, %v585
        %603 = vset.pattern.permute.xlu0 0
        %604 = vperm.xlu0 %603, %v357
        %v605 = vpop.permute.xlu0 %604
        %608 = vset.pattern.permute.xlu0 0
        %609 = vperm.xlu0 %608, %v358
        %v610 = vpop.permute.xlu0 %609
        %613 = vset.pattern.permute.xlu0 0
        %614 = vperm.xlu0 %613, %v359
        %v615 = vpop.permute.xlu0 %614
        %618 = vset.pattern.permute.xlu0 0
        %619 = vperm.xlu0 %618, %v360
        %v620 = vpop.permute.xlu0 %619
        %623 = vset.pattern.permute.xlu0 0
        %624 = vperm.xlu0 %623, %v361
        %v625 = vpop.permute.xlu0 %624
        %628 = vset.pattern.permute.xlu0 0
        %629 = vperm.xlu0 %628, %v362
        %v630 = vpop.permute.xlu0 %629
        %633 = vset.pattern.permute.xlu0 0
        %634 = vperm.xlu0 %633, %v363
        %v635 = vpop.permute.xlu0 %634
        %638 = vset.pattern.permute.xlu0 0
        %639 = vperm.xlu0 %638, %v364
        %v640 = vpop.permute.xlu0 %639
        %643 = vset.pattern.permute.xlu0 0
        %644 = vperm.xlu0 %643, %v365
        %v645 = vpop.permute.xlu0 %644
        %648 = vset.pattern.permute.xlu0 0
        %649 = vperm.xlu0 %648, %v366
        %v650 = vpop.permute.xlu0 %649
        %653 = vset.pattern.permute.xlu0 0
        %654 = vperm.xlu0 %653, %v367
        %v655 = vpop.permute.xlu0 %654
        %658 = vset.pattern.permute.xlu0 0
        %659 = vperm.xlu0 %658, %v368
        %v660 = vpop.permute.xlu0 %659
        %663 = vset.pattern.permute.xlu0 0
        %664 = vperm.xlu0 %663, %v369
        %v665 = vpop.permute.xlu0 %664
        %668 = vset.pattern.permute.xlu0 0
        %669 = vperm.xlu0 %668, %v370
        %v670 = vpop.permute.xlu0 %669
        %673 = vset.pattern.permute.xlu0 0
        %674 = vperm.xlu0 %673, %v371
        %v675 = vpop.permute.xlu0 %674
        %678 = vset.pattern.permute.xlu0 0
        %679 = vperm.xlu0 %678, %v372
        %v680 = vpop.permute.xlu0 %679
        %v682 = vmul.f32 %v586, %v605
        %v683 = vmul.f32 %v587, %v610
        %v684 = vmul.f32 %v588, %v615
        %v685 = vmul.f32 %v589, %v620
        %v686 = vmul.f32 %v590, %v625
        %v687 = vmul.f32 %v591, %v630
        %v688 = vmul.f32 %v592, %v635
        %v689 = vmul.f32 %v593, %v640
        %v690 = vmul.f32 %v594, %v645
        %v691 = vmul.f32 %v595, %v650
        %v692 = vmul.f32 %v596, %v655
        %v693 = vmul.f32 %v597, %v660
        %v694 = vmul.f32 %v598, %v665
        %v695 = vmul.f32 %v599, %v670
        %v696 = vmul.f32 %v600, %v675
        %v697 = vmul.f32 %v601, %v680
        %698 = vst [vmem:[#allocation2] sm:$0xff] 0.0
        %699 = vst [vmem:[#allocation2 + $0x8] sm:$0xff] 0.0
        %700 = vst [vmem:[#allocation2 + $0x10] sm:$0xff] 0.0
        %701 = vst [vmem:[#allocation2 + $0x18] sm:$0xff] 0.0
        %702 = vst [vmem:[#allocation2 + $0x20] sm:$0xff] 0.0
        %703 = vst [vmem:[#allocation2 + $0x28] sm:$0xff] 0.0
        %704 = vst [vmem:[#allocation2 + $0x30] sm:$0xff] 0.0
        %705 = vst [vmem:[#allocation2 + $0x38] sm:$0xff] 0.0
        %706 = vst [vmem:[#allocation2 + $0x40] sm:$0xff] 0.0
        %707 = vst [vmem:[#allocation2 + $0x48] sm:$0xff] 0.0
        %708 = vst [vmem:[#allocation2 + $0x50] sm:$0xff] 0.0
        %709 = vst [vmem:[#allocation2 + $0x58] sm:$0xff] 0.0
        %710 = vst [vmem:[#allocation2 + $0x60] sm:$0xff] 0.0
        %711 = vst [vmem:[#allocation2 + $0x68] sm:$0xff] 0.0
        %712 = vst [vmem:[#allocation2 + $0x70] sm:$0xff] 0.0
        %713 = vst [vmem:[#allocation2 + $0x78] sm:$0xff] 0.0
        %714 = vst [vmem:[#allocation2 + $0x80] sm:$0xff] 0.0
        %715 = vst [vmem:[#allocation2 + $0x88] sm:$0xff] 0.0
        %716 = vst [vmem:[#allocation2 + $0x90] sm:$0xff] 0.0
        %717 = vst [vmem:[#allocation2 + $0x98] sm:$0xff] 0.0
        %718 = vst [vmem:[#allocation2 + $0x10] sm:$0xff] %v682
        %719 = vst [vmem:[#allocation2 + $0x18] sm:$0xff] %v683
        %720 = vst [vmem:[#allocation2 + $0x20] sm:$0xff] %v684
        %721 = vst [vmem:[#allocation2 + $0x28] sm:$0xff] %v685
        %722 = vst [vmem:[#allocation2 + $0x30] sm:$0xff] %v686
        %723 = vst [vmem:[#allocation2 + $0x38] sm:$0xff] %v687
        %724 = vst [vmem:[#allocation2 + $0x40] sm:$0xff] %v688
        %725 = vst [vmem:[#allocation2 + $0x48] sm:$0xff] %v689
        %726 = vst [vmem:[#allocation2 + $0x50] sm:$0xff] %v690
        %727 = vst [vmem:[#allocation2 + $0x58] sm:$0xff] %v691
        %728 = vst [vmem:[#allocation2 + $0x60] sm:$0xff] %v692
        %729 = vst [vmem:[#allocation2 + $0x68] sm:$0xff] %v693
        %730 = vst [vmem:[#allocation2 + $0x70] sm:$0xff] %v694
        %731 = vst [vmem:[#allocation2 + $0x78] sm:$0xff] %v695
        %732 = vst [vmem:[#allocation2 + $0x80] sm:$0xff] %v696
        %733 = vst [vmem:[#allocation2 + $0x88] sm:$0xff] %v697
        %v734 = vld [vmem:[#allocation2 + $0x4] sm:$0xff]
        %v735 = vld [vmem:[#allocation2 + $0xc] sm:$0xff]
        %v736 = vld [vmem:[#allocation2 + $0x14] sm:$0xff]
        %v737 = vld [vmem:[#allocation2 + $0x1c] sm:$0xff]
        %v738 = vld [vmem:[#allocation2 + $0x24] sm:$0xff]
        %v739 = vld [vmem:[#allocation2 + $0x2c] sm:$0xff]
        %v740 = vld [vmem:[#allocation2 + $0x34] sm:$0xff]
        %v741 = vld [vmem:[#allocation2 + $0x3c] sm:$0xff]
        %v742 = vld [vmem:[#allocation2 + $0x44] sm:$0xff]
        %v743 = vld [vmem:[#allocation2 + $0x4c] sm:$0xff]
        %v744 = vld [vmem:[#allocation2 + $0x54] sm:$0xff]
        %v745 = vld [vmem:[#allocation2 + $0x5c] sm:$0xff]
        %v746 = vld [vmem:[#allocation2 + $0x64] sm:$0xff]
        %v747 = vld [vmem:[#allocation2 + $0x6c] sm:$0xff]
        %v748 = vld [vmem:[#allocation2 + $0x74] sm:$0xff]
        %v749 = vld [vmem:[#allocation2 + $0x7c] sm:$0xff]
        %v750 = vpack.c.bf16 %v735, %v734
        %v751 = vpack.c.bf16 %v737, %v736
        %v752 = vpack.c.bf16 %v739, %v738
        %v753 = vpack.c.bf16 %v741, %v740
        %v754 = vpack.c.bf16 %v743, %v742
        %v755 = vpack.c.bf16 %v745, %v744
        %v756 = vpack.c.bf16 %v747, %v746
        %v757 = vpack.c.bf16 %v749, %v748
        %v758 = vld [vmem:[%s4] sm:$0xf]
        %v759 = vld [vmem:[%s4 + $0x4] sm:$0xf]
        %v760 = vld [vmem:[%s4 + $0x8] sm:$0xf]
        %v761 = vld [vmem:[%s4 + $0xc] sm:$0xf]
        %v762 = vld [vmem:[%s4 + $0x10] sm:$0xf]
        %v763 = vld [vmem:[%s4 + $0x14] sm:$0xf]
        %v764 = vld [vmem:[%s4 + $0x18] sm:$0xf]
        %v765 = vld [vmem:[%s4 + $0x1c] sm:$0xf]
        %v766 = vld [vmem:[%s4 + $0x20] sm:$0xf]
        %v767 = vld [vmem:[%s4 + $0x24] sm:$0xf]
        %v768 = vld [vmem:[%s4 + $0x28] sm:$0xf]
        %v769 = vld [vmem:[%s4 + $0x2c] sm:$0xf]
        %v770 = vld [vmem:[%s4 + $0x30] sm:$0xf]
        %v771 = vld [vmem:[%s4 + $0x34] sm:$0xf]
        %v772 = vld [vmem:[%s4 + $0x38] sm:$0xf]
        %v773 = vld [vmem:[%s4 + $0x3c] sm:$0xf]
        %v774 = vld [vmem:[#allocation2 + $0x5] sm:$0xff]
        %v775 = vld [vmem:[#allocation2 + $0xd] sm:$0xff]
        %v776 = vld [vmem:[#allocation2 + $0x15] sm:$0xff]
        %v777 = vld [vmem:[#allocation2 + $0x1d] sm:$0xff]
        %v778 = vld [vmem:[#allocation2 + $0x25] sm:$0xff]
        %v779 = vld [vmem:[#allocation2 + $0x2d] sm:$0xff]
        %v780 = vld [vmem:[#allocation2 + $0x35] sm:$0xff]
        %v781 = vld [vmem:[#allocation2 + $0x3d] sm:$0xff]
        %v782 = vld [vmem:[#allocation2 + $0x45] sm:$0xff]
        %v783 = vld [vmem:[#allocation2 + $0x4d] sm:$0xff]
        %v784 = vld [vmem:[#allocation2 + $0x55] sm:$0xff]
        %v785 = vld [vmem:[#allocation2 + $0x5d] sm:$0xff]
        %v786 = vld [vmem:[#allocation2 + $0x65] sm:$0xff]
        %v787 = vld [vmem:[#allocation2 + $0x6d] sm:$0xff]
        %v788 = vld [vmem:[#allocation2 + $0x75] sm:$0xff]
        %v789 = vld [vmem:[#allocation2 + $0x7d] sm:$0xff]
        %v790 = vpack.c.bf16 %v775, %v774
        %v791 = vpack.c.bf16 %v777, %v776
        %v792 = vpack.c.bf16 %v779, %v778
        %v793 = vpack.c.bf16 %v781, %v780
        %v794 = vpack.c.bf16 %v783, %v782
        %v795 = vpack.c.bf16 %v785, %v784
        %v796 = vpack.c.bf16 %v787, %v786
        %v797 = vpack.c.bf16 %v789, %v788
        %s798 = scalar_lea.vmem %s4, 64
        %v799 = vld [vmem:[%s798] sm:$0xf]
        %v800 = vld [vmem:[%s798 + $0x4] sm:$0xf]
        %v801 = vld [vmem:[%s798 + $0x8] sm:$0xf]
        %v802 = vld [vmem:[%s798 + $0xc] sm:$0xf]
        %v803 = vld [vmem:[%s798 + $0x10] sm:$0xf]
        %v804 = vld [vmem:[%s798 + $0x14] sm:$0xf]
        %v805 = vld [vmem:[%s798 + $0x18] sm:$0xf]
        %v806 = vld [vmem:[%s798 + $0x1c] sm:$0xf]
        %v807 = vld [vmem:[%s798 + $0x20] sm:$0xf]
        %v808 = vld [vmem:[%s798 + $0x24] sm:$0xf]
        %v809 = vld [vmem:[%s798 + $0x28] sm:$0xf]
        %v810 = vld [vmem:[%s798 + $0x2c] sm:$0xf]
        %v811 = vld [vmem:[%s798 + $0x30] sm:$0xf]
        %v812 = vld [vmem:[%s798 + $0x34] sm:$0xf]
        %v813 = vld [vmem:[%s798 + $0x38] sm:$0xf]
        %v814 = vld [vmem:[%s798 + $0x3c] sm:$0xf]
        %v831 = vunpack.c.l.b16 %v799
        %v832 = vunpack.c.l.b16 %v800
        %v833 = vunpack.c.l.b16 %v801
        %v834 = vunpack.c.l.b16 %v802
        %v835 = vunpack.c.l.b16 %v803
        %v836 = vunpack.c.l.b16 %v804
        %v837 = vunpack.c.l.b16 %v805
        %v838 = vunpack.c.l.b16 %v806
        %v839 = vunpack.c.l.b16 %v807
        %v840 = vunpack.c.l.b16 %v808
        %v841 = vunpack.c.l.b16 %v809
        %v842 = vunpack.c.l.b16 %v810
        %v843 = vunpack.c.l.b16 %v811
        %v844 = vunpack.c.l.b16 %v812
        %v845 = vunpack.c.l.b16 %v813
        %v846 = vunpack.c.l.b16 %v814
        %v847 = vpack.c.b16 %v832, %v831
        %v848 = vpack.c.b16 %v834, %v833
        %v849 = vpack.c.b16 %v836, %v835
        %v850 = vpack.c.b16 %v838, %v837
        %v851 = vpack.c.b16 %v840, %v839
        %v852 = vpack.c.b16 %v842, %v841
        %v853 = vpack.c.b16 %v844, %v843
        %v854 = vpack.c.b16 %v846, %v845
        %863 = vmatpush.bf16.msra.mxu0 %v854
        %864 = vmatpush.bf16.msra.mxu0 %v853
        %865 = vmatpush.bf16.msra.mxu0 %v852
        %866 = vmatpush.bf16.msra.mxu0 %v851
        %867 = vmatpush.bf16.msra.mxu0 %v850
        %868 = vmatpush.bf16.msra.mxu0 %v849
        %869 = vmatpush.bf16.msra.mxu0 %v848
        %870 = vmatpush.bf16.msra.mxu0 %v847
        %871 = vmatmul.bf16.gmra.mxu0 %v790
        %v872 = vpop.f32.mrf.mxu0
        %v873 = vadd.f32 0.0, %v872
        %v874 = vpop.f32.mrf.mxu0
        %v875 = vadd.f32 0.0, %v874
        %876 = vmatmul.bf16.gmra.mxu0 %v791
        %v877 = vpop.f32.mrf.mxu0
        %v878 = vadd.f32 0.0, %v877
        %v879 = vpop.f32.mrf.mxu0
        %v880 = vadd.f32 0.0, %v879
        %881 = vmatmul.bf16.gmra.mxu0 %v792
        %v882 = vpop.f32.mrf.mxu0
        %v883 = vadd.f32 0.0, %v882
        %v884 = vpop.f32.mrf.mxu0
        %v885 = vadd.f32 0.0, %v884
        %886 = vmatmul.bf16.gmra.mxu0 %v793
        %v887 = vpop.f32.mrf.mxu0
        %v888 = vadd.f32 0.0, %v887
        %v889 = vpop.f32.mrf.mxu0
        %v890 = vadd.f32 0.0, %v889
        %891 = vmatmul.bf16.gmra.mxu0 %v794
        %v892 = vpop.f32.mrf.mxu0
        %v893 = vadd.f32 0.0, %v892
        %v894 = vpop.f32.mrf.mxu0
        %v895 = vadd.f32 0.0, %v894
        %896 = vmatmul.bf16.gmra.mxu0 %v795
        %v897 = vpop.f32.mrf.mxu0
        %v898 = vadd.f32 0.0, %v897
        %v899 = vpop.f32.mrf.mxu0
        %v900 = vadd.f32 0.0, %v899
        %901 = vmatmul.bf16.gmra.mxu0 %v796
        %v902 = vpop.f32.mrf.mxu0
        %v903 = vadd.f32 0.0, %v902
        %v904 = vpop.f32.mrf.mxu0
        %v905 = vadd.f32 0.0, %v904
        %906 = vmatmul.bf16.gmra.mxu0 %v797
        %v907 = vpop.f32.mrf.mxu0
        %v908 = vadd.f32 0.0, %v907
        %v909 = vpop.f32.mrf.mxu0
        %v910 = vadd.f32 0.0, %v909
        %911 = vdwg.mxu0
        %v928 = vunpack.c.l.b16 %v758
        %v929 = vunpack.c.l.b16 %v759
        %v930 = vunpack.c.l.b16 %v760
        %v931 = vunpack.c.l.b16 %v761
        %v932 = vunpack.c.l.b16 %v762
        %v933 = vunpack.c.l.b16 %v763
        %v934 = vunpack.c.l.b16 %v764
        %v935 = vunpack.c.l.b16 %v765
        %v936 = vunpack.c.l.b16 %v766
        %v937 = vunpack.c.l.b16 %v767
        %v938 = vunpack.c.l.b16 %v768
        %v939 = vunpack.c.l.b16 %v769
        %v940 = vunpack.c.l.b16 %v770
        %v941 = vunpack.c.l.b16 %v771
        %v942 = vunpack.c.l.b16 %v772
        %v943 = vunpack.c.l.b16 %v773
        %v944 = vpack.c.b16 %v929, %v928
        %v945 = vpack.c.b16 %v931, %v930
        %v946 = vpack.c.b16 %v933, %v932
        %v947 = vpack.c.b16 %v935, %v934
        %v948 = vpack.c.b16 %v937, %v936
        %v949 = vpack.c.b16 %v939, %v938
        %v950 = vpack.c.b16 %v941, %v940
        %v951 = vpack.c.b16 %v943, %v942
        %960 = vmatpush.bf16.msra.mxu0 %v951
        %961 = vmatpush.bf16.msra.mxu0 %v950
        %962 = vmatpush.bf16.msra.mxu0 %v949
        %963 = vmatpush.bf16.msra.mxu0 %v948
        %964 = vmatpush.bf16.msra.mxu0 %v947
        %965 = vmatpush.bf16.msra.mxu0 %v946
        %966 = vmatpush.bf16.msra.mxu0 %v945
        %967 = vmatpush.bf16.msra.mxu0 %v944
        %968 = vmatmul.bf16.gmra.mxu0 %v750
        %v969 = vpop.f32.mrf.mxu0
        %v970 = vadd.f32 %v873, %v969
        %v971 = vpop.f32.mrf.mxu0
        %v972 = vadd.f32 %v875, %v971
        %973 = vmatmul.bf16.gmra.mxu0 %v751
        %v974 = vpop.f32.mrf.mxu0
        %v975 = vadd.f32 %v878, %v974
        %v976 = vpop.f32.mrf.mxu0
        %v977 = vadd.f32 %v880, %v976
        %978 = vmatmul.bf16.gmra.mxu0 %v752
        %v979 = vpop.f32.mrf.mxu0
        %v980 = vadd.f32 %v883, %v979
        %v981 = vpop.f32.mrf.mxu0
        %v982 = vadd.f32 %v885, %v981
        %983 = vmatmul.bf16.gmra.mxu0 %v753
        %v984 = vpop.f32.mrf.mxu0
        %v985 = vadd.f32 %v888, %v984
        %v986 = vpop.f32.mrf.mxu0
        %v987 = vadd.f32 %v890, %v986
        %988 = vmatmul.bf16.gmra.mxu0 %v754
        %v989 = vpop.f32.mrf.mxu0
        %v990 = vadd.f32 %v893, %v989
        %v991 = vpop.f32.mrf.mxu0
        %v992 = vadd.f32 %v895, %v991
        %993 = vmatmul.bf16.gmra.mxu0 %v755
        %v994 = vpop.f32.mrf.mxu0
        %v995 = vadd.f32 %v898, %v994
        %v996 = vpop.f32.mrf.mxu0
        %v997 = vadd.f32 %v900, %v996
        %998 = vmatmul.bf16.gmra.mxu0 %v756
        %v999 = vpop.f32.mrf.mxu0
        %v1000 = vadd.f32 %v903, %v999
        %v1001 = vpop.f32.mrf.mxu0
        %v1002 = vadd.f32 %v905, %v1001
        %1003 = vmatmul.bf16.gmra.mxu0 %v757
        %v1004 = vpop.f32.mrf.mxu0
        %v1005 = vadd.f32 %v908, %v1004
        %v1006 = vpop.f32.mrf.mxu0
        %v1007 = vadd.f32 %v910, %v1006
        %1008 = vdwg.mxu0
        %v1009 = vld [vmem:[#allocation2 + $0x6] sm:$0xff]
        %v1010 = vld [vmem:[#allocation2 + $0xe] sm:$0xff]
        %v1011 = vld [vmem:[#allocation2 + $0x16] sm:$0xff]
        %v1012 = vld [vmem:[#allocation2 + $0x1e] sm:$0xff]
        %v1013 = vld [vmem:[#allocation2 + $0x26] sm:$0xff]
        %v1014 = vld [vmem:[#allocation2 + $0x2e] sm:$0xff]
        %v1015 = vld [vmem:[#allocation2 + $0x36] sm:$0xff]
        %v1016 = vld [vmem:[#allocation2 + $0x3e] sm:$0xff]
        %v1017 = vld [vmem:[#allocation2 + $0x46] sm:$0xff]
        %v1018 = vld [vmem:[#allocation2 + $0x4e] sm:$0xff]
        %v1019 = vld [vmem:[#allocation2 + $0x56] sm:$0xff]
        %v1020 = vld [vmem:[#allocation2 + $0x5e] sm:$0xff]
        %v1021 = vld [vmem:[#allocation2 + $0x66] sm:$0xff]
        %v1022 = vld [vmem:[#allocation2 + $0x6e] sm:$0xff]
        %v1023 = vld [vmem:[#allocation2 + $0x76] sm:$0xff]
        %v1024 = vld [vmem:[#allocation2 + $0x7e] sm:$0xff]
        %v1025 = vpack.c.bf16 %v1010, %v1009
        %v1026 = vpack.c.bf16 %v1012, %v1011
        %v1027 = vpack.c.bf16 %v1014, %v1013
        %v1028 = vpack.c.bf16 %v1016, %v1015
        %v1029 = vpack.c.bf16 %v1018, %v1017
        %v1030 = vpack.c.bf16 %v1020, %v1019
        %v1031 = vpack.c.bf16 %v1022, %v1021
        %v1032 = vpack.c.bf16 %v1024, %v1023
        %s1033 = scalar_lea.vmem %s4, 128
        %v1034 = vld [vmem:[%s1033] sm:$0xf]
        %v1035 = vld [vmem:[%s1033 + $0x4] sm:$0xf]
        %v1036 = vld [vmem:[%s1033 + $0x8] sm:$0xf]
        %v1037 = vld [vmem:[%s1033 + $0xc] sm:$0xf]
        %v1038 = vld [vmem:[%s1033 + $0x10] sm:$0xf]
        %v1039 = vld [vmem:[%s1033 + $0x14] sm:$0xf]
        %v1040 = vld [vmem:[%s1033 + $0x18] sm:$0xf]
        %v1041 = vld [vmem:[%s1033 + $0x1c] sm:$0xf]
        %v1042 = vld [vmem:[%s1033 + $0x20] sm:$0xf]
        %v1043 = vld [vmem:[%s1033 + $0x24] sm:$0xf]
        %v1044 = vld [vmem:[%s1033 + $0x28] sm:$0xf]
        %v1045 = vld [vmem:[%s1033 + $0x2c] sm:$0xf]
        %v1046 = vld [vmem:[%s1033 + $0x30] sm:$0xf]
        %v1047 = vld [vmem:[%s1033 + $0x34] sm:$0xf]
        %v1048 = vld [vmem:[%s1033 + $0x38] sm:$0xf]
        %v1049 = vld [vmem:[%s1033 + $0x3c] sm:$0xf]
        %v1066 = vunpack.c.l.b16 %v1034
        %v1067 = vunpack.c.l.b16 %v1035
        %v1068 = vunpack.c.l.b16 %v1036
        %v1069 = vunpack.c.l.b16 %v1037
        %v1070 = vunpack.c.l.b16 %v1038
        %v1071 = vunpack.c.l.b16 %v1039
        %v1072 = vunpack.c.l.b16 %v1040
        %v1073 = vunpack.c.l.b16 %v1041
        %v1074 = vunpack.c.l.b16 %v1042
        %v1075 = vunpack.c.l.b16 %v1043
        %v1076 = vunpack.c.l.b16 %v1044
        %v1077 = vunpack.c.l.b16 %v1045
        %v1078 = vunpack.c.l.b16 %v1046
        %v1079 = vunpack.c.l.b16 %v1047
        %v1080 = vunpack.c.l.b16 %v1048
        %v1081 = vunpack.c.l.b16 %v1049
        %v1082 = vpack.c.b16 %v1067, %v1066
        %v1083 = vpack.c.b16 %v1069, %v1068
        %v1084 = vpack.c.b16 %v1071, %v1070
        %v1085 = vpack.c.b16 %v1073, %v1072
        %v1086 = vpack.c.b16 %v1075, %v1074
        %v1087 = vpack.c.b16 %v1077, %v1076
        %v1088 = vpack.c.b16 %v1079, %v1078
        %v1089 = vpack.c.b16 %v1081, %v1080
        %1098 = vmatpush.bf16.msra.mxu0 %v1089
        %1099 = vmatpush.bf16.msra.mxu0 %v1088
        %1100 = vmatpush.bf16.msra.mxu0 %v1087
        %1101 = vmatpush.bf16.msra.mxu0 %v1086
        %1102 = vmatpush.bf16.msra.mxu0 %v1085
        %1103 = vmatpush.bf16.msra.mxu0 %v1084
        %1104 = vmatpush.bf16.msra.mxu0 %v1083
        %1105 = vmatpush.bf16.msra.mxu0 %v1082
        %1106 = vmatmul.bf16.gmra.mxu0 %v1025
        %v1107 = vpop.f32.mrf.mxu0
        %v1108 = vadd.f32 0.0, %v1107
        %v1109 = vpop.f32.mrf.mxu0
        %v1110 = vadd.f32 0.0, %v1109
        %1111 = vmatmul.bf16.gmra.mxu0 %v1026
        %v1112 = vpop.f32.mrf.mxu0
        %v1113 = vadd.f32 0.0, %v1112
        %v1114 = vpop.f32.mrf.mxu0
        %v1115 = vadd.f32 0.0, %v1114
        %1116 = vmatmul.bf16.gmra.mxu0 %v1027
        %v1117 = vpop.f32.mrf.mxu0
        %v1118 = vadd.f32 0.0, %v1117
        %v1119 = vpop.f32.mrf.mxu0
        %v1120 = vadd.f32 0.0, %v1119
        %1121 = vmatmul.bf16.gmra.mxu0 %v1028
        %v1122 = vpop.f32.mrf.mxu0
        %v1123 = vadd.f32 0.0, %v1122
        %v1124 = vpop.f32.mrf.mxu0
        %v1125 = vadd.f32 0.0, %v1124
        %1126 = vmatmul.bf16.gmra.mxu0 %v1029
        %v1127 = vpop.f32.mrf.mxu0
        %v1128 = vadd.f32 0.0, %v1127
        %v1129 = vpop.f32.mrf.mxu0
        %v1130 = vadd.f32 0.0, %v1129
        %1131 = vmatmul.bf16.gmra.mxu0 %v1030
        %v1132 = vpop.f32.mrf.mxu0
        %v1133 = vadd.f32 0.0, %v1132
        %v1134 = vpop.f32.mrf.mxu0
        %v1135 = vadd.f32 0.0, %v1134
        %1136 = vmatmul.bf16.gmra.mxu0 %v1031
        %v1137 = vpop.f32.mrf.mxu0
        %v1138 = vadd.f32 0.0, %v1137
        %v1139 = vpop.f32.mrf.mxu0
        %v1140 = vadd.f32 0.0, %v1139
        %1141 = vmatmul.bf16.gmra.mxu0 %v1032
        %v1142 = vpop.f32.mrf.mxu0
        %v1143 = vadd.f32 0.0, %v1142
        %v1144 = vpop.f32.mrf.mxu0
        %v1145 = vadd.f32 0.0, %v1144
        %1146 = vdwg.mxu0
        %v1147 = vadd.f32 %v970, %v1108
        %v1148 = vadd.f32 %v972, %v1110
        %v1149 = vadd.f32 %v975, %v1113
        %v1150 = vadd.f32 %v977, %v1115
        %v1151 = vadd.f32 %v980, %v1118
        %v1152 = vadd.f32 %v982, %v1120
        %v1153 = vadd.f32 %v985, %v1123
        %v1154 = vadd.f32 %v987, %v1125
        %v1155 = vadd.f32 %v990, %v1128
        %v1156 = vadd.f32 %v992, %v1130
        %v1157 = vadd.f32 %v995, %v1133
        %v1158 = vadd.f32 %v997, %v1135
        %v1159 = vadd.f32 %v1000, %v1138
        %v1160 = vadd.f32 %v1002, %v1140
        %v1161 = vadd.f32 %v1005, %v1143
        %v1162 = vadd.f32 %v1007, %v1145
        %v1163 = vld [vmem:[#allocation2 + $0xf] sm:$0xff]
        %v1164 = vld [vmem:[#allocation2 + $0x17] sm:$0xff]
        %v1165 = vld [vmem:[#allocation2 + $0x1f] sm:$0xff]
        %v1166 = vld [vmem:[#allocation2 + $0x27] sm:$0xff]
        %v1167 = vld [vmem:[#allocation2 + $0x2f] sm:$0xff]
        %v1168 = vld [vmem:[#allocation2 + $0x37] sm:$0xff]
        %v1169 = vld [vmem:[#allocation2 + $0x3f] sm:$0xff]
        %v1170 = vld [vmem:[#allocation2 + $0x47] sm:$0xff]
        %v1171 = vld [vmem:[#allocation2 + $0x4f] sm:$0xff]
        %v1172 = vld [vmem:[#allocation2 + $0x57] sm:$0xff]
        %v1173 = vld [vmem:[#allocation2 + $0x5f] sm:$0xff]
        %v1174 = vld [vmem:[#allocation2 + $0x67] sm:$0xff]
        %v1175 = vld [vmem:[#allocation2 + $0x6f] sm:$0xff]
        %v1176 = vld [vmem:[#allocation2 + $0x77] sm:$0xff]
        %v1177 = vld [vmem:[#allocation2 + $0x7f] sm:$0xff]
        %v1178 = vld [vmem:[#allocation2 + $0x87] sm:$0xff]
        %v1179 = vpack.c.bf16 %v1164, %v1163
        %v1180 = vpack.c.bf16 %v1166, %v1165
        %v1181 = vpack.c.bf16 %v1168, %v1167
        %v1182 = vpack.c.bf16 %v1170, %v1169
        %v1183 = vpack.c.bf16 %v1172, %v1171
        %v1184 = vpack.c.bf16 %v1174, %v1173
        %v1185 = vpack.c.bf16 %v1176, %v1175
        %v1186 = vpack.c.bf16 %v1178, %v1177
        %s1187 = scalar_lea.vmem %s4, 192
        %v1188 = vld [vmem:[%s1187] sm:$0xf]
        %v1189 = vld [vmem:[%s1187 + $0x4] sm:$0xf]
        %v1190 = vld [vmem:[%s1187 + $0x8] sm:$0xf]
        %v1191 = vld [vmem:[%s1187 + $0xc] sm:$0xf]
        %v1192 = vld [vmem:[%s1187 + $0x10] sm:$0xf]
        %v1193 = vld [vmem:[%s1187 + $0x14] sm:$0xf]
        %v1194 = vld [vmem:[%s1187 + $0x18] sm:$0xf]
        %v1195 = vld [vmem:[%s1187 + $0x1c] sm:$0xf]
        %v1196 = vld [vmem:[%s1187 + $0x20] sm:$0xf]
        %v1197 = vld [vmem:[%s1187 + $0x24] sm:$0xf]
        %v1198 = vld [vmem:[%s1187 + $0x28] sm:$0xf]
        %v1199 = vld [vmem:[%s1187 + $0x2c] sm:$0xf]
        %v1200 = vld [vmem:[%s1187 + $0x30] sm:$0xf]
        %v1201 = vld [vmem:[%s1187 + $0x34] sm:$0xf]
        %v1202 = vld [vmem:[%s1187 + $0x38] sm:$0xf]
        %v1203 = vld [vmem:[%s1187 + $0x3c] sm:$0xf]
        %v1220 = vunpack.c.l.b16 %v1188
        %v1221 = vunpack.c.l.b16 %v1189
        %v1222 = vunpack.c.l.b16 %v1190
        %v1223 = vunpack.c.l.b16 %v1191
        %v1224 = vunpack.c.l.b16 %v1192
        %v1225 = vunpack.c.l.b16 %v1193
        %v1226 = vunpack.c.l.b16 %v1194
        %v1227 = vunpack.c.l.b16 %v1195
        %v1228 = vunpack.c.l.b16 %v1196
        %v1229 = vunpack.c.l.b16 %v1197
        %v1230 = vunpack.c.l.b16 %v1198
        %v1231 = vunpack.c.l.b16 %v1199
        %v1232 = vunpack.c.l.b16 %v1200
        %v1233 = vunpack.c.l.b16 %v1201
        %v1234 = vunpack.c.l.b16 %v1202
        %v1235 = vunpack.c.l.b16 %v1203
        %v1236 = vpack.c.b16 %v1221, %v1220
        %v1237 = vpack.c.b16 %v1223, %v1222
        %v1238 = vpack.c.b16 %v1225, %v1224
        %v1239 = vpack.c.b16 %v1227, %v1226
        %v1240 = vpack.c.b16 %v1229, %v1228
        %v1241 = vpack.c.b16 %v1231, %v1230
        %v1242 = vpack.c.b16 %v1233, %v1232
        %v1243 = vpack.c.b16 %v1235, %v1234
        %1252 = vmatpush.bf16.msra.mxu0 %v1243
        %1253 = vmatpush.bf16.msra.mxu0 %v1242
        %1254 = vmatpush.bf16.msra.mxu0 %v1241
        %1255 = vmatpush.bf16.msra.mxu0 %v1240
        %1256 = vmatpush.bf16.msra.mxu0 %v1239
        %1257 = vmatpush.bf16.msra.mxu0 %v1238
        %1258 = vmatpush.bf16.msra.mxu0 %v1237
        %1259 = vmatpush.bf16.msra.mxu0 %v1236
        %1260 = vmatmul.bf16.gmra.mxu0 %v1179
        %v1261 = vpop.f32.mrf.mxu0
        %v1262 = vadd.f32 0.0, %v1261
        %v1263 = vpop.f32.mrf.mxu0
        %v1264 = vadd.f32 0.0, %v1263
        %1265 = vmatmul.bf16.gmra.mxu0 %v1180
        %v1266 = vpop.f32.mrf.mxu0
        %v1267 = vadd.f32 0.0, %v1266
        %v1268 = vpop.f32.mrf.mxu0
        %v1269 = vadd.f32 0.0, %v1268
        %1270 = vmatmul.bf16.gmra.mxu0 %v1181
        %v1271 = vpop.f32.mrf.mxu0
        %v1272 = vadd.f32 0.0, %v1271
        %v1273 = vpop.f32.mrf.mxu0
        %v1274 = vadd.f32 0.0, %v1273
        %1275 = vmatmul.bf16.gmra.mxu0 %v1182
        %v1276 = vpop.f32.mrf.mxu0
        %v1277 = vadd.f32 0.0, %v1276
        %v1278 = vpop.f32.mrf.mxu0
        %v1279 = vadd.f32 0.0, %v1278
        %1280 = vmatmul.bf16.gmra.mxu0 %v1183
        %v1281 = vpop.f32.mrf.mxu0
        %v1282 = vadd.f32 0.0, %v1281
        %v1283 = vpop.f32.mrf.mxu0
        %v1284 = vadd.f32 0.0, %v1283
        %1285 = vmatmul.bf16.gmra.mxu0 %v1184
        %v1286 = vpop.f32.mrf.mxu0
        %v1287 = vadd.f32 0.0, %v1286
        %v1288 = vpop.f32.mrf.mxu0
        %v1289 = vadd.f32 0.0, %v1288
        %1290 = vmatmul.bf16.gmra.mxu0 %v1185
        %v1291 = vpop.f32.mrf.mxu0
        %v1292 = vadd.f32 0.0, %v1291
        %v1293 = vpop.f32.mrf.mxu0
        %v1294 = vadd.f32 0.0, %v1293
        %1295 = vmatmul.bf16.gmra.mxu0 %v1186
        %v1296 = vpop.f32.mrf.mxu0
        %v1297 = vadd.f32 0.0, %v1296
        %v1298 = vpop.f32.mrf.mxu0
        %v1299 = vadd.f32 0.0, %v1298
        %1300 = vdwg.mxu0
        %v1301 = vadd.f32 %v1147, %v1262
        %v1302 = vadd.f32 %v1148, %v1264
        %v1303 = vadd.f32 %v1149, %v1267
        %v1304 = vadd.f32 %v1150, %v1269
        %v1305 = vadd.f32 %v1151, %v1272
        %v1306 = vadd.f32 %v1152, %v1274
        %v1307 = vadd.f32 %v1153, %v1277
        %v1308 = vadd.f32 %v1154, %v1279
        %v1309 = vadd.f32 %v1155, %v1282
        %v1310 = vadd.f32 %v1156, %v1284
        %v1311 = vadd.f32 %v1157, %v1287
        %v1312 = vadd.f32 %v1158, %v1289
        %v1313 = vadd.f32 %v1159, %v1292
        %v1314 = vadd.f32 %v1160, %v1294
        %v1315 = vadd.f32 %v1161, %v1297
        %v1316 = vadd.f32 %v1162, %v1299
        %v1317 = vld [vmem:[#allocation2 + $0x10] sm:$0xff]
        %v1318 = vld [vmem:[#allocation2 + $0x18] sm:$0xff]
        %v1319 = vld [vmem:[#allocation2 + $0x20] sm:$0xff]
        %v1320 = vld [vmem:[#allocation2 + $0x28] sm:$0xff]
        %v1321 = vld [vmem:[#allocation2 + $0x30] sm:$0xff]
        %v1322 = vld [vmem:[#allocation2 + $0x38] sm:$0xff]
        %v1323 = vld [vmem:[#allocation2 + $0x40] sm:$0xff]
        %v1324 = vld [vmem:[#allocation2 + $0x48] sm:$0xff]
        %v1325 = vld [vmem:[#allocation2 + $0x50] sm:$0xff]
        %v1326 = vld [vmem:[#allocation2 + $0x58] sm:$0xff]
        %v1327 = vld [vmem:[#allocation2 + $0x60] sm:$0xff]
        %v1328 = vld [vmem:[#allocation2 + $0x68] sm:$0xff]
        %v1329 = vld [vmem:[#allocation2 + $0x70] sm:$0xff]
        %v1330 = vld [vmem:[#allocation2 + $0x78] sm:$0xff]
        %v1331 = vld [vmem:[#allocation2 + $0x80] sm:$0xff]
        %v1332 = vld [vmem:[#allocation2 + $0x88] sm:$0xff]
        %v1333 = vpack.c.bf16 %v1318, %v1317
        %v1334 = vpack.c.bf16 %v1320, %v1319
        %v1335 = vpack.c.bf16 %v1322, %v1321
        %v1336 = vpack.c.bf16 %v1324, %v1323
        %v1337 = vpack.c.bf16 %v1326, %v1325
        %v1338 = vpack.c.bf16 %v1328, %v1327
        %v1339 = vpack.c.bf16 %v1330, %v1329
        %v1340 = vpack.c.bf16 %v1332, %v1331
        %s1341 = scalar_lea.vmem %s4, 256
        %v1342 = vld [vmem:[%s1341] sm:$0xf]
        %v1343 = vld [vmem:[%s1341 + $0x4] sm:$0xf]
        %v1344 = vld [vmem:[%s1341 + $0x8] sm:$0xf]
        %v1345 = vld [vmem:[%s1341 + $0xc] sm:$0xf]
        %v1346 = vld [vmem:[%s1341 + $0x10] sm:$0xf]
        %v1347 = vld [vmem:[%s1341 + $0x14] sm:$0xf]
        %v1348 = vld [vmem:[%s1341 + $0x18] sm:$0xf]
        %v1349 = vld [vmem:[%s1341 + $0x1c] sm:$0xf]
        %v1350 = vld [vmem:[%s1341 + $0x20] sm:$0xf]
        %v1351 = vld [vmem:[%s1341 + $0x24] sm:$0xf]
        %v1352 = vld [vmem:[%s1341 + $0x28] sm:$0xf]
        %v1353 = vld [vmem:[%s1341 + $0x2c] sm:$0xf]
        %v1354 = vld [vmem:[%s1341 + $0x30] sm:$0xf]
        %v1355 = vld [vmem:[%s1341 + $0x34] sm:$0xf]
        %v1356 = vld [vmem:[%s1341 + $0x38] sm:$0xf]
        %v1357 = vld [vmem:[%s1341 + $0x3c] sm:$0xf]
        %v1374 = vunpack.c.l.b16 %v1342
        %v1375 = vunpack.c.l.b16 %v1343
        %v1376 = vunpack.c.l.b16 %v1344
        %v1377 = vunpack.c.l.b16 %v1345
        %v1378 = vunpack.c.l.b16 %v1346
        %v1379 = vunpack.c.l.b16 %v1347
        %v1380 = vunpack.c.l.b16 %v1348
        %v1381 = vunpack.c.l.b16 %v1349
        %v1382 = vunpack.c.l.b16 %v1350
        %v1383 = vunpack.c.l.b16 %v1351
        %v1384 = vunpack.c.l.b16 %v1352
        %v1385 = vunpack.c.l.b16 %v1353
        %v1386 = vunpack.c.l.b16 %v1354
        %v1387 = vunpack.c.l.b16 %v1355
        %v1388 = vunpack.c.l.b16 %v1356
        %v1389 = vunpack.c.l.b16 %v1357
        %v1390 = vpack.c.b16 %v1375, %v1374
        %v1391 = vpack.c.b16 %v1377, %v1376
        %v1392 = vpack.c.b16 %v1379, %v1378
        %v1393 = vpack.c.b16 %v1381, %v1380
        %v1394 = vpack.c.b16 %v1383, %v1382
        %v1395 = vpack.c.b16 %v1385, %v1384
        %v1396 = vpack.c.b16 %v1387, %v1386
        %v1397 = vpack.c.b16 %v1389, %v1388
        %1406 = vmatpush.bf16.msra.mxu0 %v1397
        %1407 = vmatpush.bf16.msra.mxu0 %v1396
        %1408 = vmatpush.bf16.msra.mxu0 %v1395
        %1409 = vmatpush.bf16.msra.mxu0 %v1394
        %1410 = vmatpush.bf16.msra.mxu0 %v1393
        %1411 = vmatpush.bf16.msra.mxu0 %v1392
        %1412 = vmatpush.bf16.msra.mxu0 %v1391
        %1413 = vmatpush.bf16.msra.mxu0 %v1390
        %1414 = vmatmul.bf16.gmra.mxu0 %v1333
        %v1415 = vpop.f32.mrf.mxu0
        %v1416 = vadd.f32 0.0, %v1415
        %v1417 = vpop.f32.mrf.mxu0
        %v1418 = vadd.f32 0.0, %v1417
        %1419 = vmatmul.bf16.gmra.mxu0 %v1334
        %v1420 = vpop.f32.mrf.mxu0
        %v1421 = vadd.f32 0.0, %v1420
        %v1422 = vpop.f32.mrf.mxu0
        %v1423 = vadd.f32 0.0, %v1422
        %1424 = vmatmul.bf16.gmra.mxu0 %v1335
        %v1425 = vpop.f32.mrf.mxu0
        %v1426 = vadd.f32 0.0, %v1425
        %v1427 = vpop.f32.mrf.mxu0
        %v1428 = vadd.f32 0.0, %v1427
        %1429 = vmatmul.bf16.gmra.mxu0 %v1336
        %v1430 = vpop.f32.mrf.mxu0
        %v1431 = vadd.f32 0.0, %v1430
        %v1432 = vpop.f32.mrf.mxu0
        %v1433 = vadd.f32 0.0, %v1432
        %1434 = vmatmul.bf16.gmra.mxu0 %v1337
        %v1435 = vpop.f32.mrf.mxu0
        %v1436 = vadd.f32 0.0, %v1435
        %v1437 = vpop.f32.mrf.mxu0
        %v1438 = vadd.f32 0.0, %v1437
        %1439 = vmatmul.bf16.gmra.mxu0 %v1338
        %v1440 = vpop.f32.mrf.mxu0
        %v1441 = vadd.f32 0.0, %v1440
        %v1442 = vpop.f32.mrf.mxu0
        %v1443 = vadd.f32 0.0, %v1442
        %1444 = vmatmul.bf16.gmra.mxu0 %v1339
        %v1445 = vpop.f32.mrf.mxu0
        %v1446 = vadd.f32 0.0, %v1445
        %v1447 = vpop.f32.mrf.mxu0
        %v1448 = vadd.f32 0.0, %v1447
        %1449 = vmatmul.bf16.gmra.mxu0 %v1340
        %v1450 = vpop.f32.mrf.mxu0
        %v1451 = vadd.f32 0.0, %v1450
        %v1452 = vpop.f32.mrf.mxu0
        %v1453 = vadd.f32 0.0, %v1452
        %1454 = vdwg.mxu0
        %v1455 = vadd.f32 %v1301, %v1416
        %v1456 = vadd.f32 %v1302, %v1418
        %v1457 = vadd.f32 %v1303, %v1421
        %v1458 = vadd.f32 %v1304, %v1423
        %v1459 = vadd.f32 %v1305, %v1426
        %v1460 = vadd.f32 %v1306, %v1428
        %v1461 = vadd.f32 %v1307, %v1431
        %v1462 = vadd.f32 %v1308, %v1433
        %v1463 = vadd.f32 %v1309, %v1436
        %v1464 = vadd.f32 %v1310, %v1438
        %v1465 = vadd.f32 %v1311, %v1441
        %v1466 = vadd.f32 %v1312, %v1443
        %v1467 = vadd.f32 %v1313, %v1446
        %v1468 = vadd.f32 %v1314, %v1448
        %v1469 = vadd.f32 %v1315, %v1451
        %v1470 = vadd.f32 %v1316, %v1453
        %v1471 = vld [vmem:[#allocation2 + $0x11] sm:$0xff]
        %v1472 = vld [vmem:[#allocation2 + $0x19] sm:$0xff]
        %v1473 = vld [vmem:[#allocation2 + $0x21] sm:$0xff]
        %v1474 = vld [vmem:[#allocation2 + $0x29] sm:$0xff]
        %v1475 = vld [vmem:[#allocation2 + $0x31] sm:$0xff]
        %v1476 = vld [vmem:[#allocation2 + $0x39] sm:$0xff]
        %v1477 = vld [vmem:[#allocation2 + $0x41] sm:$0xff]
        %v1478 = vld [vmem:[#allocation2 + $0x49] sm:$0xff]
        %v1479 = vld [vmem:[#allocation2 + $0x51] sm:$0xff]
        %v1480 = vld [vmem:[#allocation2 + $0x59] sm:$0xff]
        %v1481 = vld [vmem:[#allocation2 + $0x61] sm:$0xff]
        %v1482 = vld [vmem:[#allocation2 + $0x69] sm:$0xff]
        %v1483 = vld [vmem:[#allocation2 + $0x71] sm:$0xff]
        %v1484 = vld [vmem:[#allocation2 + $0x79] sm:$0xff]
        %v1485 = vld [vmem:[#allocation2 + $0x81] sm:$0xff]
        %v1486 = vld [vmem:[#allocation2 + $0x89] sm:$0xff]
        %v1487 = vpack.c.bf16 %v1472, %v1471
        %v1488 = vpack.c.bf16 %v1474, %v1473
        %v1489 = vpack.c.bf16 %v1476, %v1475
        %v1490 = vpack.c.bf16 %v1478, %v1477
        %v1491 = vpack.c.bf16 %v1480, %v1479
        %v1492 = vpack.c.bf16 %v1482, %v1481
        %v1493 = vpack.c.bf16 %v1484, %v1483
        %v1494 = vpack.c.bf16 %v1486, %v1485
        %s1495 = scalar_lea.vmem %s4, 320
        %v1496 = vld [vmem:[%s1495] sm:$0xf]
        %v1497 = vld [vmem:[%s1495 + $0x4] sm:$0xf]
        %v1498 = vld [vmem:[%s1495 + $0x8] sm:$0xf]
        %v1499 = vld [vmem:[%s1495 + $0xc] sm:$0xf]
        %v1500 = vld [vmem:[%s1495 + $0x10] sm:$0xf]
        %v1501 = vld [vmem:[%s1495 + $0x14] sm:$0xf]
        %v1502 = vld [vmem:[%s1495 + $0x18] sm:$0xf]
        %v1503 = vld [vmem:[%s1495 + $0x1c] sm:$0xf]
        %v1504 = vld [vmem:[%s1495 + $0x20] sm:$0xf]
        %v1505 = vld [vmem:[%s1495 + $0x24] sm:$0xf]
        %v1506 = vld [vmem:[%s1495 + $0x28] sm:$0xf]
        %v1507 = vld [vmem:[%s1495 + $0x2c] sm:$0xf]
        %v1508 = vld [vmem:[%s1495 + $0x30] sm:$0xf]
        %v1509 = vld [vmem:[%s1495 + $0x34] sm:$0xf]
        %v1510 = vld [vmem:[%s1495 + $0x38] sm:$0xf]
        %v1511 = vld [vmem:[%s1495 + $0x3c] sm:$0xf]
        %v1528 = vunpack.c.l.b16 %v1496
        %v1529 = vunpack.c.l.b16 %v1497
        %v1530 = vunpack.c.l.b16 %v1498
        %v1531 = vunpack.c.l.b16 %v1499
        %v1532 = vunpack.c.l.b16 %v1500
        %v1533 = vunpack.c.l.b16 %v1501
        %v1534 = vunpack.c.l.b16 %v1502
        %v1535 = vunpack.c.l.b16 %v1503
        %v1536 = vunpack.c.l.b16 %v1504
        %v1537 = vunpack.c.l.b16 %v1505
        %v1538 = vunpack.c.l.b16 %v1506
        %v1539 = vunpack.c.l.b16 %v1507
        %v1540 = vunpack.c.l.b16 %v1508
        %v1541 = vunpack.c.l.b16 %v1509
        %v1542 = vunpack.c.l.b16 %v1510
        %v1543 = vunpack.c.l.b16 %v1511
        %v1544 = vpack.c.b16 %v1529, %v1528
        %v1545 = vpack.c.b16 %v1531, %v1530
        %v1546 = vpack.c.b16 %v1533, %v1532
        %v1547 = vpack.c.b16 %v1535, %v1534
        %v1548 = vpack.c.b16 %v1537, %v1536
        %v1549 = vpack.c.b16 %v1539, %v1538
        %v1550 = vpack.c.b16 %v1541, %v1540
        %v1551 = vpack.c.b16 %v1543, %v1542
        %1560 = vmatpush.bf16.msra.mxu0 %v1551
        %1561 = vmatpush.bf16.msra.mxu0 %v1550
        %1562 = vmatpush.bf16.msra.mxu0 %v1549
        %1563 = vmatpush.bf16.msra.mxu0 %v1548
        %1564 = vmatpush.bf16.msra.mxu0 %v1547
        %1565 = vmatpush.bf16.msra.mxu0 %v1546
        %1566 = vmatpush.bf16.msra.mxu0 %v1545
        %1567 = vmatpush.bf16.msra.mxu0 %v1544
        %1568 = vmatmul.bf16.gmra.mxu0 %v1487
        %v1569 = vpop.f32.mrf.mxu0
        %v1570 = vadd.f32 0.0, %v1569
        %v1571 = vpop.f32.mrf.mxu0
        %v1572 = vadd.f32 0.0, %v1571
        %1573 = vmatmul.bf16.gmra.mxu0 %v1488
        %v1574 = vpop.f32.mrf.mxu0
        %v1575 = vadd.f32 0.0, %v1574
        %v1576 = vpop.f32.mrf.mxu0
        %v1577 = vadd.f32 0.0, %v1576
        %1578 = vmatmul.bf16.gmra.mxu0 %v1489
        %v1579 = vpop.f32.mrf.mxu0
        %v1580 = vadd.f32 0.0, %v1579
        %v1581 = vpop.f32.mrf.mxu0
        %v1582 = vadd.f32 0.0, %v1581
        %1583 = vmatmul.bf16.gmra.mxu0 %v1490
        %v1584 = vpop.f32.mrf.mxu0
        %v1585 = vadd.f32 0.0, %v1584
        %v1586 = vpop.f32.mrf.mxu0
        %v1587 = vadd.f32 0.0, %v1586
        %1588 = vmatmul.bf16.gmra.mxu0 %v1491
        %v1589 = vpop.f32.mrf.mxu0
        %v1590 = vadd.f32 0.0, %v1589
        %v1591 = vpop.f32.mrf.mxu0
        %v1592 = vadd.f32 0.0, %v1591
        %1593 = vmatmul.bf16.gmra.mxu0 %v1492
        %v1594 = vpop.f32.mrf.mxu0
        %v1595 = vadd.f32 0.0, %v1594
        %v1596 = vpop.f32.mrf.mxu0
        %v1597 = vadd.f32 0.0, %v1596
        %1598 = vmatmul.bf16.gmra.mxu0 %v1493
        %v1599 = vpop.f32.mrf.mxu0
        %v1600 = vadd.f32 0.0, %v1599
        %v1601 = vpop.f32.mrf.mxu0
        %v1602 = vadd.f32 0.0, %v1601
        %1603 = vmatmul.bf16.gmra.mxu0 %v1494
        %v1604 = vpop.f32.mrf.mxu0
        %v1605 = vadd.f32 0.0, %v1604
        %v1606 = vpop.f32.mrf.mxu0
        %v1607 = vadd.f32 0.0, %v1606
        %1608 = vdwg.mxu0
        %v1609 = vadd.f32 %v1455, %v1570
        %v1610 = vadd.f32 %v1456, %v1572
        %v1611 = vadd.f32 %v1457, %v1575
        %v1612 = vadd.f32 %v1458, %v1577
        %v1613 = vadd.f32 %v1459, %v1580
        %v1614 = vadd.f32 %v1460, %v1582
        %v1615 = vadd.f32 %v1461, %v1585
        %v1616 = vadd.f32 %v1462, %v1587
        %v1617 = vadd.f32 %v1463, %v1590
        %v1618 = vadd.f32 %v1464, %v1592
        %v1619 = vadd.f32 %v1465, %v1595
        %v1620 = vadd.f32 %v1466, %v1597
        %v1621 = vadd.f32 %v1467, %v1600
        %v1622 = vadd.f32 %v1468, %v1602
        %v1623 = vadd.f32 %v1469, %v1605
        %v1624 = vadd.f32 %v1470, %v1607
        %v1625 = vld [vmem:[#allocation2 + $0x1a] sm:$0xff]
        %v1626 = vld [vmem:[#allocation2 + $0x22] sm:$0xff]
        %v1627 = vld [vmem:[#allocation2 + $0x2a] sm:$0xff]
        %v1628 = vld [vmem:[#allocation2 + $0x32] sm:$0xff]
        %v1629 = vld [vmem:[#allocation2 + $0x3a] sm:$0xff]
        %v1630 = vld [vmem:[#allocation2 + $0x42] sm:$0xff]
        %v1631 = vld [vmem:[#allocation2 + $0x4a] sm:$0xff]
        %v1632 = vld [vmem:[#allocation2 + $0x52] sm:$0xff]
        %v1633 = vld [vmem:[#allocation2 + $0x5a] sm:$0xff]
        %v1634 = vld [vmem:[#allocation2 + $0x62] sm:$0xff]
        %v1635 = vld [vmem:[#allocation2 + $0x6a] sm:$0xff]
        %v1636 = vld [vmem:[#allocation2 + $0x72] sm:$0xff]
        %v1637 = vld [vmem:[#allocation2 + $0x7a] sm:$0xff]
        %v1638 = vld [vmem:[#allocation2 + $0x82] sm:$0xff]
        %v1639 = vld [vmem:[#allocation2 + $0x8a] sm:$0xff]
        %v1640 = vld [vmem:[#allocation2 + $0x92] sm:$0xff]
        %v1641 = vpack.c.bf16 %v1626, %v1625
        %v1642 = vpack.c.bf16 %v1628, %v1627
        %v1643 = vpack.c.bf16 %v1630, %v1629
        %v1644 = vpack.c.bf16 %v1632, %v1631
        %v1645 = vpack.c.bf16 %v1634, %v1633
        %v1646 = vpack.c.bf16 %v1636, %v1635
        %v1647 = vpack.c.bf16 %v1638, %v1637
        %v1648 = vpack.c.bf16 %v1640, %v1639
        %s1649 = scalar_lea.vmem %s4, 384
        %v1650 = vld [vmem:[%s1649] sm:$0xf]
        %v1651 = vld [vmem:[%s1649 + $0x4] sm:$0xf]
        %v1652 = vld [vmem:[%s1649 + $0x8] sm:$0xf]
        %v1653 = vld [vmem:[%s1649 + $0xc] sm:$0xf]
        %v1654 = vld [vmem:[%s1649 + $0x10] sm:$0xf]
        %v1655 = vld [vmem:[%s1649 + $0x14] sm:$0xf]
        %v1656 = vld [vmem:[%s1649 + $0x18] sm:$0xf]
        %v1657 = vld [vmem:[%s1649 + $0x1c] sm:$0xf]
        %v1658 = vld [vmem:[%s1649 + $0x20] sm:$0xf]
        %v1659 = vld [vmem:[%s1649 + $0x24] sm:$0xf]
        %v1660 = vld [vmem:[%s1649 + $0x28] sm:$0xf]
        %v1661 = vld [vmem:[%s1649 + $0x2c] sm:$0xf]
        %v1662 = vld [vmem:[%s1649 + $0x30] sm:$0xf]
        %v1663 = vld [vmem:[%s1649 + $0x34] sm:$0xf]
        %v1664 = vld [vmem:[%s1649 + $0x38] sm:$0xf]
        %v1665 = vld [vmem:[%s1649 + $0x3c] sm:$0xf]
        %v1682 = vunpack.c.l.b16 %v1650
        %v1683 = vunpack.c.l.b16 %v1651
        %v1684 = vunpack.c.l.b16 %v1652
        %v1685 = vunpack.c.l.b16 %v1653
        %v1686 = vunpack.c.l.b16 %v1654
        %v1687 = vunpack.c.l.b16 %v1655
        %v1688 = vunpack.c.l.b16 %v1656
        %v1689 = vunpack.c.l.b16 %v1657
        %v1690 = vunpack.c.l.b16 %v1658
        %v1691 = vunpack.c.l.b16 %v1659
        %v1692 = vunpack.c.l.b16 %v1660
        %v1693 = vunpack.c.l.b16 %v1661
        %v1694 = vunpack.c.l.b16 %v1662
        %v1695 = vunpack.c.l.b16 %v1663
        %v1696 = vunpack.c.l.b16 %v1664
        %v1697 = vunpack.c.l.b16 %v1665
        %v1698 = vpack.c.b16 %v1683, %v1682
        %v1699 = vpack.c.b16 %v1685, %v1684
        %v1700 = vpack.c.b16 %v1687, %v1686
        %v1701 = vpack.c.b16 %v1689, %v1688
        %v1702 = vpack.c.b16 %v1691, %v1690
        %v1703 = vpack.c.b16 %v1693, %v1692
        %v1704 = vpack.c.b16 %v1695, %v1694
        %v1705 = vpack.c.b16 %v1697, %v1696
        %1714 = vmatpush.bf16.msra.mxu0 %v1705
        %1715 = vmatpush.bf16.msra.mxu0 %v1704
        %1716 = vmatpush.bf16.msra.mxu0 %v1703
        %1717 = vmatpush.bf16.msra.mxu0 %v1702
        %1718 = vmatpush.bf16.msra.mxu0 %v1701
        %1719 = vmatpush.bf16.msra.mxu0 %v1700
        %1720 = vmatpush.bf16.msra.mxu0 %v1699
        %1721 = vmatpush.bf16.msra.mxu0 %v1698
        %1722 = vmatmul.bf16.gmra.mxu0 %v1641
        %v1723 = vpop.f32.mrf.mxu0
        %v1724 = vadd.f32 0.0, %v1723
        %v1725 = vpop.f32.mrf.mxu0
        %v1726 = vadd.f32 0.0, %v1725
        %1727 = vmatmul.bf16.gmra.mxu0 %v1642
        %v1728 = vpop.f32.mrf.mxu0
        %v1729 = vadd.f32 0.0, %v1728
        %v1730 = vpop.f32.mrf.mxu0
        %v1731 = vadd.f32 0.0, %v1730
        %1732 = vmatmul.bf16.gmra.mxu0 %v1643
        %v1733 = vpop.f32.mrf.mxu0
        %v1734 = vadd.f32 0.0, %v1733
        %v1735 = vpop.f32.mrf.mxu0
        %v1736 = vadd.f32 0.0, %v1735
        %1737 = vmatmul.bf16.gmra.mxu0 %v1644
        %v1738 = vpop.f32.mrf.mxu0
        %v1739 = vadd.f32 0.0, %v1738
        %v1740 = vpop.f32.mrf.mxu0
        %v1741 = vadd.f32 0.0, %v1740
        %1742 = vmatmul.bf16.gmra.mxu0 %v1645
        %v1743 = vpop.f32.mrf.mxu0
        %v1744 = vadd.f32 0.0, %v1743
        %v1745 = vpop.f32.mrf.mxu0
        %v1746 = vadd.f32 0.0, %v1745
        %1747 = vmatmul.bf16.gmra.mxu0 %v1646
        %v1748 = vpop.f32.mrf.mxu0
        %v1749 = vadd.f32 0.0, %v1748
        %v1750 = vpop.f32.mrf.mxu0
        %v1751 = vadd.f32 0.0, %v1750
        %1752 = vmatmul.bf16.gmra.mxu0 %v1647
        %v1753 = vpop.f32.mrf.mxu0
        %v1754 = vadd.f32 0.0, %v1753
        %v1755 = vpop.f32.mrf.mxu0
        %v1756 = vadd.f32 0.0, %v1755
        %1757 = vmatmul.bf16.gmra.mxu0 %v1648
        %v1758 = vpop.f32.mrf.mxu0
        %v1759 = vadd.f32 0.0, %v1758
        %v1760 = vpop.f32.mrf.mxu0
        %v1761 = vadd.f32 0.0, %v1760
        %1762 = vdwg.mxu0
        %v1763 = vadd.f32 %v1609, %v1724
        %v1764 = vadd.f32 %v1610, %v1726
        %v1765 = vadd.f32 %v1611, %v1729
        %v1766 = vadd.f32 %v1612, %v1731
        %v1767 = vadd.f32 %v1613, %v1734
        %v1768 = vadd.f32 %v1614, %v1736
        %v1769 = vadd.f32 %v1615, %v1739
        %v1770 = vadd.f32 %v1616, %v1741
        %v1771 = vadd.f32 %v1617, %v1744
        %v1772 = vadd.f32 %v1618, %v1746
        %v1773 = vadd.f32 %v1619, %v1749
        %v1774 = vadd.f32 %v1620, %v1751
        %v1775 = vadd.f32 %v1621, %v1754
        %v1776 = vadd.f32 %v1622, %v1756
        %v1777 = vadd.f32 %v1623, %v1759
        %v1778 = vadd.f32 %v1624, %v1761
        %v1779 = vld [vmem:[#allocation2 + $0x1b] sm:$0xff]
        %v1780 = vld [vmem:[#allocation2 + $0x23] sm:$0xff]
        %v1781 = vld [vmem:[#allocation2 + $0x2b] sm:$0xff]
        %v1782 = vld [vmem:[#allocation2 + $0x33] sm:$0xff]
        %v1783 = vld [vmem:[#allocation2 + $0x3b] sm:$0xff]
        %v1784 = vld [vmem:[#allocation2 + $0x43] sm:$0xff]
        %v1785 = vld [vmem:[#allocation2 + $0x4b] sm:$0xff]
        %v1786 = vld [vmem:[#allocation2 + $0x53] sm:$0xff]
        %v1787 = vld [vmem:[#allocation2 + $0x5b] sm:$0xff]
        %v1788 = vld [vmem:[#allocation2 + $0x63] sm:$0xff]
        %v1789 = vld [vmem:[#allocation2 + $0x6b] sm:$0xff]
        %v1790 = vld [vmem:[#allocation2 + $0x73] sm:$0xff]
        %v1791 = vld [vmem:[#allocation2 + $0x7b] sm:$0xff]
        %v1792 = vld [vmem:[#allocation2 + $0x83] sm:$0xff]
        %v1793 = vld [vmem:[#allocation2 + $0x8b] sm:$0xff]
        %v1794 = vld [vmem:[#allocation2 + $0x93] sm:$0xff]
        %v1795 = vpack.c.bf16 %v1780, %v1779
        %v1796 = vpack.c.bf16 %v1782, %v1781
        %v1797 = vpack.c.bf16 %v1784, %v1783
        %v1798 = vpack.c.bf16 %v1786, %v1785
        %v1799 = vpack.c.bf16 %v1788, %v1787
        %v1800 = vpack.c.bf16 %v1790, %v1789
        %v1801 = vpack.c.bf16 %v1792, %v1791
        %v1802 = vpack.c.bf16 %v1794, %v1793
        %s1803 = scalar_lea.vmem %s4, 448
        %v1804 = vld [vmem:[%s1803] sm:$0xf]
        %v1805 = vld [vmem:[%s1803 + $0x4] sm:$0xf]
        %v1806 = vld [vmem:[%s1803 + $0x8] sm:$0xf]
        %v1807 = vld [vmem:[%s1803 + $0xc] sm:$0xf]
        %v1808 = vld [vmem:[%s1803 + $0x10] sm:$0xf]
        %v1809 = vld [vmem:[%s1803 + $0x14] sm:$0xf]
        %v1810 = vld [vmem:[%s1803 + $0x18] sm:$0xf]
        %v1811 = vld [vmem:[%s1803 + $0x1c] sm:$0xf]
        %v1812 = vld [vmem:[%s1803 + $0x20] sm:$0xf]
        %v1813 = vld [vmem:[%s1803 + $0x24] sm:$0xf]
        %v1814 = vld [vmem:[%s1803 + $0x28] sm:$0xf]
        %v1815 = vld [vmem:[%s1803 + $0x2c] sm:$0xf]
        %v1816 = vld [vmem:[%s1803 + $0x30] sm:$0xf]
        %v1817 = vld [vmem:[%s1803 + $0x34] sm:$0xf]
        %v1818 = vld [vmem:[%s1803 + $0x38] sm:$0xf]
        %v1819 = vld [vmem:[%s1803 + $0x3c] sm:$0xf]
        %v1836 = vunpack.c.l.b16 %v1804
        %v1837 = vunpack.c.l.b16 %v1805
        %v1838 = vunpack.c.l.b16 %v1806
        %v1839 = vunpack.c.l.b16 %v1807
        %v1840 = vunpack.c.l.b16 %v1808
        %v1841 = vunpack.c.l.b16 %v1809
        %v1842 = vunpack.c.l.b16 %v1810
        %v1843 = vunpack.c.l.b16 %v1811
        %v1844 = vunpack.c.l.b16 %v1812
        %v1845 = vunpack.c.l.b16 %v1813
        %v1846 = vunpack.c.l.b16 %v1814
        %v1847 = vunpack.c.l.b16 %v1815
        %v1848 = vunpack.c.l.b16 %v1816
        %v1849 = vunpack.c.l.b16 %v1817
        %v1850 = vunpack.c.l.b16 %v1818
        %v1851 = vunpack.c.l.b16 %v1819
        %v1852 = vpack.c.b16 %v1837, %v1836
        %v1853 = vpack.c.b16 %v1839, %v1838
        %v1854 = vpack.c.b16 %v1841, %v1840
        %v1855 = vpack.c.b16 %v1843, %v1842
        %v1856 = vpack.c.b16 %v1845, %v1844
        %v1857 = vpack.c.b16 %v1847, %v1846
        %v1858 = vpack.c.b16 %v1849, %v1848
        %v1859 = vpack.c.b16 %v1851, %v1850
        %1868 = vmatpush.bf16.msra.mxu0 %v1859
        %1869 = vmatpush.bf16.msra.mxu0 %v1858
        %1870 = vmatpush.bf16.msra.mxu0 %v1857
        %1871 = vmatpush.bf16.msra.mxu0 %v1856
        %1872 = vmatpush.bf16.msra.mxu0 %v1855
        %1873 = vmatpush.bf16.msra.mxu0 %v1854
        %1874 = vmatpush.bf16.msra.mxu0 %v1853
        %1875 = vmatpush.bf16.msra.mxu0 %v1852
        %1876 = vmatmul.bf16.gmra.mxu0 %v1795
        %v1877 = vpop.f32.mrf.mxu0
        %v1878 = vadd.f32 0.0, %v1877
        %v1879 = vpop.f32.mrf.mxu0
        %v1880 = vadd.f32 0.0, %v1879
        %1881 = vmatmul.bf16.gmra.mxu0 %v1796
        %v1882 = vpop.f32.mrf.mxu0
        %v1883 = vadd.f32 0.0, %v1882
        %v1884 = vpop.f32.mrf.mxu0
        %v1885 = vadd.f32 0.0, %v1884
        %1886 = vmatmul.bf16.gmra.mxu0 %v1797
        %v1887 = vpop.f32.mrf.mxu0
        %v1888 = vadd.f32 0.0, %v1887
        %v1889 = vpop.f32.mrf.mxu0
        %v1890 = vadd.f32 0.0, %v1889
        %1891 = vmatmul.bf16.gmra.mxu0 %v1798
        %v1892 = vpop.f32.mrf.mxu0
        %v1893 = vadd.f32 0.0, %v1892
        %v1894 = vpop.f32.mrf.mxu0
        %v1895 = vadd.f32 0.0, %v1894
        %1896 = vmatmul.bf16.gmra.mxu0 %v1799
        %v1897 = vpop.f32.mrf.mxu0
        %v1898 = vadd.f32 0.0, %v1897
        %v1899 = vpop.f32.mrf.mxu0
        %v1900 = vadd.f32 0.0, %v1899
        %1901 = vmatmul.bf16.gmra.mxu0 %v1800
        %v1902 = vpop.f32.mrf.mxu0
        %v1903 = vadd.f32 0.0, %v1902
        %v1904 = vpop.f32.mrf.mxu0
        %v1905 = vadd.f32 0.0, %v1904
        %1906 = vmatmul.bf16.gmra.mxu0 %v1801
        %v1907 = vpop.f32.mrf.mxu0
        %v1908 = vadd.f32 0.0, %v1907
        %v1909 = vpop.f32.mrf.mxu0
        %v1910 = vadd.f32 0.0, %v1909
        %1911 = vmatmul.bf16.gmra.mxu0 %v1802
        %v1912 = vpop.f32.mrf.mxu0
        %v1913 = vadd.f32 0.0, %v1912
        %v1914 = vpop.f32.mrf.mxu0
        %v1915 = vadd.f32 0.0, %v1914
        %1916 = vdwg.mxu0
        %v1917 = vadd.f32 %v1763, %v1878
        %v1918 = vadd.f32 %v1764, %v1880
        %v1919 = vadd.f32 %v1765, %v1883
        %v1920 = vadd.f32 %v1766, %v1885
        %v1921 = vadd.f32 %v1767, %v1888
        %v1922 = vadd.f32 %v1768, %v1890
        %v1923 = vadd.f32 %v1769, %v1893
        %v1924 = vadd.f32 %v1770, %v1895
        %v1925 = vadd.f32 %v1771, %v1898
        %v1926 = vadd.f32 %v1772, %v1900
        %v1927 = vadd.f32 %v1773, %v1903
        %v1928 = vadd.f32 %v1774, %v1905
        %v1929 = vadd.f32 %v1775, %v1908
        %v1930 = vadd.f32 %v1776, %v1910
        %v1931 = vadd.f32 %v1777, %v1913
        %v1932 = vadd.f32 %v1778, %v1915
        %v1933 = vld [vmem:[#allocation2 + $0x1c] sm:$0xff]
        %v1934 = vld [vmem:[#allocation2 + $0x24] sm:$0xff]
        %v1935 = vld [vmem:[#allocation2 + $0x2c] sm:$0xff]
        %v1936 = vld [vmem:[#allocation2 + $0x34] sm:$0xff]
        %v1937 = vld [vmem:[#allocation2 + $0x3c] sm:$0xff]
        %v1938 = vld [vmem:[#allocation2 + $0x44] sm:$0xff]
        %v1939 = vld [vmem:[#allocation2 + $0x4c] sm:$0xff]
        %v1940 = vld [vmem:[#allocation2 + $0x54] sm:$0xff]
        %v1941 = vld [vmem:[#allocation2 + $0x5c] sm:$0xff]
        %v1942 = vld [vmem:[#allocation2 + $0x64] sm:$0xff]
        %v1943 = vld [vmem:[#allocation2 + $0x6c] sm:$0xff]
        %v1944 = vld [vmem:[#allocation2 + $0x74] sm:$0xff]
        %v1945 = vld [vmem:[#allocation2 + $0x7c] sm:$0xff]
        %v1946 = vld [vmem:[#allocation2 + $0x84] sm:$0xff]
        %v1947 = vld [vmem:[#allocation2 + $0x8c] sm:$0xff]
        %v1948 = vld [vmem:[#allocation2 + $0x94] sm:$0xff]
        %v1949 = vpack.c.bf16 %v1934, %v1933
        %v1950 = vpack.c.bf16 %v1936, %v1935
        %v1951 = vpack.c.bf16 %v1938, %v1937
        %v1952 = vpack.c.bf16 %v1940, %v1939
        %v1953 = vpack.c.bf16 %v1942, %v1941
        %v1954 = vpack.c.bf16 %v1944, %v1943
        %v1955 = vpack.c.bf16 %v1946, %v1945
        %v1956 = vpack.c.bf16 %v1948, %v1947
        %s1957 = scalar_lea.vmem %s4, 512
        %v1958 = vld [vmem:[%s1957] sm:$0xf]
        %v1959 = vld [vmem:[%s1957 + $0x4] sm:$0xf]
        %v1960 = vld [vmem:[%s1957 + $0x8] sm:$0xf]
        %v1961 = vld [vmem:[%s1957 + $0xc] sm:$0xf]
        %v1962 = vld [vmem:[%s1957 + $0x10] sm:$0xf]
        %v1963 = vld [vmem:[%s1957 + $0x14] sm:$0xf]
        %v1964 = vld [vmem:[%s1957 + $0x18] sm:$0xf]
        %v1965 = vld [vmem:[%s1957 + $0x1c] sm:$0xf]
        %v1966 = vld [vmem:[%s1957 + $0x20] sm:$0xf]
        %v1967 = vld [vmem:[%s1957 + $0x24] sm:$0xf]
        %v1968 = vld [vmem:[%s1957 + $0x28] sm:$0xf]
        %v1969 = vld [vmem:[%s1957 + $0x2c] sm:$0xf]
        %v1970 = vld [vmem:[%s1957 + $0x30] sm:$0xf]
        %v1971 = vld [vmem:[%s1957 + $0x34] sm:$0xf]
        %v1972 = vld [vmem:[%s1957 + $0x38] sm:$0xf]
        %v1973 = vld [vmem:[%s1957 + $0x3c] sm:$0xf]
        %v1990 = vunpack.c.l.b16 %v1958
        %v1991 = vunpack.c.l.b16 %v1959
        %v1992 = vunpack.c.l.b16 %v1960
        %v1993 = vunpack.c.l.b16 %v1961
        %v1994 = vunpack.c.l.b16 %v1962
        %v1995 = vunpack.c.l.b16 %v1963
        %v1996 = vunpack.c.l.b16 %v1964
        %v1997 = vunpack.c.l.b16 %v1965
        %v1998 = vunpack.c.l.b16 %v1966
        %v1999 = vunpack.c.l.b16 %v1967
        %v2000 = vunpack.c.l.b16 %v1968
        %v2001 = vunpack.c.l.b16 %v1969
        %v2002 = vunpack.c.l.b16 %v1970
        %v2003 = vunpack.c.l.b16 %v1971
        %v2004 = vunpack.c.l.b16 %v1972
        %v2005 = vunpack.c.l.b16 %v1973
        %v2006 = vpack.c.b16 %v1991, %v1990
        %v2007 = vpack.c.b16 %v1993, %v1992
        %v2008 = vpack.c.b16 %v1995, %v1994
        %v2009 = vpack.c.b16 %v1997, %v1996
        %v2010 = vpack.c.b16 %v1999, %v1998
        %v2011 = vpack.c.b16 %v2001, %v2000
        %v2012 = vpack.c.b16 %v2003, %v2002
        %v2013 = vpack.c.b16 %v2005, %v2004
        %2022 = vmatpush.bf16.msra.mxu0 %v2013
        %2023 = vmatpush.bf16.msra.mxu0 %v2012
        %2024 = vmatpush.bf16.msra.mxu0 %v2011
        %2025 = vmatpush.bf16.msra.mxu0 %v2010
        %2026 = vmatpush.bf16.msra.mxu0 %v2009
        %2027 = vmatpush.bf16.msra.mxu0 %v2008
        %2028 = vmatpush.bf16.msra.mxu0 %v2007
        %2029 = vmatpush.bf16.msra.mxu0 %v2006
        %2030 = vmatmul.bf16.gmra.mxu0 %v1949
        %v2031 = vpop.f32.mrf.mxu0
        %v2032 = vadd.f32 0.0, %v2031
        %v2033 = vpop.f32.mrf.mxu0
        %v2034 = vadd.f32 0.0, %v2033
        %2035 = vmatmul.bf16.gmra.mxu0 %v1950
        %v2036 = vpop.f32.mrf.mxu0
        %v2037 = vadd.f32 0.0, %v2036
        %v2038 = vpop.f32.mrf.mxu0
        %v2039 = vadd.f32 0.0, %v2038
        %2040 = vmatmul.bf16.gmra.mxu0 %v1951
        %v2041 = vpop.f32.mrf.mxu0
        %v2042 = vadd.f32 0.0, %v2041
        %v2043 = vpop.f32.mrf.mxu0
        %v2044 = vadd.f32 0.0, %v2043
        %2045 = vmatmul.bf16.gmra.mxu0 %v1952
        %v2046 = vpop.f32.mrf.mxu0
        %v2047 = vadd.f32 0.0, %v2046
        %v2048 = vpop.f32.mrf.mxu0
        %v2049 = vadd.f32 0.0, %v2048
        %2050 = vmatmul.bf16.gmra.mxu0 %v1953
        %v2051 = vpop.f32.mrf.mxu0
        %v2052 = vadd.f32 0.0, %v2051
        %v2053 = vpop.f32.mrf.mxu0
        %v2054 = vadd.f32 0.0, %v2053
        %2055 = vmatmul.bf16.gmra.mxu0 %v1954
        %v2056 = vpop.f32.mrf.mxu0
        %v2057 = vadd.f32 0.0, %v2056
        %v2058 = vpop.f32.mrf.mxu0
        %v2059 = vadd.f32 0.0, %v2058
        %2060 = vmatmul.bf16.gmra.mxu0 %v1955
        %v2061 = vpop.f32.mrf.mxu0
        %v2062 = vadd.f32 0.0, %v2061
        %v2063 = vpop.f32.mrf.mxu0
        %v2064 = vadd.f32 0.0, %v2063
        %2065 = vmatmul.bf16.gmra.mxu0 %v1956
        %v2066 = vpop.f32.mrf.mxu0
        %v2067 = vadd.f32 0.0, %v2066
        %v2068 = vpop.f32.mrf.mxu0
        %v2069 = vadd.f32 0.0, %v2068
        %2070 = vdwg.mxu0
        %v2071 = vadd.f32 %v1917, %v2032
        %v2072 = vadd.f32 %v1918, %v2034
        %v2073 = vadd.f32 %v1919, %v2037
        %v2074 = vadd.f32 %v1920, %v2039
        %v2075 = vadd.f32 %v1921, %v2042
        %v2076 = vadd.f32 %v1922, %v2044
        %v2077 = vadd.f32 %v1923, %v2047
        %v2078 = vadd.f32 %v1924, %v2049
        %v2079 = vadd.f32 %v1925, %v2052
        %v2080 = vadd.f32 %v1926, %v2054
        %v2081 = vadd.f32 %v1927, %v2057
        %v2082 = vadd.f32 %v1928, %v2059
        %v2083 = vadd.f32 %v1929, %v2062
        %v2084 = vadd.f32 %v1930, %v2064
        %v2085 = vadd.f32 %v1931, %v2067
        %v2086 = vadd.f32 %v1932, %v2069
        %v2087 = vld [vmem:[%s5] sm:$0x1]
        %v2089 = vperm.slane %v2087, 0
        %v2091 = vadd.f32 %v2071, %v2089
        %v2092 = vadd.f32 %v2072, %v2089
        %v2093 = vadd.f32 %v2073, %v2089
        %v2094 = vadd.f32 %v2074, %v2089
        %v2095 = vadd.f32 %v2075, %v2089
        %v2096 = vadd.f32 %v2076, %v2089
        %v2097 = vadd.f32 %v2077, %v2089
        %v2098 = vadd.f32 %v2078, %v2089
        %v2099 = vadd.f32 %v2079, %v2089
        %v2100 = vadd.f32 %v2080, %v2089
        %v2101 = vadd.f32 %v2081, %v2089
        %v2102 = vadd.f32 %v2082, %v2089
        %v2103 = vadd.f32 %v2083, %v2089
        %v2104 = vadd.f32 %v2084, %v2089
        %v2105 = vadd.f32 %v2085, %v2089
        %v2106 = vadd.f32 %v2086, %v2089
        %vm2107 = vcmp.ge.f32.partialorder %v2091, 0.0
        %vm2108 = vcmp.ge.f32.partialorder %v2092, 0.0
        %vm2109 = vcmp.ge.f32.partialorder %v2093, 0.0
        %vm2110 = vcmp.ge.f32.partialorder %v2094, 0.0
        %vm2111 = vcmp.ge.f32.partialorder %v2095, 0.0
        %vm2112 = vcmp.ge.f32.partialorder %v2096, 0.0
        %vm2113 = vcmp.ge.f32.partialorder %v2097, 0.0
        %vm2114 = vcmp.ge.f32.partialorder %v2098, 0.0
        %vm2115 = vcmp.ge.f32.partialorder %v2099, 0.0
        %vm2116 = vcmp.ge.f32.partialorder %v2100, 0.0
        %vm2117 = vcmp.ge.f32.partialorder %v2101, 0.0
        %vm2118 = vcmp.ge.f32.partialorder %v2102, 0.0
        %vm2119 = vcmp.ge.f32.partialorder %v2103, 0.0
        %vm2120 = vcmp.ge.f32.partialorder %v2104, 0.0
        %vm2121 = vcmp.ge.f32.partialorder %v2105, 0.0
        %vm2122 = vcmp.ge.f32.partialorder %v2106, 0.0
        %v2123 = vmul.f32 %v2091, 0.01
        %v2124 = vmul.f32 %v2092, 0.01
        %v2125 = vmul.f32 %v2093, 0.01
        %v2126 = vmul.f32 %v2094, 0.01
        %v2127 = vmul.f32 %v2095, 0.01
        %v2128 = vmul.f32 %v2096, 0.01
        %v2129 = vmul.f32 %v2097, 0.01
        %v2130 = vmul.f32 %v2098, 0.01
        %v2131 = vmul.f32 %v2099, 0.01
        %v2132 = vmul.f32 %v2100, 0.01
        %v2133 = vmul.f32 %v2101, 0.01
        %v2134 = vmul.f32 %v2102, 0.01
        %v2135 = vmul.f32 %v2103, 0.01
        %v2136 = vmul.f32 %v2104, 0.01
        %v2137 = vmul.f32 %v2105, 0.01
        %v2138 = vmul.f32 %v2106, 0.01
        %v2139 = vsel %vm2107, %v2091, %v2123
        %v2140 = vsel %vm2108, %v2092, %v2124
        %v2141 = vsel %vm2109, %v2093, %v2125
        %v2142 = vsel %vm2110, %v2094, %v2126
        %v2143 = vsel %vm2111, %v2095, %v2127
        %v2144 = vsel %vm2112, %v2096, %v2128
        %v2145 = vsel %vm2113, %v2097, %v2129
        %v2146 = vsel %vm2114, %v2098, %v2130
        %v2147 = vsel %vm2115, %v2099, %v2131
        %v2148 = vsel %vm2116, %v2100, %v2132
        %v2149 = vsel %vm2117, %v2101, %v2133
        %v2150 = vsel %vm2118, %v2102, %v2134
        %v2151 = vsel %vm2119, %v2103, %v2135
        %v2152 = vsel %vm2120, %v2104, %v2136
        %v2153 = vsel %vm2121, %v2105, %v2137
        %v2154 = vsel %vm2122, %v2106, %v2138
        %v2155 = vmul.f32 %v2139, %v605
        %v2156 = vmul.f32 %v2140, %v610
        %v2157 = vmul.f32 %v2141, %v615
        %v2158 = vmul.f32 %v2142, %v620
        %v2159 = vmul.f32 %v2143, %v625
        %v2160 = vmul.f32 %v2144, %v630
        %v2161 = vmul.f32 %v2145, %v635
        %v2162 = vmul.f32 %v2146, %v640
        %v2163 = vmul.f32 %v2147, %v645
        %v2164 = vmul.f32 %v2148, %v650
        %v2165 = vmul.f32 %v2149, %v655
        %v2166 = vmul.f32 %v2150, %v660
        %v2167 = vmul.f32 %v2151, %v665
        %v2168 = vmul.f32 %v2152, %v670
        %v2169 = vmul.f32 %v2153, %v675
        %v2170 = vmul.f32 %v2154, %v680
        %2171 = vst [vmem:[#allocation3] sm:$0xff] 0.0
        %2172 = vst [vmem:[#allocation3 + $0x8] sm:$0xff] 0.0
        %2173 = vst [vmem:[#allocation3 + $0x10] sm:$0xff] 0.0
        %2174 = vst [vmem:[#allocation3 + $0x18] sm:$0xff] 0.0
        %2175 = vst [vmem:[#allocation3 + $0x20] sm:$0xff] 0.0
        %2176 = vst [vmem:[#allocation3 + $0x28] sm:$0xff] 0.0
        %2177 = vst [vmem:[#allocation3 + $0x30] sm:$0xff] 0.0
        %2178 = vst [vmem:[#allocation3 + $0x38] sm:$0xff] 0.0
        %2179 = vst [vmem:[#allocation3 + $0x40] sm:$0xff] 0.0
        %2180 = vst [vmem:[#allocation3 + $0x48] sm:$0xff] 0.0
        %2181 = vst [vmem:[#allocation3 + $0x50] sm:$0xff] 0.0
        %2182 = vst [vmem:[#allocation3 + $0x58] sm:$0xff] 0.0
        %2183 = vst [vmem:[#allocation3 + $0x60] sm:$0xff] 0.0
        %2184 = vst [vmem:[#allocation3 + $0x68] sm:$0xff] 0.0
        %2185 = vst [vmem:[#allocation3 + $0x70] sm:$0xff] 0.0
        %2186 = vst [vmem:[#allocation3 + $0x78] sm:$0xff] 0.0
        %2187 = vst [vmem:[#allocation3 + $0x80] sm:$0xff] 0.0
        %2188 = vst [vmem:[#allocation3 + $0x88] sm:$0xff] 0.0
        %2189 = vst [vmem:[#allocation3 + $0x90] sm:$0xff] 0.0
        %2190 = vst [vmem:[#allocation3 + $0x98] sm:$0xff] 0.0
        %2191 = vst [vmem:[#allocation3 + $0x10] sm:$0xff] %v2155
        %2192 = vst [vmem:[#allocation3 + $0x18] sm:$0xff] %v2156
        %2193 = vst [vmem:[#allocation3 + $0x20] sm:$0xff] %v2157
        %2194 = vst [vmem:[#allocation3 + $0x28] sm:$0xff] %v2158
        %2195 = vst [vmem:[#allocation3 + $0x30] sm:$0xff] %v2159
        %2196 = vst [vmem:[#allocation3 + $0x38] sm:$0xff] %v2160
        %2197 = vst [vmem:[#allocation3 + $0x40] sm:$0xff] %v2161
        %2198 = vst [vmem:[#allocation3 + $0x48] sm:$0xff] %v2162
        %2199 = vst [vmem:[#allocation3 + $0x50] sm:$0xff] %v2163
        %2200 = vst [vmem:[#allocation3 + $0x58] sm:$0xff] %v2164
        %2201 = vst [vmem:[#allocation3 + $0x60] sm:$0xff] %v2165
        %2202 = vst [vmem:[#allocation3 + $0x68] sm:$0xff] %v2166
        %2203 = vst [vmem:[#allocation3 + $0x70] sm:$0xff] %v2167
        %2204 = vst [vmem:[#allocation3 + $0x78] sm:$0xff] %v2168
        %2205 = vst [vmem:[#allocation3 + $0x80] sm:$0xff] %v2169
        %2206 = vst [vmem:[#allocation3 + $0x88] sm:$0xff] %v2170
        %v2207 = vld [vmem:[#allocation3 + $0x4] sm:$0xff]
        %v2208 = vld [vmem:[#allocation3 + $0xc] sm:$0xff]
        %v2209 = vld [vmem:[#allocation3 + $0x14] sm:$0xff]
        %v2210 = vld [vmem:[#allocation3 + $0x1c] sm:$0xff]
        %v2211 = vld [vmem:[#allocation3 + $0x24] sm:$0xff]
        %v2212 = vld [vmem:[#allocation3 + $0x2c] sm:$0xff]
        %v2213 = vld [vmem:[#allocation3 + $0x34] sm:$0xff]
        %v2214 = vld [vmem:[#allocation3 + $0x3c] sm:$0xff]
        %v2215 = vld [vmem:[#allocation3 + $0x44] sm:$0xff]
        %v2216 = vld [vmem:[#allocation3 + $0x4c] sm:$0xff]
        %v2217 = vld [vmem:[#allocation3 + $0x54] sm:$0xff]
        %v2218 = vld [vmem:[#allocation3 + $0x5c] sm:$0xff]
        %v2219 = vld [vmem:[#allocation3 + $0x64] sm:$0xff]
        %v2220 = vld [vmem:[#allocation3 + $0x6c] sm:$0xff]
        %v2221 = vld [vmem:[#allocation3 + $0x74] sm:$0xff]
        %v2222 = vld [vmem:[#allocation3 + $0x7c] sm:$0xff]
        %v2223 = vpack.c.bf16 %v2208, %v2207
        %v2224 = vpack.c.bf16 %v2210, %v2209
        %v2225 = vpack.c.bf16 %v2212, %v2211
        %v2226 = vpack.c.bf16 %v2214, %v2213
        %v2227 = vpack.c.bf16 %v2216, %v2215
        %v2228 = vpack.c.bf16 %v2218, %v2217
        %v2229 = vpack.c.bf16 %v2220, %v2219
        %v2230 = vpack.c.bf16 %v2222, %v2221
        %v2231 = vld [vmem:[%s6] sm:$0xf]
        %v2232 = vld [vmem:[%s6 + $0x4] sm:$0xf]
        %v2233 = vld [vmem:[%s6 + $0x8] sm:$0xf]
        %v2234 = vld [vmem:[%s6 + $0xc] sm:$0xf]
        %v2235 = vld [vmem:[%s6 + $0x10] sm:$0xf]
        %v2236 = vld [vmem:[%s6 + $0x14] sm:$0xf]
        %v2237 = vld [vmem:[%s6 + $0x18] sm:$0xf]
        %v2238 = vld [vmem:[%s6 + $0x1c] sm:$0xf]
        %v2239 = vld [vmem:[%s6 + $0x20] sm:$0xf]
        %v2240 = vld [vmem:[%s6 + $0x24] sm:$0xf]
        %v2241 = vld [vmem:[%s6 + $0x28] sm:$0xf]
        %v2242 = vld [vmem:[%s6 + $0x2c] sm:$0xf]
        %v2243 = vld [vmem:[%s6 + $0x30] sm:$0xf]
        %v2244 = vld [vmem:[%s6 + $0x34] sm:$0xf]
        %v2245 = vld [vmem:[%s6 + $0x38] sm:$0xf]
        %v2246 = vld [vmem:[%s6 + $0x3c] sm:$0xf]
        %v2247 = vld [vmem:[#allocation3 + $0x5] sm:$0xff]
        %v2248 = vld [vmem:[#allocation3 + $0xd] sm:$0xff]
        %v2249 = vld [vmem:[#allocation3 + $0x15] sm:$0xff]
        %v2250 = vld [vmem:[#allocation3 + $0x1d] sm:$0xff]
        %v2251 = vld [vmem:[#allocation3 + $0x25] sm:$0xff]
        %v2252 = vld [vmem:[#allocation3 + $0x2d] sm:$0xff]
        %v2253 = vld [vmem:[#allocation3 + $0x35] sm:$0xff]
        %v2254 = vld [vmem:[#allocation3 + $0x3d] sm:$0xff]
        %v2255 = vld [vmem:[#allocation3 + $0x45] sm:$0xff]
        %v2256 = vld [vmem:[#allocation3 + $0x4d] sm:$0xff]
        %v2257 = vld [vmem:[#allocation3 + $0x55] sm:$0xff]
        %v2258 = vld [vmem:[#allocation3 + $0x5d] sm:$0xff]
        %v2259 = vld [vmem:[#allocation3 + $0x65] sm:$0xff]
        %v2260 = vld [vmem:[#allocation3 + $0x6d] sm:$0xff]
        %v2261 = vld [vmem:[#allocation3 + $0x75] sm:$0xff]
        %v2262 = vld [vmem:[#allocation3 + $0x7d] sm:$0xff]
        %v2263 = vpack.c.bf16 %v2248, %v2247
        %v2264 = vpack.c.bf16 %v2250, %v2249
        %v2265 = vpack.c.bf16 %v2252, %v2251
        %v2266 = vpack.c.bf16 %v2254, %v2253
        %v2267 = vpack.c.bf16 %v2256, %v2255
        %v2268 = vpack.c.bf16 %v2258, %v2257
        %v2269 = vpack.c.bf16 %v2260, %v2259
        %v2270 = vpack.c.bf16 %v2262, %v2261
        %s2271 = scalar_lea.vmem %s6, 64
        %v2272 = vld [vmem:[%s2271] sm:$0xf]
        %v2273 = vld [vmem:[%s2271 + $0x4] sm:$0xf]
        %v2274 = vld [vmem:[%s2271 + $0x8] sm:$0xf]
        %v2275 = vld [vmem:[%s2271 + $0xc] sm:$0xf]
        %v2276 = vld [vmem:[%s2271 + $0x10] sm:$0xf]
        %v2277 = vld [vmem:[%s2271 + $0x14] sm:$0xf]
        %v2278 = vld [vmem:[%s2271 + $0x18] sm:$0xf]
        %v2279 = vld [vmem:[%s2271 + $0x1c] sm:$0xf]
        %v2280 = vld [vmem:[%s2271 + $0x20] sm:$0xf]
        %v2281 = vld [vmem:[%s2271 + $0x24] sm:$0xf]
        %v2282 = vld [vmem:[%s2271 + $0x28] sm:$0xf]
        %v2283 = vld [vmem:[%s2271 + $0x2c] sm:$0xf]
        %v2284 = vld [vmem:[%s2271 + $0x30] sm:$0xf]
        %v2285 = vld [vmem:[%s2271 + $0x34] sm:$0xf]
        %v2286 = vld [vmem:[%s2271 + $0x38] sm:$0xf]
        %v2287 = vld [vmem:[%s2271 + $0x3c] sm:$0xf]
        %v2304 = vunpack.c.l.b16 %v2272
        %v2305 = vunpack.c.l.b16 %v2273
        %v2306 = vunpack.c.l.b16 %v2274
        %v2307 = vunpack.c.l.b16 %v2275
        %v2308 = vunpack.c.l.b16 %v2276
        %v2309 = vunpack.c.l.b16 %v2277
        %v2310 = vunpack.c.l.b16 %v2278
        %v2311 = vunpack.c.l.b16 %v2279
        %v2312 = vunpack.c.l.b16 %v2280
        %v2313 = vunpack.c.l.b16 %v2281
        %v2314 = vunpack.c.l.b16 %v2282
        %v2315 = vunpack.c.l.b16 %v2283
        %v2316 = vunpack.c.l.b16 %v2284
        %v2317 = vunpack.c.l.b16 %v2285
        %v2318 = vunpack.c.l.b16 %v2286
        %v2319 = vunpack.c.l.b16 %v2287
        %v2320 = vpack.c.b16 %v2305, %v2304
        %v2321 = vpack.c.b16 %v2307, %v2306
        %v2322 = vpack.c.b16 %v2309, %v2308
        %v2323 = vpack.c.b16 %v2311, %v2310
        %v2324 = vpack.c.b16 %v2313, %v2312
        %v2325 = vpack.c.b16 %v2315, %v2314
        %v2326 = vpack.c.b16 %v2317, %v2316
        %v2327 = vpack.c.b16 %v2319, %v2318
        %2336 = vmatpush.bf16.msra.mxu0 %v2327
        %2337 = vmatpush.bf16.msra.mxu0 %v2326
        %2338 = vmatpush.bf16.msra.mxu0 %v2325
        %2339 = vmatpush.bf16.msra.mxu0 %v2324
        %2340 = vmatpush.bf16.msra.mxu0 %v2323
        %2341 = vmatpush.bf16.msra.mxu0 %v2322
        %2342 = vmatpush.bf16.msra.mxu0 %v2321
        %2343 = vmatpush.bf16.msra.mxu0 %v2320
        %2344 = vmatmul.bf16.gmra.mxu0 %v2263
        %v2345 = vpop.f32.mrf.mxu0
        %v2346 = vadd.f32 0.0, %v2345
        %v2347 = vpop.f32.mrf.mxu0
        %v2348 = vadd.f32 0.0, %v2347
        %2349 = vmatmul.bf16.gmra.mxu0 %v2264
        %v2350 = vpop.f32.mrf.mxu0
        %v2351 = vadd.f32 0.0, %v2350
        %v2352 = vpop.f32.mrf.mxu0
        %v2353 = vadd.f32 0.0, %v2352
        %2354 = vmatmul.bf16.gmra.mxu0 %v2265
        %v2355 = vpop.f32.mrf.mxu0
        %v2356 = vadd.f32 0.0, %v2355
        %v2357 = vpop.f32.mrf.mxu0
        %v2358 = vadd.f32 0.0, %v2357
        %2359 = vmatmul.bf16.gmra.mxu0 %v2266
        %v2360 = vpop.f32.mrf.mxu0
        %v2361 = vadd.f32 0.0, %v2360
        %v2362 = vpop.f32.mrf.mxu0
        %v2363 = vadd.f32 0.0, %v2362
        %2364 = vmatmul.bf16.gmra.mxu0 %v2267
        %v2365 = vpop.f32.mrf.mxu0
        %v2366 = vadd.f32 0.0, %v2365
        %v2367 = vpop.f32.mrf.mxu0
        %v2368 = vadd.f32 0.0, %v2367
        %2369 = vmatmul.bf16.gmra.mxu0 %v2268
        %v2370 = vpop.f32.mrf.mxu0
        %v2371 = vadd.f32 0.0, %v2370
        %v2372 = vpop.f32.mrf.mxu0
        %v2373 = vadd.f32 0.0, %v2372
        %2374 = vmatmul.bf16.gmra.mxu0 %v2269
        %v2375 = vpop.f32.mrf.mxu0
        %v2376 = vadd.f32 0.0, %v2375
        %v2377 = vpop.f32.mrf.mxu0
        %v2378 = vadd.f32 0.0, %v2377
        %2379 = vmatmul.bf16.gmra.mxu0 %v2270
        %v2380 = vpop.f32.mrf.mxu0
        %v2381 = vadd.f32 0.0, %v2380
        %v2382 = vpop.f32.mrf.mxu0
        %v2383 = vadd.f32 0.0, %v2382
        %2384 = vdwg.mxu0
        %v2401 = vunpack.c.l.b16 %v2231
        %v2402 = vunpack.c.l.b16 %v2232
        %v2403 = vunpack.c.l.b16 %v2233
        %v2404 = vunpack.c.l.b16 %v2234
        %v2405 = vunpack.c.l.b16 %v2235
        %v2406 = vunpack.c.l.b16 %v2236
        %v2407 = vunpack.c.l.b16 %v2237
        %v2408 = vunpack.c.l.b16 %v2238
        %v2409 = vunpack.c.l.b16 %v2239
        %v2410 = vunpack.c.l.b16 %v2240
        %v2411 = vunpack.c.l.b16 %v2241
        %v2412 = vunpack.c.l.b16 %v2242
        %v2413 = vunpack.c.l.b16 %v2243
        %v2414 = vunpack.c.l.b16 %v2244
        %v2415 = vunpack.c.l.b16 %v2245
        %v2416 = vunpack.c.l.b16 %v2246
        %v2417 = vpack.c.b16 %v2402, %v2401
        %v2418 = vpack.c.b16 %v2404, %v2403
        %v2419 = vpack.c.b16 %v2406, %v2405
        %v2420 = vpack.c.b16 %v2408, %v2407
        %v2421 = vpack.c.b16 %v2410, %v2409
        %v2422 = vpack.c.b16 %v2412, %v2411
        %v2423 = vpack.c.b16 %v2414, %v2413
        %v2424 = vpack.c.b16 %v2416, %v2415
        %2433 = vmatpush.bf16.msra.mxu0 %v2424
        %2434 = vmatpush.bf16.msra.mxu0 %v2423
        %2435 = vmatpush.bf16.msra.mxu0 %v2422
        %2436 = vmatpush.bf16.msra.mxu0 %v2421
        %2437 = vmatpush.bf16.msra.mxu0 %v2420
        %2438 = vmatpush.bf16.msra.mxu0 %v2419
        %2439 = vmatpush.bf16.msra.mxu0 %v2418
        %2440 = vmatpush.bf16.msra.mxu0 %v2417
        %2441 = vmatmul.bf16.gmra.mxu0 %v2223
        %v2442 = vpop.f32.mrf.mxu0
        %v2443 = vadd.f32 %v2346, %v2442
        %v2444 = vpop.f32.mrf.mxu0
        %v2445 = vadd.f32 %v2348, %v2444
        %2446 = vmatmul.bf16.gmra.mxu0 %v2224
        %v2447 = vpop.f32.mrf.mxu0
        %v2448 = vadd.f32 %v2351, %v2447
        %v2449 = vpop.f32.mrf.mxu0
        %v2450 = vadd.f32 %v2353, %v2449
        %2451 = vmatmul.bf16.gmra.mxu0 %v2225
        %v2452 = vpop.f32.mrf.mxu0
        %v2453 = vadd.f32 %v2356, %v2452
        %v2454 = vpop.f32.mrf.mxu0
        %v2455 = vadd.f32 %v2358, %v2454
        %2456 = vmatmul.bf16.gmra.mxu0 %v2226
        %v2457 = vpop.f32.mrf.mxu0
        %v2458 = vadd.f32 %v2361, %v2457
        %v2459 = vpop.f32.mrf.mxu0
        %v2460 = vadd.f32 %v2363, %v2459
        %2461 = vmatmul.bf16.gmra.mxu0 %v2227
        %v2462 = vpop.f32.mrf.mxu0
        %v2463 = vadd.f32 %v2366, %v2462
        %v2464 = vpop.f32.mrf.mxu0
        %v2465 = vadd.f32 %v2368, %v2464
        %2466 = vmatmul.bf16.gmra.mxu0 %v2228
        %v2467 = vpop.f32.mrf.mxu0
        %v2468 = vadd.f32 %v2371, %v2467
        %v2469 = vpop.f32.mrf.mxu0
        %v2470 = vadd.f32 %v2373, %v2469
        %2471 = vmatmul.bf16.gmra.mxu0 %v2229
        %v2472 = vpop.f32.mrf.mxu0
        %v2473 = vadd.f32 %v2376, %v2472
        %v2474 = vpop.f32.mrf.mxu0
        %v2475 = vadd.f32 %v2378, %v2474
        %2476 = vmatmul.bf16.gmra.mxu0 %v2230
        %v2477 = vpop.f32.mrf.mxu0
        %v2478 = vadd.f32 %v2381, %v2477
        %v2479 = vpop.f32.mrf.mxu0
        %v2480 = vadd.f32 %v2383, %v2479
        %2481 = vdwg.mxu0
        %v2482 = vld [vmem:[#allocation3 + $0x6] sm:$0xff]
        %v2483 = vld [vmem:[#allocation3 + $0xe] sm:$0xff]
        %v2484 = vld [vmem:[#allocation3 + $0x16] sm:$0xff]
        %v2485 = vld [vmem:[#allocation3 + $0x1e] sm:$0xff]
        %v2486 = vld [vmem:[#allocation3 + $0x26] sm:$0xff]
        %v2487 = vld [vmem:[#allocation3 + $0x2e] sm:$0xff]
        %v2488 = vld [vmem:[#allocation3 + $0x36] sm:$0xff]
        %v2489 = vld [vmem:[#allocation3 + $0x3e] sm:$0xff]
        %v2490 = vld [vmem:[#allocation3 + $0x46] sm:$0xff]
        %v2491 = vld [vmem:[#allocation3 + $0x4e] sm:$0xff]
        %v2492 = vld [vmem:[#allocation3 + $0x56] sm:$0xff]
        %v2493 = vld [vmem:[#allocation3 + $0x5e] sm:$0xff]
        %v2494 = vld [vmem:[#allocation3 + $0x66] sm:$0xff]
        %v2495 = vld [vmem:[#allocation3 + $0x6e] sm:$0xff]
        %v2496 = vld [vmem:[#allocation3 + $0x76] sm:$0xff]
        %v2497 = vld [vmem:[#allocation3 + $0x7e] sm:$0xff]
        %v2498 = vpack.c.bf16 %v2483, %v2482
        %v2499 = vpack.c.bf16 %v2485, %v2484
        %v2500 = vpack.c.bf16 %v2487, %v2486
        %v2501 = vpack.c.bf16 %v2489, %v2488
        %v2502 = vpack.c.bf16 %v2491, %v2490
        %v2503 = vpack.c.bf16 %v2493, %v2492
        %v2504 = vpack.c.bf16 %v2495, %v2494
        %v2505 = vpack.c.bf16 %v2497, %v2496
        %s2506 = scalar_lea.vmem %s6, 128
        %v2507 = vld [vmem:[%s2506] sm:$0xf]
        %v2508 = vld [vmem:[%s2506 + $0x4] sm:$0xf]
        %v2509 = vld [vmem:[%s2506 + $0x8] sm:$0xf]
        %v2510 = vld [vmem:[%s2506 + $0xc] sm:$0xf]
        %v2511 = vld [vmem:[%s2506 + $0x10] sm:$0xf]
        %v2512 = vld [vmem:[%s2506 + $0x14] sm:$0xf]
        %v2513 = vld [vmem:[%s2506 + $0x18] sm:$0xf]
        %v2514 = vld [vmem:[%s2506 + $0x1c] sm:$0xf]
        %v2515 = vld [vmem:[%s2506 + $0x20] sm:$0xf]
        %v2516 = vld [vmem:[%s2506 + $0x24] sm:$0xf]
        %v2517 = vld [vmem:[%s2506 + $0x28] sm:$0xf]
        %v2518 = vld [vmem:[%s2506 + $0x2c] sm:$0xf]
        %v2519 = vld [vmem:[%s2506 + $0x30] sm:$0xf]
        %v2520 = vld [vmem:[%s2506 + $0x34] sm:$0xf]
        %v2521 = vld [vmem:[%s2506 + $0x38] sm:$0xf]
        %v2522 = vld [vmem:[%s2506 + $0x3c] sm:$0xf]
        %v2539 = vunpack.c.l.b16 %v2507
        %v2540 = vunpack.c.l.b16 %v2508
        %v2541 = vunpack.c.l.b16 %v2509
        %v2542 = vunpack.c.l.b16 %v2510
        %v2543 = vunpack.c.l.b16 %v2511
        %v2544 = vunpack.c.l.b16 %v2512
        %v2545 = vunpack.c.l.b16 %v2513
        %v2546 = vunpack.c.l.b16 %v2514
        %v2547 = vunpack.c.l.b16 %v2515
        %v2548 = vunpack.c.l.b16 %v2516
        %v2549 = vunpack.c.l.b16 %v2517
        %v2550 = vunpack.c.l.b16 %v2518
        %v2551 = vunpack.c.l.b16 %v2519
        %v2552 = vunpack.c.l.b16 %v2520
        %v2553 = vunpack.c.l.b16 %v2521
        %v2554 = vunpack.c.l.b16 %v2522
        %v2555 = vpack.c.b16 %v2540, %v2539
        %v2556 = vpack.c.b16 %v2542, %v2541
        %v2557 = vpack.c.b16 %v2544, %v2543
        %v2558 = vpack.c.b16 %v2546, %v2545
        %v2559 = vpack.c.b16 %v2548, %v2547
        %v2560 = vpack.c.b16 %v2550, %v2549
        %v2561 = vpack.c.b16 %v2552, %v2551
        %v2562 = vpack.c.b16 %v2554, %v2553
        %2571 = vmatpush.bf16.msra.mxu0 %v2562
        %2572 = vmatpush.bf16.msra.mxu0 %v2561
        %2573 = vmatpush.bf16.msra.mxu0 %v2560
        %2574 = vmatpush.bf16.msra.mxu0 %v2559
        %2575 = vmatpush.bf16.msra.mxu0 %v2558
        %2576 = vmatpush.bf16.msra.mxu0 %v2557
        %2577 = vmatpush.bf16.msra.mxu0 %v2556
        %2578 = vmatpush.bf16.msra.mxu0 %v2555
        %2579 = vmatmul.bf16.gmra.mxu0 %v2498
        %v2580 = vpop.f32.mrf.mxu0
        %v2581 = vadd.f32 0.0, %v2580
        %v2582 = vpop.f32.mrf.mxu0
        %v2583 = vadd.f32 0.0, %v2582
        %2584 = vmatmul.bf16.gmra.mxu0 %v2499
        %v2585 = vpop.f32.mrf.mxu0
        %v2586 = vadd.f32 0.0, %v2585
        %v2587 = vpop.f32.mrf.mxu0
        %v2588 = vadd.f32 0.0, %v2587
        %2589 = vmatmul.bf16.gmra.mxu0 %v2500
        %v2590 = vpop.f32.mrf.mxu0
        %v2591 = vadd.f32 0.0, %v2590
        %v2592 = vpop.f32.mrf.mxu0
        %v2593 = vadd.f32 0.0, %v2592
        %2594 = vmatmul.bf16.gmra.mxu0 %v2501
        %v2595 = vpop.f32.mrf.mxu0
        %v2596 = vadd.f32 0.0, %v2595
        %v2597 = vpop.f32.mrf.mxu0
        %v2598 = vadd.f32 0.0, %v2597
        %2599 = vmatmul.bf16.gmra.mxu0 %v2502
        %v2600 = vpop.f32.mrf.mxu0
        %v2601 = vadd.f32 0.0, %v2600
        %v2602 = vpop.f32.mrf.mxu0
        %v2603 = vadd.f32 0.0, %v2602
        %2604 = vmatmul.bf16.gmra.mxu0 %v2503
        %v2605 = vpop.f32.mrf.mxu0
        %v2606 = vadd.f32 0.0, %v2605
        %v2607 = vpop.f32.mrf.mxu0
        %v2608 = vadd.f32 0.0, %v2607
        %2609 = vmatmul.bf16.gmra.mxu0 %v2504
        %v2610 = vpop.f32.mrf.mxu0
        %v2611 = vadd.f32 0.0, %v2610
        %v2612 = vpop.f32.mrf.mxu0
        %v2613 = vadd.f32 0.0, %v2612
        %2614 = vmatmul.bf16.gmra.mxu0 %v2505
        %v2615 = vpop.f32.mrf.mxu0
        %v2616 = vadd.f32 0.0, %v2615
        %v2617 = vpop.f32.mrf.mxu0
        %v2618 = vadd.f32 0.0, %v2617
        %2619 = vdwg.mxu0
        %v2620 = vadd.f32 %v2443, %v2581
        %v2621 = vadd.f32 %v2445, %v2583
        %v2622 = vadd.f32 %v2448, %v2586
        %v2623 = vadd.f32 %v2450, %v2588
        %v2624 = vadd.f32 %v2453, %v2591
        %v2625 = vadd.f32 %v2455, %v2593
        %v2626 = vadd.f32 %v2458, %v2596
        %v2627 = vadd.f32 %v2460, %v2598
        %v2628 = vadd.f32 %v2463, %v2601
        %v2629 = vadd.f32 %v2465, %v2603
        %v2630 = vadd.f32 %v2468, %v2606
        %v2631 = vadd.f32 %v2470, %v2608
        %v2632 = vadd.f32 %v2473, %v2611
        %v2633 = vadd.f32 %v2475, %v2613
        %v2634 = vadd.f32 %v2478, %v2616
        %v2635 = vadd.f32 %v2480, %v2618
        %v2636 = vld [vmem:[#allocation3 + $0xf] sm:$0xff]
        %v2637 = vld [vmem:[#allocation3 + $0x17] sm:$0xff]
        %v2638 = vld [vmem:[#allocation3 + $0x1f] sm:$0xff]
        %v2639 = vld [vmem:[#allocation3 + $0x27] sm:$0xff]
        %v2640 = vld [vmem:[#allocation3 + $0x2f] sm:$0xff]
        %v2641 = vld [vmem:[#allocation3 + $0x37] sm:$0xff]
        %v2642 = vld [vmem:[#allocation3 + $0x3f] sm:$0xff]
        %v2643 = vld [vmem:[#allocation3 + $0x47] sm:$0xff]
        %v2644 = vld [vmem:[#allocation3 + $0x4f] sm:$0xff]
        %v2645 = vld [vmem:[#allocation3 + $0x57] sm:$0xff]
        %v2646 = vld [vmem:[#allocation3 + $0x5f] sm:$0xff]
        %v2647 = vld [vmem:[#allocation3 + $0x67] sm:$0xff]
        %v2648 = vld [vmem:[#allocation3 + $0x6f] sm:$0xff]
        %v2649 = vld [vmem:[#allocation3 + $0x77] sm:$0xff]
        %v2650 = vld [vmem:[#allocation3 + $0x7f] sm:$0xff]
        %v2651 = vld [vmem:[#allocation3 + $0x87] sm:$0xff]
        %v2652 = vpack.c.bf16 %v2637, %v2636
        %v2653 = vpack.c.bf16 %v2639, %v2638
        %v2654 = vpack.c.bf16 %v2641, %v2640
        %v2655 = vpack.c.bf16 %v2643, %v2642
        %v2656 = vpack.c.bf16 %v2645, %v2644
        %v2657 = vpack.c.bf16 %v2647, %v2646
        %v2658 = vpack.c.bf16 %v2649, %v2648
        %v2659 = vpack.c.bf16 %v2651, %v2650
        %s2660 = scalar_lea.vmem %s6, 192
        %v2661 = vld [vmem:[%s2660] sm:$0xf]
        %v2662 = vld [vmem:[%s2660 + $0x4] sm:$0xf]
        %v2663 = vld [vmem:[%s2660 + $0x8] sm:$0xf]
        %v2664 = vld [vmem:[%s2660 + $0xc] sm:$0xf]
        %v2665 = vld [vmem:[%s2660 + $0x10] sm:$0xf]
        %v2666 = vld [vmem:[%s2660 + $0x14] sm:$0xf]
        %v2667 = vld [vmem:[%s2660 + $0x18] sm:$0xf]
        %v2668 = vld [vmem:[%s2660 + $0x1c] sm:$0xf]
        %v2669 = vld [vmem:[%s2660 + $0x20] sm:$0xf]
        %v2670 = vld [vmem:[%s2660 + $0x24] sm:$0xf]
        %v2671 = vld [vmem:[%s2660 + $0x28] sm:$0xf]
        %v2672 = vld [vmem:[%s2660 + $0x2c] sm:$0xf]
        %v2673 = vld [vmem:[%s2660 + $0x30] sm:$0xf]
        %v2674 = vld [vmem:[%s2660 + $0x34] sm:$0xf]
        %v2675 = vld [vmem:[%s2660 + $0x38] sm:$0xf]
        %v2676 = vld [vmem:[%s2660 + $0x3c] sm:$0xf]
        %v2693 = vunpack.c.l.b16 %v2661
        %v2694 = vunpack.c.l.b16 %v2662
        %v2695 = vunpack.c.l.b16 %v2663
        %v2696 = vunpack.c.l.b16 %v2664
        %v2697 = vunpack.c.l.b16 %v2665
        %v2698 = vunpack.c.l.b16 %v2666
        %v2699 = vunpack.c.l.b16 %v2667
        %v2700 = vunpack.c.l.b16 %v2668
        %v2701 = vunpack.c.l.b16 %v2669
        %v2702 = vunpack.c.l.b16 %v2670
        %v2703 = vunpack.c.l.b16 %v2671
        %v2704 = vunpack.c.l.b16 %v2672
        %v2705 = vunpack.c.l.b16 %v2673
        %v2706 = vunpack.c.l.b16 %v2674
        %v2707 = vunpack.c.l.b16 %v2675
        %v2708 = vunpack.c.l.b16 %v2676
        %v2709 = vpack.c.b16 %v2694, %v2693
        %v2710 = vpack.c.b16 %v2696, %v2695
        %v2711 = vpack.c.b16 %v2698, %v2697
        %v2712 = vpack.c.b16 %v2700, %v2699
        %v2713 = vpack.c.b16 %v2702, %v2701
        %v2714 = vpack.c.b16 %v2704, %v2703
        %v2715 = vpack.c.b16 %v2706, %v2705
        %v2716 = vpack.c.b16 %v2708, %v2707
        %2725 = vmatpush.bf16.msra.mxu0 %v2716
        %2726 = vmatpush.bf16.msra.mxu0 %v2715
        %2727 = vmatpush.bf16.msra.mxu0 %v2714
        %2728 = vmatpush.bf16.msra.mxu0 %v2713
        %2729 = vmatpush.bf16.msra.mxu0 %v2712
        %2730 = vmatpush.bf16.msra.mxu0 %v2711
        %2731 = vmatpush.bf16.msra.mxu0 %v2710
        %2732 = vmatpush.bf16.msra.mxu0 %v2709
        %2733 = vmatmul.bf16.gmra.mxu0 %v2652
        %v2734 = vpop.f32.mrf.mxu0
        %v2735 = vadd.f32 0.0, %v2734
        %v2736 = vpop.f32.mrf.mxu0
        %v2737 = vadd.f32 0.0, %v2736
        %2738 = vmatmul.bf16.gmra.mxu0 %v2653
        %v2739 = vpop.f32.mrf.mxu0
        %v2740 = vadd.f32 0.0, %v2739
        %v2741 = vpop.f32.mrf.mxu0
        %v2742 = vadd.f32 0.0, %v2741
        %2743 = vmatmul.bf16.gmra.mxu0 %v2654
        %v2744 = vpop.f32.mrf.mxu0
        %v2745 = vadd.f32 0.0, %v2744
        %v2746 = vpop.f32.mrf.mxu0
        %v2747 = vadd.f32 0.0, %v2746
        %2748 = vmatmul.bf16.gmra.mxu0 %v2655
        %v2749 = vpop.f32.mrf.mxu0
        %v2750 = vadd.f32 0.0, %v2749
        %v2751 = vpop.f32.mrf.mxu0
        %v2752 = vadd.f32 0.0, %v2751
        %2753 = vmatmul.bf16.gmra.mxu0 %v2656
        %v2754 = vpop.f32.mrf.mxu0
        %v2755 = vadd.f32 0.0, %v2754
        %v2756 = vpop.f32.mrf.mxu0
        %v2757 = vadd.f32 0.0, %v2756
        %2758 = vmatmul.bf16.gmra.mxu0 %v2657
        %v2759 = vpop.f32.mrf.mxu0
        %v2760 = vadd.f32 0.0, %v2759
        %v2761 = vpop.f32.mrf.mxu0
        %v2762 = vadd.f32 0.0, %v2761
        %2763 = vmatmul.bf16.gmra.mxu0 %v2658
        %v2764 = vpop.f32.mrf.mxu0
        %v2765 = vadd.f32 0.0, %v2764
        %v2766 = vpop.f32.mrf.mxu0
        %v2767 = vadd.f32 0.0, %v2766
        %2768 = vmatmul.bf16.gmra.mxu0 %v2659
        %v2769 = vpop.f32.mrf.mxu0
        %v2770 = vadd.f32 0.0, %v2769
        %v2771 = vpop.f32.mrf.mxu0
        %v2772 = vadd.f32 0.0, %v2771
        %2773 = vdwg.mxu0
        %v2774 = vadd.f32 %v2620, %v2735
        %v2775 = vadd.f32 %v2621, %v2737
        %v2776 = vadd.f32 %v2622, %v2740
        %v2777 = vadd.f32 %v2623, %v2742
        %v2778 = vadd.f32 %v2624, %v2745
        %v2779 = vadd.f32 %v2625, %v2747
        %v2780 = vadd.f32 %v2626, %v2750
        %v2781 = vadd.f32 %v2627, %v2752
        %v2782 = vadd.f32 %v2628, %v2755
        %v2783 = vadd.f32 %v2629, %v2757
        %v2784 = vadd.f32 %v2630, %v2760
        %v2785 = vadd.f32 %v2631, %v2762
        %v2786 = vadd.f32 %v2632, %v2765
        %v2787 = vadd.f32 %v2633, %v2767
        %v2788 = vadd.f32 %v2634, %v2770
        %v2789 = vadd.f32 %v2635, %v2772
        %v2790 = vld [vmem:[#allocation3 + $0x10] sm:$0xff]
        %v2791 = vld [vmem:[#allocation3 + $0x18] sm:$0xff]
        %v2792 = vld [vmem:[#allocation3 + $0x20] sm:$0xff]
        %v2793 = vld [vmem:[#allocation3 + $0x28] sm:$0xff]
        %v2794 = vld [vmem:[#allocation3 + $0x30] sm:$0xff]
        %v2795 = vld [vmem:[#allocation3 + $0x38] sm:$0xff]
        %v2796 = vld [vmem:[#allocation3 + $0x40] sm:$0xff]
        %v2797 = vld [vmem:[#allocation3 + $0x48] sm:$0xff]
        %v2798 = vld [vmem:[#allocation3 + $0x50] sm:$0xff]
        %v2799 = vld [vmem:[#allocation3 + $0x58] sm:$0xff]
        %v2800 = vld [vmem:[#allocation3 + $0x60] sm:$0xff]
        %v2801 = vld [vmem:[#allocation3 + $0x68] sm:$0xff]
        %v2802 = vld [vmem:[#allocation3 + $0x70] sm:$0xff]
        %v2803 = vld [vmem:[#allocation3 + $0x78] sm:$0xff]
        %v2804 = vld [vmem:[#allocation3 + $0x80] sm:$0xff]
        %v2805 = vld [vmem:[#allocation3 + $0x88] sm:$0xff]
        %v2806 = vpack.c.bf16 %v2791, %v2790
        %v2807 = vpack.c.bf16 %v2793, %v2792
        %v2808 = vpack.c.bf16 %v2795, %v2794
        %v2809 = vpack.c.bf16 %v2797, %v2796
        %v2810 = vpack.c.bf16 %v2799, %v2798
        %v2811 = vpack.c.bf16 %v2801, %v2800
        %v2812 = vpack.c.bf16 %v2803, %v2802
        %v2813 = vpack.c.bf16 %v2805, %v2804
        %s2814 = scalar_lea.vmem %s6, 256
        %v2815 = vld [vmem:[%s2814] sm:$0xf]
        %v2816 = vld [vmem:[%s2814 + $0x4] sm:$0xf]
        %v2817 = vld [vmem:[%s2814 + $0x8] sm:$0xf]
        %v2818 = vld [vmem:[%s2814 + $0xc] sm:$0xf]
        %v2819 = vld [vmem:[%s2814 + $0x10] sm:$0xf]
        %v2820 = vld [vmem:[%s2814 + $0x14] sm:$0xf]
        %v2821 = vld [vmem:[%s2814 + $0x18] sm:$0xf]
        %v2822 = vld [vmem:[%s2814 + $0x1c] sm:$0xf]
        %v2823 = vld [vmem:[%s2814 + $0x20] sm:$0xf]
        %v2824 = vld [vmem:[%s2814 + $0x24] sm:$0xf]
        %v2825 = vld [vmem:[%s2814 + $0x28] sm:$0xf]
        %v2826 = vld [vmem:[%s2814 + $0x2c] sm:$0xf]
        %v2827 = vld [vmem:[%s2814 + $0x30] sm:$0xf]
        %v2828 = vld [vmem:[%s2814 + $0x34] sm:$0xf]
        %v2829 = vld [vmem:[%s2814 + $0x38] sm:$0xf]
        %v2830 = vld [vmem:[%s2814 + $0x3c] sm:$0xf]
        %v2847 = vunpack.c.l.b16 %v2815
        %v2848 = vunpack.c.l.b16 %v2816
        %v2849 = vunpack.c.l.b16 %v2817
        %v2850 = vunpack.c.l.b16 %v2818
        %v2851 = vunpack.c.l.b16 %v2819
        %v2852 = vunpack.c.l.b16 %v2820
        %v2853 = vunpack.c.l.b16 %v2821
        %v2854 = vunpack.c.l.b16 %v2822
        %v2855 = vunpack.c.l.b16 %v2823
        %v2856 = vunpack.c.l.b16 %v2824
        %v2857 = vunpack.c.l.b16 %v2825
        %v2858 = vunpack.c.l.b16 %v2826
        %v2859 = vunpack.c.l.b16 %v2827
        %v2860 = vunpack.c.l.b16 %v2828
        %v2861 = vunpack.c.l.b16 %v2829
        %v2862 = vunpack.c.l.b16 %v2830
        %v2863 = vpack.c.b16 %v2848, %v2847
        %v2864 = vpack.c.b16 %v2850, %v2849
        %v2865 = vpack.c.b16 %v2852, %v2851
        %v2866 = vpack.c.b16 %v2854, %v2853
        %v2867 = vpack.c.b16 %v2856, %v2855
        %v2868 = vpack.c.b16 %v2858, %v2857
        %v2869 = vpack.c.b16 %v2860, %v2859
        %v2870 = vpack.c.b16 %v2862, %v2861
        %2879 = vmatpush.bf16.msra.mxu0 %v2870
        %2880 = vmatpush.bf16.msra.mxu0 %v2869
        %2881 = vmatpush.bf16.msra.mxu0 %v2868
        %2882 = vmatpush.bf16.msra.mxu0 %v2867
        %2883 = vmatpush.bf16.msra.mxu0 %v2866
        %2884 = vmatpush.bf16.msra.mxu0 %v2865
        %2885 = vmatpush.bf16.msra.mxu0 %v2864
        %2886 = vmatpush.bf16.msra.mxu0 %v2863
        %2887 = vmatmul.bf16.gmra.mxu0 %v2806
        %v2888 = vpop.f32.mrf.mxu0
        %v2889 = vadd.f32 0.0, %v2888
        %v2890 = vpop.f32.mrf.mxu0
        %v2891 = vadd.f32 0.0, %v2890
        %2892 = vmatmul.bf16.gmra.mxu0 %v2807
        %v2893 = vpop.f32.mrf.mxu0
        %v2894 = vadd.f32 0.0, %v2893
        %v2895 = vpop.f32.mrf.mxu0
        %v2896 = vadd.f32 0.0, %v2895
        %2897 = vmatmul.bf16.gmra.mxu0 %v2808
        %v2898 = vpop.f32.mrf.mxu0
        %v2899 = vadd.f32 0.0, %v2898
        %v2900 = vpop.f32.mrf.mxu0
        %v2901 = vadd.f32 0.0, %v2900
        %2902 = vmatmul.bf16.gmra.mxu0 %v2809
        %v2903 = vpop.f32.mrf.mxu0
        %v2904 = vadd.f32 0.0, %v2903
        %v2905 = vpop.f32.mrf.mxu0
        %v2906 = vadd.f32 0.0, %v2905
        %2907 = vmatmul.bf16.gmra.mxu0 %v2810
        %v2908 = vpop.f32.mrf.mxu0
        %v2909 = vadd.f32 0.0, %v2908
        %v2910 = vpop.f32.mrf.mxu0
        %v2911 = vadd.f32 0.0, %v2910
        %2912 = vmatmul.bf16.gmra.mxu0 %v2811
        %v2913 = vpop.f32.mrf.mxu0
        %v2914 = vadd.f32 0.0, %v2913
        %v2915 = vpop.f32.mrf.mxu0
        %v2916 = vadd.f32 0.0, %v2915
        %2917 = vmatmul.bf16.gmra.mxu0 %v2812
        %v2918 = vpop.f32.mrf.mxu0
        %v2919 = vadd.f32 0.0, %v2918
        %v2920 = vpop.f32.mrf.mxu0
        %v2921 = vadd.f32 0.0, %v2920
        %2922 = vmatmul.bf16.gmra.mxu0 %v2813
        %v2923 = vpop.f32.mrf.mxu0
        %v2924 = vadd.f32 0.0, %v2923
        %v2925 = vpop.f32.mrf.mxu0
        %v2926 = vadd.f32 0.0, %v2925
        %2927 = vdwg.mxu0
        %v2928 = vadd.f32 %v2774, %v2889
        %v2929 = vadd.f32 %v2775, %v2891
        %v2930 = vadd.f32 %v2776, %v2894
        %v2931 = vadd.f32 %v2777, %v2896
        %v2932 = vadd.f32 %v2778, %v2899
        %v2933 = vadd.f32 %v2779, %v2901
        %v2934 = vadd.f32 %v2780, %v2904
        %v2935 = vadd.f32 %v2781, %v2906
        %v2936 = vadd.f32 %v2782, %v2909
        %v2937 = vadd.f32 %v2783, %v2911
        %v2938 = vadd.f32 %v2784, %v2914
        %v2939 = vadd.f32 %v2785, %v2916
        %v2940 = vadd.f32 %v2786, %v2919
        %v2941 = vadd.f32 %v2787, %v2921
        %v2942 = vadd.f32 %v2788, %v2924
        %v2943 = vadd.f32 %v2789, %v2926
        %v2944 = vld [vmem:[#allocation3 + $0x11] sm:$0xff]
        %v2945 = vld [vmem:[#allocation3 + $0x19] sm:$0xff]
        %v2946 = vld [vmem:[#allocation3 + $0x21] sm:$0xff]
        %v2947 = vld [vmem:[#allocation3 + $0x29] sm:$0xff]
        %v2948 = vld [vmem:[#allocation3 + $0x31] sm:$0xff]
        %v2949 = vld [vmem:[#allocation3 + $0x39] sm:$0xff]
        %v2950 = vld [vmem:[#allocation3 + $0x41] sm:$0xff]
        %v2951 = vld [vmem:[#allocation3 + $0x49] sm:$0xff]
        %v2952 = vld [vmem:[#allocation3 + $0x51] sm:$0xff]
        %v2953 = vld [vmem:[#allocation3 + $0x59] sm:$0xff]
        %v2954 = vld [vmem:[#allocation3 + $0x61] sm:$0xff]
        %v2955 = vld [vmem:[#allocation3 + $0x69] sm:$0xff]
        %v2956 = vld [vmem:[#allocation3 + $0x71] sm:$0xff]
        %v2957 = vld [vmem:[#allocation3 + $0x79] sm:$0xff]
        %v2958 = vld [vmem:[#allocation3 + $0x81] sm:$0xff]
        %v2959 = vld [vmem:[#allocation3 + $0x89] sm:$0xff]
        %v2960 = vpack.c.bf16 %v2945, %v2944
        %v2961 = vpack.c.bf16 %v2947, %v2946
        %v2962 = vpack.c.bf16 %v2949, %v2948
        %v2963 = vpack.c.bf16 %v2951, %v2950
        %v2964 = vpack.c.bf16 %v2953, %v2952
        %v2965 = vpack.c.bf16 %v2955, %v2954
        %v2966 = vpack.c.bf16 %v2957, %v2956
        %v2967 = vpack.c.bf16 %v2959, %v2958
        %s2968 = scalar_lea.vmem %s6, 320
        %v2969 = vld [vmem:[%s2968] sm:$0xf]
        %v2970 = vld [vmem:[%s2968 + $0x4] sm:$0xf]
        %v2971 = vld [vmem:[%s2968 + $0x8] sm:$0xf]
        %v2972 = vld [vmem:[%s2968 + $0xc] sm:$0xf]
        %v2973 = vld [vmem:[%s2968 + $0x10] sm:$0xf]
        %v2974 = vld [vmem:[%s2968 + $0x14] sm:$0xf]
        %v2975 = vld [vmem:[%s2968 + $0x18] sm:$0xf]
        %v2976 = vld [vmem:[%s2968 + $0x1c] sm:$0xf]
        %v2977 = vld [vmem:[%s2968 + $0x20] sm:$0xf]
        %v2978 = vld [vmem:[%s2968 + $0x24] sm:$0xf]
        %v2979 = vld [vmem:[%s2968 + $0x28] sm:$0xf]
        %v2980 = vld [vmem:[%s2968 + $0x2c] sm:$0xf]
        %v2981 = vld [vmem:[%s2968 + $0x30] sm:$0xf]
        %v2982 = vld [vmem:[%s2968 + $0x34] sm:$0xf]
        %v2983 = vld [vmem:[%s2968 + $0x38] sm:$0xf]
        %v2984 = vld [vmem:[%s2968 + $0x3c] sm:$0xf]
        %v3001 = vunpack.c.l.b16 %v2969
        %v3002 = vunpack.c.l.b16 %v2970
        %v3003 = vunpack.c.l.b16 %v2971
        %v3004 = vunpack.c.l.b16 %v2972
        %v3005 = vunpack.c.l.b16 %v2973
        %v3006 = vunpack.c.l.b16 %v2974
        %v3007 = vunpack.c.l.b16 %v2975
        %v3008 = vunpack.c.l.b16 %v2976
        %v3009 = vunpack.c.l.b16 %v2977
        %v3010 = vunpack.c.l.b16 %v2978
        %v3011 = vunpack.c.l.b16 %v2979
        %v3012 = vunpack.c.l.b16 %v2980
        %v3013 = vunpack.c.l.b16 %v2981
        %v3014 = vunpack.c.l.b16 %v2982
        %v3015 = vunpack.c.l.b16 %v2983
        %v3016 = vunpack.c.l.b16 %v2984
        %v3017 = vpack.c.b16 %v3002, %v3001
        %v3018 = vpack.c.b16 %v3004, %v3003
        %v3019 = vpack.c.b16 %v3006, %v3005
        %v3020 = vpack.c.b16 %v3008, %v3007
        %v3021 = vpack.c.b16 %v3010, %v3009
        %v3022 = vpack.c.b16 %v3012, %v3011
        %v3023 = vpack.c.b16 %v3014, %v3013
        %v3024 = vpack.c.b16 %v3016, %v3015
        %3033 = vmatpush.bf16.msra.mxu0 %v3024
        %3034 = vmatpush.bf16.msra.mxu0 %v3023
        %3035 = vmatpush.bf16.msra.mxu0 %v3022
        %3036 = vmatpush.bf16.msra.mxu0 %v3021
        %3037 = vmatpush.bf16.msra.mxu0 %v3020
        %3038 = vmatpush.bf16.msra.mxu0 %v3019
        %3039 = vmatpush.bf16.msra.mxu0 %v3018
        %3040 = vmatpush.bf16.msra.mxu0 %v3017
        %3041 = vmatmul.bf16.gmra.mxu0 %v2960
        %v3042 = vpop.f32.mrf.mxu0
        %v3043 = vadd.f32 0.0, %v3042
        %v3044 = vpop.f32.mrf.mxu0
        %v3045 = vadd.f32 0.0, %v3044
        %3046 = vmatmul.bf16.gmra.mxu0 %v2961
        %v3047 = vpop.f32.mrf.mxu0
        %v3048 = vadd.f32 0.0, %v3047
        %v3049 = vpop.f32.mrf.mxu0
        %v3050 = vadd.f32 0.0, %v3049
        %3051 = vmatmul.bf16.gmra.mxu0 %v2962
        %v3052 = vpop.f32.mrf.mxu0
        %v3053 = vadd.f32 0.0, %v3052
        %v3054 = vpop.f32.mrf.mxu0
        %v3055 = vadd.f32 0.0, %v3054
        %3056 = vmatmul.bf16.gmra.mxu0 %v2963
        %v3057 = vpop.f32.mrf.mxu0
        %v3058 = vadd.f32 0.0, %v3057
        %v3059 = vpop.f32.mrf.mxu0
        %v3060 = vadd.f32 0.0, %v3059
        %3061 = vmatmul.bf16.gmra.mxu0 %v2964
        %v3062 = vpop.f32.mrf.mxu0
        %v3063 = vadd.f32 0.0, %v3062
        %v3064 = vpop.f32.mrf.mxu0
        %v3065 = vadd.f32 0.0, %v3064
        %3066 = vmatmul.bf16.gmra.mxu0 %v2965
        %v3067 = vpop.f32.mrf.mxu0
        %v3068 = vadd.f32 0.0, %v3067
        %v3069 = vpop.f32.mrf.mxu0
        %v3070 = vadd.f32 0.0, %v3069
        %3071 = vmatmul.bf16.gmra.mxu0 %v2966
        %v3072 = vpop.f32.mrf.mxu0
        %v3073 = vadd.f32 0.0, %v3072
        %v3074 = vpop.f32.mrf.mxu0
        %v3075 = vadd.f32 0.0, %v3074
        %3076 = vmatmul.bf16.gmra.mxu0 %v2967
        %v3077 = vpop.f32.mrf.mxu0
        %v3078 = vadd.f32 0.0, %v3077
        %v3079 = vpop.f32.mrf.mxu0
        %v3080 = vadd.f32 0.0, %v3079
        %3081 = vdwg.mxu0
        %v3082 = vadd.f32 %v2928, %v3043
        %v3083 = vadd.f32 %v2929, %v3045
        %v3084 = vadd.f32 %v2930, %v3048
        %v3085 = vadd.f32 %v2931, %v3050
        %v3086 = vadd.f32 %v2932, %v3053
        %v3087 = vadd.f32 %v2933, %v3055
        %v3088 = vadd.f32 %v2934, %v3058
        %v3089 = vadd.f32 %v2935, %v3060
        %v3090 = vadd.f32 %v2936, %v3063
        %v3091 = vadd.f32 %v2937, %v3065
        %v3092 = vadd.f32 %v2938, %v3068
        %v3093 = vadd.f32 %v2939, %v3070
        %v3094 = vadd.f32 %v2940, %v3073
        %v3095 = vadd.f32 %v2941, %v3075
        %v3096 = vadd.f32 %v2942, %v3078
        %v3097 = vadd.f32 %v2943, %v3080
        %v3098 = vld [vmem:[#allocation3 + $0x1a] sm:$0xff]
        %v3099 = vld [vmem:[#allocation3 + $0x22] sm:$0xff]
        %v3100 = vld [vmem:[#allocation3 + $0x2a] sm:$0xff]
        %v3101 = vld [vmem:[#allocation3 + $0x32] sm:$0xff]
        %v3102 = vld [vmem:[#allocation3 + $0x3a] sm:$0xff]
        %v3103 = vld [vmem:[#allocation3 + $0x42] sm:$0xff]
        %v3104 = vld [vmem:[#allocation3 + $0x4a] sm:$0xff]
        %v3105 = vld [vmem:[#allocation3 + $0x52] sm:$0xff]
        %v3106 = vld [vmem:[#allocation3 + $0x5a] sm:$0xff]
        %v3107 = vld [vmem:[#allocation3 + $0x62] sm:$0xff]
        %v3108 = vld [vmem:[#allocation3 + $0x6a] sm:$0xff]
        %v3109 = vld [vmem:[#allocation3 + $0x72] sm:$0xff]
        %v3110 = vld [vmem:[#allocation3 + $0x7a] sm:$0xff]
        %v3111 = vld [vmem:[#allocation3 + $0x82] sm:$0xff]
        %v3112 = vld [vmem:[#allocation3 + $0x8a] sm:$0xff]
        %v3113 = vld [vmem:[#allocation3 + $0x92] sm:$0xff]
        %v3114 = vpack.c.bf16 %v3099, %v3098
        %v3115 = vpack.c.bf16 %v3101, %v3100
        %v3116 = vpack.c.bf16 %v3103, %v3102
        %v3117 = vpack.c.bf16 %v3105, %v3104
        %v3118 = vpack.c.bf16 %v3107, %v3106
        %v3119 = vpack.c.bf16 %v3109, %v3108
        %v3120 = vpack.c.bf16 %v3111, %v3110
        %v3121 = vpack.c.bf16 %v3113, %v3112
        %s3122 = scalar_lea.vmem %s6, 384
        %v3123 = vld [vmem:[%s3122] sm:$0xf]
        %v3124 = vld [vmem:[%s3122 + $0x4] sm:$0xf]
        %v3125 = vld [vmem:[%s3122 + $0x8] sm:$0xf]
        %v3126 = vld [vmem:[%s3122 + $0xc] sm:$0xf]
        %v3127 = vld [vmem:[%s3122 + $0x10] sm:$0xf]
        %v3128 = vld [vmem:[%s3122 + $0x14] sm:$0xf]
        %v3129 = vld [vmem:[%s3122 + $0x18] sm:$0xf]
        %v3130 = vld [vmem:[%s3122 + $0x1c] sm:$0xf]
        %v3131 = vld [vmem:[%s3122 + $0x20] sm:$0xf]
        %v3132 = vld [vmem:[%s3122 + $0x24] sm:$0xf]
        %v3133 = vld [vmem:[%s3122 + $0x28] sm:$0xf]
        %v3134 = vld [vmem:[%s3122 + $0x2c] sm:$0xf]
        %v3135 = vld [vmem:[%s3122 + $0x30] sm:$0xf]
        %v3136 = vld [vmem:[%s3122 + $0x34] sm:$0xf]
        %v3137 = vld [vmem:[%s3122 + $0x38] sm:$0xf]
        %v3138 = vld [vmem:[%s3122 + $0x3c] sm:$0xf]
        %v3155 = vunpack.c.l.b16 %v3123
        %v3156 = vunpack.c.l.b16 %v3124
        %v3157 = vunpack.c.l.b16 %v3125
        %v3158 = vunpack.c.l.b16 %v3126
        %v3159 = vunpack.c.l.b16 %v3127
        %v3160 = vunpack.c.l.b16 %v3128
        %v3161 = vunpack.c.l.b16 %v3129
        %v3162 = vunpack.c.l.b16 %v3130
        %v3163 = vunpack.c.l.b16 %v3131
        %v3164 = vunpack.c.l.b16 %v3132
        %v3165 = vunpack.c.l.b16 %v3133
        %v3166 = vunpack.c.l.b16 %v3134
        %v3167 = vunpack.c.l.b16 %v3135
        %v3168 = vunpack.c.l.b16 %v3136
        %v3169 = vunpack.c.l.b16 %v3137
        %v3170 = vunpack.c.l.b16 %v3138
        %v3171 = vpack.c.b16 %v3156, %v3155
        %v3172 = vpack.c.b16 %v3158, %v3157
        %v3173 = vpack.c.b16 %v3160, %v3159
        %v3174 = vpack.c.b16 %v3162, %v3161
        %v3175 = vpack.c.b16 %v3164, %v3163
        %v3176 = vpack.c.b16 %v3166, %v3165
        %v3177 = vpack.c.b16 %v3168, %v3167
        %v3178 = vpack.c.b16 %v3170, %v3169
        %3187 = vmatpush.bf16.msra.mxu0 %v3178
        %3188 = vmatpush.bf16.msra.mxu0 %v3177
        %3189 = vmatpush.bf16.msra.mxu0 %v3176
        %3190 = vmatpush.bf16.msra.mxu0 %v3175
        %3191 = vmatpush.bf16.msra.mxu0 %v3174
        %3192 = vmatpush.bf16.msra.mxu0 %v3173
        %3193 = vmatpush.bf16.msra.mxu0 %v3172
        %3194 = vmatpush.bf16.msra.mxu0 %v3171
        %3195 = vmatmul.bf16.gmra.mxu0 %v3114
        %v3196 = vpop.f32.mrf.mxu0
        %v3197 = vadd.f32 0.0, %v3196
        %v3198 = vpop.f32.mrf.mxu0
        %v3199 = vadd.f32 0.0, %v3198
        %3200 = vmatmul.bf16.gmra.mxu0 %v3115
        %v3201 = vpop.f32.mrf.mxu0
        %v3202 = vadd.f32 0.0, %v3201
        %v3203 = vpop.f32.mrf.mxu0
        %v3204 = vadd.f32 0.0, %v3203
        %3205 = vmatmul.bf16.gmra.mxu0 %v3116
        %v3206 = vpop.f32.mrf.mxu0
        %v3207 = vadd.f32 0.0, %v3206
        %v3208 = vpop.f32.mrf.mxu0
        %v3209 = vadd.f32 0.0, %v3208
        %3210 = vmatmul.bf16.gmra.mxu0 %v3117
        %v3211 = vpop.f32.mrf.mxu0
        %v3212 = vadd.f32 0.0, %v3211
        %v3213 = vpop.f32.mrf.mxu0
        %v3214 = vadd.f32 0.0, %v3213
        %3215 = vmatmul.bf16.gmra.mxu0 %v3118
        %v3216 = vpop.f32.mrf.mxu0
        %v3217 = vadd.f32 0.0, %v3216
        %v3218 = vpop.f32.mrf.mxu0
        %v3219 = vadd.f32 0.0, %v3218
        %3220 = vmatmul.bf16.gmra.mxu0 %v3119
        %v3221 = vpop.f32.mrf.mxu0
        %v3222 = vadd.f32 0.0, %v3221
        %v3223 = vpop.f32.mrf.mxu0
        %v3224 = vadd.f32 0.0, %v3223
        %3225 = vmatmul.bf16.gmra.mxu0 %v3120
        %v3226 = vpop.f32.mrf.mxu0
        %v3227 = vadd.f32 0.0, %v3226
        %v3228 = vpop.f32.mrf.mxu0
        %v3229 = vadd.f32 0.0, %v3228
        %3230 = vmatmul.bf16.gmra.mxu0 %v3121
        %v3231 = vpop.f32.mrf.mxu0
        %v3232 = vadd.f32 0.0, %v3231
        %v3233 = vpop.f32.mrf.mxu0
        %v3234 = vadd.f32 0.0, %v3233
        %3235 = vdwg.mxu0
        %v3236 = vadd.f32 %v3082, %v3197
        %v3237 = vadd.f32 %v3083, %v3199
        %v3238 = vadd.f32 %v3084, %v3202
        %v3239 = vadd.f32 %v3085, %v3204
        %v3240 = vadd.f32 %v3086, %v3207
        %v3241 = vadd.f32 %v3087, %v3209
        %v3242 = vadd.f32 %v3088, %v3212
        %v3243 = vadd.f32 %v3089, %v3214
        %v3244 = vadd.f32 %v3090, %v3217
        %v3245 = vadd.f32 %v3091, %v3219
        %v3246 = vadd.f32 %v3092, %v3222
        %v3247 = vadd.f32 %v3093, %v3224
        %v3248 = vadd.f32 %v3094, %v3227
        %v3249 = vadd.f32 %v3095, %v3229
        %v3250 = vadd.f32 %v3096, %v3232
        %v3251 = vadd.f32 %v3097, %v3234
        %v3252 = vld [vmem:[#allocation3 + $0x1b] sm:$0xff]
        %v3253 = vld [vmem:[#allocation3 + $0x23] sm:$0xff]
        %v3254 = vld [vmem:[#allocation3 + $0x2b] sm:$0xff]
        %v3255 = vld [vmem:[#allocation3 + $0x33] sm:$0xff]
        %v3256 = vld [vmem:[#allocation3 + $0x3b] sm:$0xff]
        %v3257 = vld [vmem:[#allocation3 + $0x43] sm:$0xff]
        %v3258 = vld [vmem:[#allocation3 + $0x4b] sm:$0xff]
        %v3259 = vld [vmem:[#allocation3 + $0x53] sm:$0xff]
        %v3260 = vld [vmem:[#allocation3 + $0x5b] sm:$0xff]
        %v3261 = vld [vmem:[#allocation3 + $0x63] sm:$0xff]
        %v3262 = vld [vmem:[#allocation3 + $0x6b] sm:$0xff]
        %v3263 = vld [vmem:[#allocation3 + $0x73] sm:$0xff]
        %v3264 = vld [vmem:[#allocation3 + $0x7b] sm:$0xff]
        %v3265 = vld [vmem:[#allocation3 + $0x83] sm:$0xff]
        %v3266 = vld [vmem:[#allocation3 + $0x8b] sm:$0xff]
        %v3267 = vld [vmem:[#allocation3 + $0x93] sm:$0xff]
        %v3268 = vpack.c.bf16 %v3253, %v3252
        %v3269 = vpack.c.bf16 %v3255, %v3254
        %v3270 = vpack.c.bf16 %v3257, %v3256
        %v3271 = vpack.c.bf16 %v3259, %v3258
        %v3272 = vpack.c.bf16 %v3261, %v3260
        %v3273 = vpack.c.bf16 %v3263, %v3262
        %v3274 = vpack.c.bf16 %v3265, %v3264
        %v3275 = vpack.c.bf16 %v3267, %v3266
        %s3276 = scalar_lea.vmem %s6, 448
        %v3277 = vld [vmem:[%s3276] sm:$0xf]
        %v3278 = vld [vmem:[%s3276 + $0x4] sm:$0xf]
        %v3279 = vld [vmem:[%s3276 + $0x8] sm:$0xf]
        %v3280 = vld [vmem:[%s3276 + $0xc] sm:$0xf]
        %v3281 = vld [vmem:[%s3276 + $0x10] sm:$0xf]
        %v3282 = vld [vmem:[%s3276 + $0x14] sm:$0xf]
        %v3283 = vld [vmem:[%s3276 + $0x18] sm:$0xf]
        %v3284 = vld [vmem:[%s3276 + $0x1c] sm:$0xf]
        %v3285 = vld [vmem:[%s3276 + $0x20] sm:$0xf]
        %v3286 = vld [vmem:[%s3276 + $0x24] sm:$0xf]
        %v3287 = vld [vmem:[%s3276 + $0x28] sm:$0xf]
        %v3288 = vld [vmem:[%s3276 + $0x2c] sm:$0xf]
        %v3289 = vld [vmem:[%s3276 + $0x30] sm:$0xf]
        %v3290 = vld [vmem:[%s3276 + $0x34] sm:$0xf]
        %v3291 = vld [vmem:[%s3276 + $0x38] sm:$0xf]
        %v3292 = vld [vmem:[%s3276 + $0x3c] sm:$0xf]
        %v3309 = vunpack.c.l.b16 %v3277
        %v3310 = vunpack.c.l.b16 %v3278
        %v3311 = vunpack.c.l.b16 %v3279
        %v3312 = vunpack.c.l.b16 %v3280
        %v3313 = vunpack.c.l.b16 %v3281
        %v3314 = vunpack.c.l.b16 %v3282
        %v3315 = vunpack.c.l.b16 %v3283
        %v3316 = vunpack.c.l.b16 %v3284
        %v3317 = vunpack.c.l.b16 %v3285
        %v3318 = vunpack.c.l.b16 %v3286
        %v3319 = vunpack.c.l.b16 %v3287
        %v3320 = vunpack.c.l.b16 %v3288
        %v3321 = vunpack.c.l.b16 %v3289
        %v3322 = vunpack.c.l.b16 %v3290
        %v3323 = vunpack.c.l.b16 %v3291
        %v3324 = vunpack.c.l.b16 %v3292
        %v3325 = vpack.c.b16 %v3310, %v3309
        %v3326 = vpack.c.b16 %v3312, %v3311
        %v3327 = vpack.c.b16 %v3314, %v3313
        %v3328 = vpack.c.b16 %v3316, %v3315
        %v3329 = vpack.c.b16 %v3318, %v3317
        %v3330 = vpack.c.b16 %v3320, %v3319
        %v3331 = vpack.c.b16 %v3322, %v3321
        %v3332 = vpack.c.b16 %v3324, %v3323
        %3341 = vmatpush.bf16.msra.mxu0 %v3332
        %3342 = vmatpush.bf16.msra.mxu0 %v3331
        %3343 = vmatpush.bf16.msra.mxu0 %v3330
        %3344 = vmatpush.bf16.msra.mxu0 %v3329
        %3345 = vmatpush.bf16.msra.mxu0 %v3328
        %3346 = vmatpush.bf16.msra.mxu0 %v3327
        %3347 = vmatpush.bf16.msra.mxu0 %v3326
        %3348 = vmatpush.bf16.msra.mxu0 %v3325
        %3349 = vmatmul.bf16.gmra.mxu0 %v3268
        %v3350 = vpop.f32.mrf.mxu0
        %v3351 = vadd.f32 0.0, %v3350
        %v3352 = vpop.f32.mrf.mxu0
        %v3353 = vadd.f32 0.0, %v3352
        %3354 = vmatmul.bf16.gmra.mxu0 %v3269
        %v3355 = vpop.f32.mrf.mxu0
        %v3356 = vadd.f32 0.0, %v3355
        %v3357 = vpop.f32.mrf.mxu0
        %v3358 = vadd.f32 0.0, %v3357
        %3359 = vmatmul.bf16.gmra.mxu0 %v3270
        %v3360 = vpop.f32.mrf.mxu0
        %v3361 = vadd.f32 0.0, %v3360
        %v3362 = vpop.f32.mrf.mxu0
        %v3363 = vadd.f32 0.0, %v3362
        %3364 = vmatmul.bf16.gmra.mxu0 %v3271
        %v3365 = vpop.f32.mrf.mxu0
        %v3366 = vadd.f32 0.0, %v3365
        %v3367 = vpop.f32.mrf.mxu0
        %v3368 = vadd.f32 0.0, %v3367
        %3369 = vmatmul.bf16.gmra.mxu0 %v3272
        %v3370 = vpop.f32.mrf.mxu0
        %v3371 = vadd.f32 0.0, %v3370
        %v3372 = vpop.f32.mrf.mxu0
        %v3373 = vadd.f32 0.0, %v3372
        %3374 = vmatmul.bf16.gmra.mxu0 %v3273
        %v3375 = vpop.f32.mrf.mxu0
        %v3376 = vadd.f32 0.0, %v3375
        %v3377 = vpop.f32.mrf.mxu0
        %v3378 = vadd.f32 0.0, %v3377
        %3379 = vmatmul.bf16.gmra.mxu0 %v3274
        %v3380 = vpop.f32.mrf.mxu0
        %v3381 = vadd.f32 0.0, %v3380
        %v3382 = vpop.f32.mrf.mxu0
        %v3383 = vadd.f32 0.0, %v3382
        %3384 = vmatmul.bf16.gmra.mxu0 %v3275
        %v3385 = vpop.f32.mrf.mxu0
        %v3386 = vadd.f32 0.0, %v3385
        %v3387 = vpop.f32.mrf.mxu0
        %v3388 = vadd.f32 0.0, %v3387
        %3389 = vdwg.mxu0
        %v3390 = vadd.f32 %v3236, %v3351
        %v3391 = vadd.f32 %v3237, %v3353
        %v3392 = vadd.f32 %v3238, %v3356
        %v3393 = vadd.f32 %v3239, %v3358
        %v3394 = vadd.f32 %v3240, %v3361
        %v3395 = vadd.f32 %v3241, %v3363
        %v3396 = vadd.f32 %v3242, %v3366
        %v3397 = vadd.f32 %v3243, %v3368
        %v3398 = vadd.f32 %v3244, %v3371
        %v3399 = vadd.f32 %v3245, %v3373
        %v3400 = vadd.f32 %v3246, %v3376
        %v3401 = vadd.f32 %v3247, %v3378
        %v3402 = vadd.f32 %v3248, %v3381
        %v3403 = vadd.f32 %v3249, %v3383
        %v3404 = vadd.f32 %v3250, %v3386
        %v3405 = vadd.f32 %v3251, %v3388
        %v3406 = vld [vmem:[#allocation3 + $0x1c] sm:$0xff]
        %v3407 = vld [vmem:[#allocation3 + $0x24] sm:$0xff]
        %v3408 = vld [vmem:[#allocation3 + $0x2c] sm:$0xff]
        %v3409 = vld [vmem:[#allocation3 + $0x34] sm:$0xff]
        %v3410 = vld [vmem:[#allocation3 + $0x3c] sm:$0xff]
        %v3411 = vld [vmem:[#allocation3 + $0x44] sm:$0xff]
        %v3412 = vld [vmem:[#allocation3 + $0x4c] sm:$0xff]
        %v3413 = vld [vmem:[#allocation3 + $0x54] sm:$0xff]
        %v3414 = vld [vmem:[#allocation3 + $0x5c] sm:$0xff]
        %v3415 = vld [vmem:[#allocation3 + $0x64] sm:$0xff]
        %v3416 = vld [vmem:[#allocation3 + $0x6c] sm:$0xff]
        %v3417 = vld [vmem:[#allocation3 + $0x74] sm:$0xff]
        %v3418 = vld [vmem:[#allocation3 + $0x7c] sm:$0xff]
        %v3419 = vld [vmem:[#allocation3 + $0x84] sm:$0xff]
        %v3420 = vld [vmem:[#allocation3 + $0x8c] sm:$0xff]
        %v3421 = vld [vmem:[#allocation3 + $0x94] sm:$0xff]
        %v3422 = vpack.c.bf16 %v3407, %v3406
        %v3423 = vpack.c.bf16 %v3409, %v3408
        %v3424 = vpack.c.bf16 %v3411, %v3410
        %v3425 = vpack.c.bf16 %v3413, %v3412
        %v3426 = vpack.c.bf16 %v3415, %v3414
        %v3427 = vpack.c.bf16 %v3417, %v3416
        %v3428 = vpack.c.bf16 %v3419, %v3418
        %v3429 = vpack.c.bf16 %v3421, %v3420
        %s3430 = scalar_lea.vmem %s6, 512
        %v3431 = vld [vmem:[%s3430] sm:$0xf]
        %v3432 = vld [vmem:[%s3430 + $0x4] sm:$0xf]
        %v3433 = vld [vmem:[%s3430 + $0x8] sm:$0xf]
        %v3434 = vld [vmem:[%s3430 + $0xc] sm:$0xf]
        %v3435 = vld [vmem:[%s3430 + $0x10] sm:$0xf]
        %v3436 = vld [vmem:[%s3430 + $0x14] sm:$0xf]
        %v3437 = vld [vmem:[%s3430 + $0x18] sm:$0xf]
        %v3438 = vld [vmem:[%s3430 + $0x1c] sm:$0xf]
        %v3439 = vld [vmem:[%s3430 + $0x20] sm:$0xf]
        %v3440 = vld [vmem:[%s3430 + $0x24] sm:$0xf]
        %v3441 = vld [vmem:[%s3430 + $0x28] sm:$0xf]
        %v3442 = vld [vmem:[%s3430 + $0x2c] sm:$0xf]
        %v3443 = vld [vmem:[%s3430 + $0x30] sm:$0xf]
        %v3444 = vld [vmem:[%s3430 + $0x34] sm:$0xf]
        %v3445 = vld [vmem:[%s3430 + $0x38] sm:$0xf]
        %v3446 = vld [vmem:[%s3430 + $0x3c] sm:$0xf]
        %v3463 = vunpack.c.l.b16 %v3431
        %v3464 = vunpack.c.l.b16 %v3432
        %v3465 = vunpack.c.l.b16 %v3433
        %v3466 = vunpack.c.l.b16 %v3434
        %v3467 = vunpack.c.l.b16 %v3435
        %v3468 = vunpack.c.l.b16 %v3436
        %v3469 = vunpack.c.l.b16 %v3437
        %v3470 = vunpack.c.l.b16 %v3438
        %v3471 = vunpack.c.l.b16 %v3439
        %v3472 = vunpack.c.l.b16 %v3440
        %v3473 = vunpack.c.l.b16 %v3441
        %v3474 = vunpack.c.l.b16 %v3442
        %v3475 = vunpack.c.l.b16 %v3443
        %v3476 = vunpack.c.l.b16 %v3444
        %v3477 = vunpack.c.l.b16 %v3445
        %v3478 = vunpack.c.l.b16 %v3446
        %v3479 = vpack.c.b16 %v3464, %v3463
        %v3480 = vpack.c.b16 %v3466, %v3465
        %v3481 = vpack.c.b16 %v3468, %v3467
        %v3482 = vpack.c.b16 %v3470, %v3469
        %v3483 = vpack.c.b16 %v3472, %v3471
        %v3484 = vpack.c.b16 %v3474, %v3473
        %v3485 = vpack.c.b16 %v3476, %v3475
        %v3486 = vpack.c.b16 %v3478, %v3477
        %3495 = vmatpush.bf16.msra.mxu0 %v3486
        %3496 = vmatpush.bf16.msra.mxu0 %v3485
        %3497 = vmatpush.bf16.msra.mxu0 %v3484
        %3498 = vmatpush.bf16.msra.mxu0 %v3483
        %3499 = vmatpush.bf16.msra.mxu0 %v3482
        %3500 = vmatpush.bf16.msra.mxu0 %v3481
        %3501 = vmatpush.bf16.msra.mxu0 %v3480
        %3502 = vmatpush.bf16.msra.mxu0 %v3479
        %3503 = vmatmul.bf16.gmra.mxu0 %v3422
        %v3504 = vpop.f32.mrf.mxu0
        %v3505 = vadd.f32 0.0, %v3504
        %v3506 = vpop.f32.mrf.mxu0
        %v3507 = vadd.f32 0.0, %v3506
        %3508 = vmatmul.bf16.gmra.mxu0 %v3423
        %v3509 = vpop.f32.mrf.mxu0
        %v3510 = vadd.f32 0.0, %v3509
        %v3511 = vpop.f32.mrf.mxu0
        %v3512 = vadd.f32 0.0, %v3511
        %3513 = vmatmul.bf16.gmra.mxu0 %v3424
        %v3514 = vpop.f32.mrf.mxu0
        %v3515 = vadd.f32 0.0, %v3514
        %v3516 = vpop.f32.mrf.mxu0
        %v3517 = vadd.f32 0.0, %v3516
        %3518 = vmatmul.bf16.gmra.mxu0 %v3425
        %v3519 = vpop.f32.mrf.mxu0
        %v3520 = vadd.f32 0.0, %v3519
        %v3521 = vpop.f32.mrf.mxu0
        %v3522 = vadd.f32 0.0, %v3521
        %3523 = vmatmul.bf16.gmra.mxu0 %v3426
        %v3524 = vpop.f32.mrf.mxu0
        %v3525 = vadd.f32 0.0, %v3524
        %v3526 = vpop.f32.mrf.mxu0
        %v3527 = vadd.f32 0.0, %v3526
        %3528 = vmatmul.bf16.gmra.mxu0 %v3427
        %v3529 = vpop.f32.mrf.mxu0
        %v3530 = vadd.f32 0.0, %v3529
        %v3531 = vpop.f32.mrf.mxu0
        %v3532 = vadd.f32 0.0, %v3531
        %3533 = vmatmul.bf16.gmra.mxu0 %v3428
        %v3534 = vpop.f32.mrf.mxu0
        %v3535 = vadd.f32 0.0, %v3534
        %v3536 = vpop.f32.mrf.mxu0
        %v3537 = vadd.f32 0.0, %v3536
        %3538 = vmatmul.bf16.gmra.mxu0 %v3429
        %v3539 = vpop.f32.mrf.mxu0
        %v3540 = vadd.f32 0.0, %v3539
        %v3541 = vpop.f32.mrf.mxu0
        %v3542 = vadd.f32 0.0, %v3541
        %3543 = vdwg.mxu0
        %v3544 = vadd.f32 %v3390, %v3505
        %v3545 = vadd.f32 %v3391, %v3507
        %v3546 = vadd.f32 %v3392, %v3510
        %v3547 = vadd.f32 %v3393, %v3512
        %v3548 = vadd.f32 %v3394, %v3515
        %v3549 = vadd.f32 %v3395, %v3517
        %v3550 = vadd.f32 %v3396, %v3520
        %v3551 = vadd.f32 %v3397, %v3522
        %v3552 = vadd.f32 %v3398, %v3525
        %v3553 = vadd.f32 %v3399, %v3527
        %v3554 = vadd.f32 %v3400, %v3530
        %v3555 = vadd.f32 %v3401, %v3532
        %v3556 = vadd.f32 %v3402, %v3535
        %v3557 = vadd.f32 %v3403, %v3537
        %v3558 = vadd.f32 %v3404, %v3540
        %v3559 = vadd.f32 %v3405, %v3542
        %v3560 = vld [vmem:[%s7] sm:$0x1]
        %v3562 = vperm.slane %v3560, 0
        %v3564 = vadd.f32 %v3544, %v3562
        %v3565 = vadd.f32 %v3545, %v3562
        %v3566 = vadd.f32 %v3546, %v3562
        %v3567 = vadd.f32 %v3547, %v3562
        %v3568 = vadd.f32 %v3548, %v3562
        %v3569 = vadd.f32 %v3549, %v3562
        %v3570 = vadd.f32 %v3550, %v3562
        %v3571 = vadd.f32 %v3551, %v3562
        %v3572 = vadd.f32 %v3552, %v3562
        %v3573 = vadd.f32 %v3553, %v3562
        %v3574 = vadd.f32 %v3554, %v3562
        %v3575 = vadd.f32 %v3555, %v3562
        %v3576 = vadd.f32 %v3556, %v3562
        %v3577 = vadd.f32 %v3557, %v3562
        %v3578 = vadd.f32 %v3558, %v3562
        %v3579 = vadd.f32 %v3559, %v3562
        %vm3580 = vcmp.ge.f32.partialorder %v3564, 0.0
        %vm3581 = vcmp.ge.f32.partialorder %v3565, 0.0
        %vm3582 = vcmp.ge.f32.partialorder %v3566, 0.0
        %vm3583 = vcmp.ge.f32.partialorder %v3567, 0.0
        %vm3584 = vcmp.ge.f32.partialorder %v3568, 0.0
        %vm3585 = vcmp.ge.f32.partialorder %v3569, 0.0
        %vm3586 = vcmp.ge.f32.partialorder %v3570, 0.0
        %vm3587 = vcmp.ge.f32.partialorder %v3571, 0.0
        %vm3588 = vcmp.ge.f32.partialorder %v3572, 0.0
        %vm3589 = vcmp.ge.f32.partialorder %v3573, 0.0
        %vm3590 = vcmp.ge.f32.partialorder %v3574, 0.0
        %vm3591 = vcmp.ge.f32.partialorder %v3575, 0.0
        %vm3592 = vcmp.ge.f32.partialorder %v3576, 0.0
        %vm3593 = vcmp.ge.f32.partialorder %v3577, 0.0
        %vm3594 = vcmp.ge.f32.partialorder %v3578, 0.0
        %vm3595 = vcmp.ge.f32.partialorder %v3579, 0.0
        %v3596 = vmul.f32 %v3564, 0.01
        %v3597 = vmul.f32 %v3565, 0.01
        %v3598 = vmul.f32 %v3566, 0.01
        %v3599 = vmul.f32 %v3567, 0.01
        %v3600 = vmul.f32 %v3568, 0.01
        %v3601 = vmul.f32 %v3569, 0.01
        %v3602 = vmul.f32 %v3570, 0.01
        %v3603 = vmul.f32 %v3571, 0.01
        %v3604 = vmul.f32 %v3572, 0.01
        %v3605 = vmul.f32 %v3573, 0.01
        %v3606 = vmul.f32 %v3574, 0.01
        %v3607 = vmul.f32 %v3575, 0.01
        %v3608 = vmul.f32 %v3576, 0.01
        %v3609 = vmul.f32 %v3577, 0.01
        %v3610 = vmul.f32 %v3578, 0.01
        %v3611 = vmul.f32 %v3579, 0.01
        %v3612 = vsel %vm3580, %v3564, %v3596
        %v3613 = vsel %vm3581, %v3565, %v3597
        %v3614 = vsel %vm3582, %v3566, %v3598
        %v3615 = vsel %vm3583, %v3567, %v3599
        %v3616 = vsel %vm3584, %v3568, %v3600
        %v3617 = vsel %vm3585, %v3569, %v3601
        %v3618 = vsel %vm3586, %v3570, %v3602
        %v3619 = vsel %vm3587, %v3571, %v3603
        %v3620 = vsel %vm3588, %v3572, %v3604
        %v3621 = vsel %vm3589, %v3573, %v3605
        %v3622 = vsel %vm3590, %v3574, %v3606
        %v3623 = vsel %vm3591, %v3575, %v3607
        %v3624 = vsel %vm3592, %v3576, %v3608
        %v3625 = vsel %vm3593, %v3577, %v3609
        %v3626 = vsel %vm3594, %v3578, %v3610
        %v3627 = vsel %vm3595, %v3579, %v3611
        %v3628 = vmul.f32 %v3612, %v605
        %v3629 = vmul.f32 %v3613, %v610
        %v3630 = vmul.f32 %v3614, %v615
        %v3631 = vmul.f32 %v3615, %v620
        %v3632 = vmul.f32 %v3616, %v625
        %v3633 = vmul.f32 %v3617, %v630
        %v3634 = vmul.f32 %v3618, %v635
        %v3635 = vmul.f32 %v3619, %v640
        %v3636 = vmul.f32 %v3620, %v645
        %v3637 = vmul.f32 %v3621, %v650
        %v3638 = vmul.f32 %v3622, %v655
        %v3639 = vmul.f32 %v3623, %v660
        %v3640 = vmul.f32 %v3624, %v665
        %v3641 = vmul.f32 %v3625, %v670
        %v3642 = vmul.f32 %v3626, %v675
        %v3643 = vmul.f32 %v3627, %v680
        %v3644 = vadd.f32 %v3628, %v3629
        %v3645 = vadd.f32 %v3644, %v3630
        %v3646 = vadd.f32 %v3645, %v3631
        %v3647 = vadd.f32 %v3646, %v3632
        %v3648 = vadd.f32 %v3647, %v3633
        %v3649 = vadd.f32 %v3648, %v3634
        %v3650 = vadd.f32 %v3649, %v3635
        %v3651 = vadd.f32 %v3650, %v3636
        %v3652 = vadd.f32 %v3651, %v3637
        %v3653 = vadd.f32 %v3652, %v3638
        %v3654 = vadd.f32 %v3653, %v3639
        %v3655 = vadd.f32 %v3654, %v3640
        %v3656 = vadd.f32 %v3655, %v3641
        %v3657 = vadd.f32 %v3656, %v3642
        %v3658 = vadd.f32 %v3657, %v3643
        %v3659 = vrot.slane %v3658, 4
        %v3660 = vadd.f32 %v3658, %v3659
        %v3661 = vrot.slane %v3660, 2
        %v3662 = vadd.f32 %v3660, %v3661
        %v3663 = vrot.slane %v3662, 1
        %v3664 = vadd.f32 %v3662, %v3663
        %v3665 = vmul.f32 %v3664, 0.012345679
        %v3666 = vld [vmem:[%s8] sm:$0xff]
        %v3667 = vld [vmem:[%s8 + $0x8] sm:$0xff]
        %v3668 = vld [vmem:[%s8 + $0x10] sm:$0xff]
        %v3669 = vld [vmem:[%s8 + $0x18] sm:$0xff]
        %v3670 = vld [vmem:[%s8 + $0x20] sm:$0xff]
        %v3671 = vld [vmem:[%s8 + $0x28] sm:$0xff]
        %v3672 = vld [vmem:[%s8 + $0x30] sm:$0xff]
        %v3673 = vld [vmem:[%s8 + $0x38] sm:$0xff]
        %v3674 = vld [vmem:[%s8 + $0x40] sm:$0xff]
        %v3675 = vld [vmem:[%s8 + $0x48] sm:$0xff]
        %v3676 = vld [vmem:[%s8 + $0x50] sm:$0xff]
        %v3677 = vld [vmem:[%s8 + $0x58] sm:$0xff]
        %v3678 = vld [vmem:[%s8 + $0x60] sm:$0xff]
        %v3679 = vld [vmem:[%s8 + $0x68] sm:$0xff]
        %v3680 = vld [vmem:[%s8 + $0x70] sm:$0xff]
        %v3681 = vld [vmem:[%s8 + $0x78] sm:$0xff]
        %v3682 = vld [vmem:[%s9] sm:$0x1]
        %3683 = vmatpush.msra.mxu0 %v3681
        %3684 = vmatpush.msra.mxu0 %v3680
        %3685 = vmatpush.msra.mxu0 %v3679
        %3686 = vmatpush.msra.mxu0 %v3678
        %3687 = vmatpush.msra.mxu0 %v3677
        %3688 = vmatpush.msra.mxu0 %v3676
        %3689 = vmatpush.msra.mxu0 %v3675
        %3690 = vmatpush.msra.mxu0 %v3674
        %3691 = vmatpush.msra.mxu0 %v3673
        %3692 = vmatpush.msra.mxu0 %v3672
        %3693 = vmatpush.msra.mxu0 %v3671
        %3694 = vmatpush.msra.mxu0 %v3670
        %3695 = vmatpush.msra.mxu0 %v3669
        %3696 = vmatpush.msra.mxu0 %v3668
        %3697 = vmatpush.msra.mxu0 %v3667
        %3698 = vmatpush.msra.mxu0 %v3666
        %3699 = vmatmul.f32.gmra.mxu0 %v3665
        %v3700 = vpop.f32.mrf.mxu0
        %v3701 = vadd.f32 %v3682, %v3700
        %3702 = vdwg.mxu0
        %vm3703 = vcmask 1040384
        %v3704 = vsel %vm3703, %v3701, -inf
        %3705 = vmax.xlane.f32.xlu0 %v3704
        %v3706 = vpop.xlane.xlu0 %3705
        %v3707 = vsub.f32 %v3701, %v3706
        %v3708 = vmul.f32 %v3707, 1.442695
        %v3709 = vpow.pop %v3708
        %v3710 = vsel %vm3703, %v3709, 0.0
        %3711 = vadd.xlane.f32.xlu0 %v3710
        %v3712 = vpop.xlane.xlu0 %3711
        %v3713 = vrcp.pop %v3712
        %v3714 = vmul.f32 %v3712, %v3713
        %v3715 = vsub.f32 1.0, %v3714
        %v3716 = vmul.f32 %v3713, %v3715
        %v3717 = vadd.f32 %v3713, %v3716
        %vm3718 = vweird.f32 %v3712
        %vm3719 = vweird.f32 %v3713
        %vm3720 = vmor %vm3718, %vm3719
        %v3721 = vsel %vm3720, %v3713, %v3717
        %v3722 = vand.u32 2147483647, %v3712
        %vm3723 = vcmp.eq.f32.partialorder %v3722, 8.507059e+37
        %v3724 = vand.u32 %v3712, 2147483648
        %v3725 = vor.u32 1.1754944e-38, %v3724
        %v3726 = vsel %vm3723, %v3725, %v3721
        %v3727 = vmul.f32 %v3709, %v3726
        %3728 = vst [vmem:[%s351] sm:$0x1] %v3727
        %s3729 = sand.u32 %s247, 1
        %s3730 = scalar_lea.sflag [#allocation5], %s3729
        %s3731 = sand.u32 %s247, 1
        %s3732 = scalar_lea.vmem [#allocation4], %s3731
        // Predicated region
        $region61: #{forward.1} parent=59 // pred_check
          %p3733 = pneg %p257
        $region62: #{forward.1} parent=59 // pred_check_branch
          %3735 = sbr.rel (%p3733) target = $region64
        $region63: #{forward.1} parent=59 // pred_region
          %3737 = vsyncadd %s3730, 0
          %s3738 = scalar_lea.hbm %s10, %s24
          %s3740 = sshll.u32 %s3732, 4
          %s3741 = int_to_ptr.vmem [resolvable:$true] %s3740
          %s3742 = sshll.u32 %s3738, 4
          %s3743 = int_to_ptr.hbm [resolvable:$true] %s3742
          %3745 = dma.vmem_to_hbm [thread:$0]  %s3741, 16, %s3743, %s3730
        $region64: #{forward.1} parent=59 // pred_fallthru
          _
      $region60: #{forward.1} parent=5 // pred_fallthru
        _
      %p3746 = scmp.le.s32.totalorder 2, %s19
      // Predicated region
      $region65: #{forward.1} parent=5 // pred_check
        %p3747 = pneg %p3746
      $region66: #{forward.1} parent=5 // pred_check_branch
        %3749 = sbr.rel (%p3747) target = $region68
      $region67: #{forward.1} parent=5 // pred_region
        %s3750 = ssub.s32 %s19, 2
        // Predicated region
        $region69: #{forward.1} parent=67 // pred_check
          %p3751 = pneg %p263
        $region70: #{forward.1} parent=67 // pred_check_branch
          %3753 = sbr.rel (%p3751) target = $region72
        $region71: #{forward.1} parent=67 // pred_region
          %s3754 = sand.u32 %s248, 1
          %s3755 = scalar_lea.sflag [#allocation5], %s3754
          %s3756 = sand.u32 %s248, 1
          %s3757 = scalar_lea.vmem [#allocation4], %s3756
          %3759 = dma.done %s3755, 16
        $region72: #{forward.1} parent=67 // pred_fallthru
          _
      $region68: #{forward.1} parent=5 // pred_fallthru
        _
    $region6: #{forward.1} parent=1 // loop_footer
      %s23 = sadd.s32 1, %s19
    $region7: #{forward.1} parent=1 // loop_footer_branch
      %18 = sbr.rel target = $region3
    $region8: #{forward.1} parent=1 // loop_exit
      _
    %3760 = vsyncpa [#allocation5], 1
    %s3761 = scalar_lea.sflag [#allocation5], 1
    %3762 = vsyncpa %s3761, 1

</llo_original>
